<compile_context>
chip_gen: v6e
topology: v6e:2x2x1
jax: 0.10.0
libtpu: 0.0.40
codegen_flags: <defaults>
</compile_context>

<pallas_src>
import jax
import jax.numpy as jnp
from jax.experimental import pallas as pl
from jax.experimental.pallas import tpu as pltpu


def _conv3x3_from_padded(src_ref, w_ref, b_ref, c_in, c_out, H, W):
    """3x3 'valid' conv over a zero-padded (c_in, H+2, W+2) VMEM ref.

    Weights (c_out*c_in*9,) and biases (c_out,) are SMEM scalars.
    Returns a list of c_out pre-activation (H, W) float32 arrays.
    """
    # Hoist the 9*c_in shifted input windows out of the output-channel loop.
    taps = [
        src_ref[ic, pl.ds(kh, H), pl.ds(kw, W)]
        for ic in range(c_in)
        for kh in range(3)
        for kw in range(3)
    ]
    outs = []
    for oc in range(c_out):
        acc = jnp.zeros((H, W), dtype=jnp.float32)
        for ic in range(c_in):
            for kh in range(3):
                for kw in range(3):
                    w_idx = ((oc * c_in + ic) * 3 + kh) * 3 + kw
                    acc = acc + w_ref[w_idx] * taps[(ic * 3 + kh) * 3 + kw]
        outs.append(acc + b_ref[oc])
    return outs


def _double_conv_kernel(x_ref, w1_ref, b1_ref, w2_ref, b2_ref, o_ref,
                        xp_ref, s1_ref):
    # x_ref : (1, Cin, H, W)       VMEM input block (one image)
    # w1_ref: (Cout*Cin*9,)  SMEM  b1_ref: (Cout,) SMEM
    # w2_ref: (Cout*Cout*9,) SMEM  b2_ref: (Cout,) SMEM
    # o_ref : (1, Cout, H, W)      VMEM output block
    # xp_ref: (Cin,  H+2, W+2)     VMEM scratch: zero-padded relu(x)
    # s1_ref: (Cout, H+2, W+2)     VMEM scratch: zero-padded relu(conv1(...))
    c_in = x_ref.shape[1]
    c_out = o_ref.shape[1]
    H, W = x_ref.shape[2], x_ref.shape[3]

    # relu(x), zero-padded into scratch.  Unconditional zeroing keeps this
    # correct even when the "parallel" batch axis is split across TensorCores
    # (each core has its own scratch and may never see grid step 0).
    xp_ref[...] = jnp.zeros_like(xp_ref)
    xp_ref[:, pl.ds(1, H), pl.ds(1, W)] = jnp.maximum(x_ref[0], 0.0)

    # conv1 + relu -> zero-padded scratch (never leaves VMEM).
    s1_ref[...] = jnp.zeros_like(s1_ref)
    y1 = _conv3x3_from_padded(xp_ref, w1_ref, b1_ref, c_in, c_out, H, W)
    for oc in range(c_out):
        s1_ref[oc, pl.ds(1, H), pl.ds(1, W)] = jnp.maximum(y1[oc], 0.0)

    # conv2 -> output (no trailing ReLU in the reference module).
    y2 = _conv3x3_from_padded(s1_ref, w2_ref, b2_ref, c_out, c_out, H, W)
    for oc in range(c_out):
        o_ref[0, oc] = y2[oc].astype(o_ref.dtype)


def double_conv_forward(x, w1, b1, w2, b2):
    """double_conv forward: conv2(relu(conv1(relu(x)))).

    x  : [N, Cin, H, W] float32
    w1 : [Cout, Cin, 3, 3]   (PyTorch Conv2d OIHW layout)
    b1 : [Cout]
    w2 : [Cout, Cout, 3, 3]
    b2 : [Cout]
    returns [N, Cout, H, W]
    """
    N, c_in, H, W = x.shape
    c_out = w1.shape[0]
    assert w1.shape == (c_out, c_in, 3, 3)
    assert w2.shape == (c_out, c_out, 3, 3)

    smem = pl.BlockSpec(memory_space=pltpu.MemorySpace.SMEM)

    return pl.pallas_call(
        _double_conv_kernel,
        out_shape=jax.ShapeDtypeStruct((N, c_out, H, W), x.dtype),
        grid_spec=pltpu.PrefetchScalarGridSpec(
            num_scalar_prefetch=0,
            grid=(N,),
            in_specs=[
                pl.BlockSpec((1, c_in, H, W), lambda n: (n, 0, 0, 0)),
                smem,   # w1 (flattened, (oc, ic, kh, kw) order)
                smem,   # b1
                smem,   # w2 (flattened)
                smem,   # b2
            ],
            out_specs=pl.BlockSpec((1, c_out, H, W), lambda n: (n, 0, 0, 0)),
            scratch_shapes=[
                pltpu.VMEM((c_in, H + 2, W + 2), jnp.float32),
                pltpu.VMEM((c_out, H + 2, W + 2), jnp.float32),
            ],
        ),
        compiler_params=pltpu.CompilerParams(
            dimension_semantics=("parallel",),
        ),
    )(x, w1.reshape(-1), b1, w2.reshape(-1), b2)


def _reference(x, w1, b1, w2, b2):
    """Pure-JAX reference of the PyTorch double_conv forward pass."""
    dn = ("NCHW", "OIHW", "NCHW")
    prec = jax.lax.Precision.HIGHEST
    h = jnp.maximum(x, 0.0)
    y1 = jax.lax.conv_general_dilated(h, w1, (1, 1), "SAME",
                                      dimension_numbers=dn, precision=prec)
    y1 = y1 + b1[None, :, None, None]
    h2 = jnp.maximum(y1, 0.0)
    y2 = jax.lax.conv_general_dilated(h2, w2, (1, 1), "SAME",
                                      dimension_numbers=dn, precision=prec)
    return y2 + b2[None, :, None, None]


if __name__ == "__main__":
    key = jax.random.PRNGKey(0)
    k_x, k_w1, k_b1, k_w2, k_b2 = jax.random.split(key, 5)

    N, Cin, Cout, H, W = 2, 4, 4, 16, 16

    x = jax.random.normal(k_x, (N, Cin, H, W), dtype=jnp.float32)

    # Deterministic init matching nn.Conv2d fan-in bounds.
    bound1 = 1.0 / float(Cin * 3 * 3) ** 0.5
    w1 = jax.random.uniform(k_w1, (Cout, Cin, 3, 3), dtype=jnp.float32,
                            minval=-bound1, maxval=bound1)
    b1 = jax.random.uniform(k_b1, (Cout,), dtype=jnp.float32,
                            minval=-bound1, maxval=bound1)
    bound2 = 1.0 / float(Cout * 3 * 3) ** 0.5
    w2 = jax.random.uniform(k_w2, (Cout, Cout, 3, 3), dtype=jnp.float32,
                            minval=-bound2, maxval=bound2)
    b2 = jax.random.uniform(k_b2, (Cout,), dtype=jnp.float32,
                            minval=-bound2, maxval=bound2)

    out = double_conv_forward(x, w1, b1, w2, b2)
    out = jax.block_until_ready(out)

    ref = _reference(x, w1, b1, w2, b2)
    assert out.shape == (N, Cout, H, W)
    assert jnp.allclose(out, ref, atol=1e-5, rtol=1e-5), (
        float(jnp.max(jnp.abs(out - ref))))

    print("KERNEL_OK")
</pallas_src>

<mosaic_0001>
module attributes {stable_mosaic.version = 11 : i64} {
  func.func @_double_conv_kernel(%arg0: i32, %arg1: memref<1x4x16x16xf32, #tpu.memory_space<vmem>>, %arg2: memref<144xf32, #tpu.memory_space<smem>>, %arg3: memref<4xf32, #tpu.memory_space<smem>>, %arg4: memref<144xf32, #tpu.memory_space<smem>>, %arg5: memref<4xf32, #tpu.memory_space<smem>>, %arg6: memref<1x4x16x16xf32, #tpu.memory_space<vmem>>, %arg7: memref<4x18x18xf32, #tpu.memory_space<vmem>>, %arg8: memref<4x18x18xf32, #tpu.memory_space<vmem>>) attributes {dimension_semantics = [#tpu.dimension_semantics<parallel>], iteration_bounds = array<i64: 2>, scalar_prefetch = 0 : i64, scratch_operands = 2 : i64, tpu.core_type = #tpu.core_type<tc>, window_params = [{transform_indices = @transform_0, window_bounds = array<i64: 1, 4, 16, 16>}, {transform_indices = @transform_1, window_bounds = array<i64: 144>}, {transform_indices = @transform_2, window_bounds = array<i64: 4>}, {transform_indices = @transform_3, window_bounds = array<i64: 144>}, {transform_indices = @transform_4, window_bounds = array<i64: 4>}, {transform_indices = @transform_5, window_bounds = array<i64: 1, 4, 16, 16>}]} {
    %cst = arith.constant 0.000000e+00 : f32
    %0 = vector.broadcast %cst : f32 to vector<4x18x18xf32>
    %c0 = arith.constant 0 : index
    %c0_0 = arith.constant 0 : index
    %c0_1 = arith.constant 0 : index
    %1 = vector.load %arg7[%c0, %c0_0, %c0_1] : memref<4x18x18xf32, #tpu.memory_space<vmem>>, vector<4x18x18xf32>
    tpu.vector_store %arg7[%c0, %c0_0, %c0_1], %0 {strides = array<i32>} : memref<4x18x18xf32, #tpu.memory_space<vmem>>, vector<4x18x18xf32>,
    %c0_2 = arith.constant 0 : index
    %c0_3 = arith.constant 0 : index
    %c0_4 = arith.constant 0 : index
    %c0_5 = arith.constant 0 : index
    %2 = vector.load %arg1[%c0_2, %c0_3, %c0_4, %c0_5] : memref<1x4x16x16xf32, #tpu.memory_space<vmem>>, vector<1x4x16x16xf32>
    %3 = vector.shape_cast %2 : vector<1x4x16x16xf32> to vector<4x16x16xf32>
    %cst_6 = arith.constant 0.000000e+00 : f32
    %4 = vector.broadcast %cst_6 : f32 to vector<4x16x16xf32>
    %5 = arith.maximumf %3, %4 : vector<4x16x16xf32>
    %c0_7 = arith.constant 0 : index
    %c1 = arith.constant 1 : index
    %c1_8 = arith.constant 1 : index
    %6 = vector.load %arg7[%c0_7, %c1, %c1_8] : memref<4x18x18xf32, #tpu.memory_space<vmem>>, vector<4x16x16xf32>
    tpu.vector_store %arg7[%c0_7, %c1, %c1_8], %5 {strides = array<i32>} : memref<4x18x18xf32, #tpu.memory_space<vmem>>, vector<4x16x16xf32>,
    %cst_9 = arith.constant 0.000000e+00 : f32
    %7 = vector.broadcast %cst_9 : f32 to vector<4x18x18xf32>
    %c0_10 = arith.constant 0 : index
    %c0_11 = arith.constant 0 : index
    %c0_12 = arith.constant 0 : index
    %8 = vector.load %arg8[%c0_10, %c0_11, %c0_12] : memref<4x18x18xf32, #tpu.memory_space<vmem>>, vector<4x18x18xf32>
    tpu.vector_store %arg8[%c0_10, %c0_11, %c0_12], %7 {strides = array<i32>} : memref<4x18x18xf32, #tpu.memory_space<vmem>>, vector<4x18x18xf32>,
    %c0_13 = arith.constant 0 : index
    %c0_14 = arith.constant 0 : index
    %c0_15 = arith.constant 0 : index
    %9 = vector.load %arg7[%c0_13, %c0_14, %c0_15] : memref<4x18x18xf32, #tpu.memory_space<vmem>>, vector<1x16x16xf32>
    %10 = vector.shape_cast %9 : vector<1x16x16xf32> to vector<16x16xf32>
    %c0_16 = arith.constant 0 : index
    %c0_17 = arith.constant 0 : index
    %c1_18 = arith.constant 1 : index
    %11 = vector.load %arg7[%c0_16, %c0_17, %c1_18] : memref<4x18x18xf32, #tpu.memory_space<vmem>>, vector<1x16x16xf32>
    %12 = vector.shape_cast %11 : vector<1x16x16xf32> to vector<16x16xf32>
    %c0_19 = arith.constant 0 : index
    %c0_20 = arith.constant 0 : index
    %c2 = arith.constant 2 : index
    %13 = vector.load %arg7[%c0_19, %c0_20, %c2] : memref<4x18x18xf32, #tpu.memory_space<vmem>>, vector<1x16x16xf32>
    %14 = vector.shape_cast %13 : vector<1x16x16xf32> to vector<16x16xf32>
    %c0_21 = arith.constant 0 : index
    %c1_22 = arith.constant 1 : index
    %c0_23 = arith.constant 0 : index
    %15 = vector.load %arg7[%c0_21, %c1_22, %c0_23] : memref<4x18x18xf32, #tpu.memory_space<vmem>>, vector<1x16x16xf32>
    %16 = vector.shape_cast %15 : vector<1x16x16xf32> to vector<16x16xf32>
    %c0_24 = arith.constant 0 : index
    %c1_25 = arith.constant 1 : index
    %c1_26 = arith.constant 1 : index
    %17 = vector.load %arg7[%c0_24, %c1_25, %c1_26] : memref<4x18x18xf32, #tpu.memory_space<vmem>>, vector<1x16x16xf32>
    %18 = vector.shape_cast %17 : vector<1x16x16xf32> to vector<16x16xf32>
    %c0_27 = arith.constant 0 : index
    %c1_28 = arith.constant 1 : index
    %c2_29 = arith.constant 2 : index
    %19 = vector.load %arg7[%c0_27, %c1_28, %c2_29] : memref<4x18x18xf32, #tpu.memory_space<vmem>>, vector<1x16x16xf32>
    %20 = vector.shape_cast %19 : vector<1x16x16xf32> to vector<16x16xf32>
    %c0_30 = arith.constant 0 : index
    %c2_31 = arith.constant 2 : index
    %c0_32 = arith.constant 0 : index
    %21 = vector.load %arg7[%c0_30, %c2_31, %c0_32] : memref<4x18x18xf32, #tpu.memory_space<vmem>>, vector<1x16x16xf32>
    %22 = vector.shape_cast %21 : vector<1x16x16xf32> to vector<16x16xf32>
    %c0_33 = arith.constant 0 : index
    %c2_34 = arith.constant 2 : index
    %c1_35 = arith.constant 1 : index
    %23 = vector.load %arg7[%c0_33, %c2_34, %c1_35] : memref<4x18x18xf32, #tpu.memory_space<vmem>>, vector<1x16x16xf32>
    %24 = vector.shape_cast %23 : vector<1x16x16xf32> to vector<16x16xf32>
    %c0_36 = arith.constant 0 : index
    %c2_37 = arith.constant 2 : index
    %c2_38 = arith.constant 2 : index
    %25 = vector.load %arg7[%c0_36, %c2_37, %c2_38] : memref<4x18x18xf32, #tpu.memory_space<vmem>>, vector<1x16x16xf32>
    %26 = vector.shape_cast %25 : vector<1x16x16xf32> to vector<16x16xf32>
    %c1_39 = arith.constant 1 : index
    %c0_40 = arith.constant 0 : index
    %c0_41 = arith.constant 0 : index
    %27 = vector.load %arg7[%c1_39, %c0_40, %c0_41] : memref<4x18x18xf32, #tpu.memory_space<vmem>>, vector<1x16x16xf32>
    %28 = vector.shape_cast %27 : vector<1x16x16xf32> to vector<16x16xf32>
    %c1_42 = arith.constant 1 : index
    %c0_43 = arith.constant 0 : index
    %c1_44 = arith.constant 1 : index
    %29 = vector.load %arg7[%c1_42, %c0_43, %c1_44] : memref<4x18x18xf32, #tpu.memory_space<vmem>>, vector<1x16x16xf32>
    %30 = vector.shape_cast %29 : vector<1x16x16xf32> to vector<16x16xf32>
    %c1_45 = arith.constant 1 : index
    %c0_46 = arith.constant 0 : index
    %c2_47 = arith.constant 2 : index
    %31 = vector.load %arg7[%c1_45, %c0_46, %c2_47] : memref<4x18x18xf32, #tpu.memory_space<vmem>>, vector<1x16x16xf32>
    %32 = vector.shape_cast %31 : vector<1x16x16xf32> to vector<16x16xf32>
    %c1_48 = arith.constant 1 : index
    %c1_49 = arith.constant 1 : index
    %c0_50 = arith.constant 0 : index
    %33 = vector.load %arg7[%c1_48, %c1_49, %c0_50] : memref<4x18x18xf32, #tpu.memory_space<vmem>>, vector<1x16x16xf32>
    %34 = vector.shape_cast %33 : vector<1x16x16xf32> to vector<16x16xf32>
    %c1_51 = arith.constant 1 : index
    %c1_52 = arith.constant 1 : index
    %c1_53 = arith.constant 1 : index
    %35 = vector.load %arg7[%c1_51, %c1_52, %c1_53] : memref<4x18x18xf32, #tpu.memory_space<vmem>>, vector<1x16x16xf32>
    %36 = vector.shape_cast %35 : vector<1x16x16xf32> to vector<16x16xf32>
    %c1_54 = arith.constant 1 : index
    %c1_55 = arith.constant 1 : index
    %c2_56 = arith.constant 2 : index
    %37 = vector.load %arg7[%c1_54, %c1_55, %c2_56] : memref<4x18x18xf32, #tpu.memory_space<vmem>>, vector<1x16x16xf32>
    %38 = vector.shape_cast %37 : vector<1x16x16xf32> to vector<16x16xf32>
    %c1_57 = arith.constant 1 : index
    %c2_58 = arith.constant 2 : index
    %c0_59 = arith.constant 0 : index
    %39 = vector.load %arg7[%c1_57, %c2_58, %c0_59] : memref<4x18x18xf32, #tpu.memory_space<vmem>>, vector<1x16x16xf32>
    %40 = vector.shape_cast %39 : vector<1x16x16xf32> to vector<16x16xf32>
    %c1_60 = arith.constant 1 : index
    %c2_61 = arith.constant 2 : index
    %c1_62 = arith.constant 1 : index
    %41 = vector.load %arg7[%c1_60, %c2_61, %c1_62] : memref<4x18x18xf32, #tpu.memory_space<vmem>>, vector<1x16x16xf32>
    %42 = vector.shape_cast %41 : vector<1x16x16xf32> to vector<16x16xf32>
    %c1_63 = arith.constant 1 : index
    %c2_64 = arith.constant 2 : index
    %c2_65 = arith.constant 2 : index
    %43 = vector.load %arg7[%c1_63, %c2_64, %c2_65] : memref<4x18x18xf32, #tpu.memory_space<vmem>>, vector<1x16x16xf32>
    %44 = vector.shape_cast %43 : vector<1x16x16xf32> to vector<16x16xf32>
    %c2_66 = arith.constant 2 : index
    %c0_67 = arith.constant 0 : index
    %c0_68 = arith.constant 0 : index
    %45 = vector.load %arg7[%c2_66, %c0_67, %c0_68] : memref<4x18x18xf32, #tpu.memory_space<vmem>>, vector<1x16x16xf32>
    %46 = vector.shape_cast %45 : vector<1x16x16xf32> to vector<16x16xf32>
    %c2_69 = arith.constant 2 : index
    %c0_70 = arith.constant 0 : index
    %c1_71 = arith.constant 1 : index
    %47 = vector.load %arg7[%c2_69, %c0_70, %c1_71] : memref<4x18x18xf32, #tpu.memory_space<vmem>>, vector<1x16x16xf32>
    %48 = vector.shape_cast %47 : vector<1x16x16xf32> to vector<16x16xf32>
    %c2_72 = arith.constant 2 : index
    %c0_73 = arith.constant 0 : index
    %c2_74 = arith.constant 2 : index
    %49 = vector.load %arg7[%c2_72, %c0_73, %c2_74] : memref<4x18x18xf32, #tpu.memory_space<vmem>>, vector<1x16x16xf32>
    %50 = vector.shape_cast %49 : vector<1x16x16xf32> to vector<16x16xf32>
    %c2_75 = arith.constant 2 : index
    %c1_76 = arith.constant 1 : index
    %c0_77 = arith.constant 0 : index
    %51 = vector.load %arg7[%c2_75, %c1_76, %c0_77] : memref<4x18x18xf32, #tpu.memory_space<vmem>>, vector<1x16x16xf32>
    %52 = vector.shape_cast %51 : vector<1x16x16xf32> to vector<16x16xf32>
    %c2_78 = arith.constant 2 : index
    %c1_79 = arith.constant 1 : index
    %c1_80 = arith.constant 1 : index
    %53 = vector.load %arg7[%c2_78, %c1_79, %c1_80] : memref<4x18x18xf32, #tpu.memory_space<vmem>>, vector<1x16x16xf32>
    %54 = vector.shape_cast %53 : vector<1x16x16xf32> to vector<16x16xf32>
    %c2_81 = arith.constant 2 : index
    %c1_82 = arith.constant 1 : index
    %c2_83 = arith.constant 2 : index
    %55 = vector.load %arg7[%c2_81, %c1_82, %c2_83] : memref<4x18x18xf32, #tpu.memory_space<vmem>>, vector<1x16x16xf32>
    %56 = vector.shape_cast %55 : vector<1x16x16xf32> to vector<16x16xf32>
    %c2_84 = arith.constant 2 : index
    %c2_85 = arith.constant 2 : index
    %c0_86 = arith.constant 0 : index
    %57 = vector.load %arg7[%c2_84, %c2_85, %c0_86] : memref<4x18x18xf32, #tpu.memory_space<vmem>>, vector<1x16x16xf32>
    %58 = vector.shape_cast %57 : vector<1x16x16xf32> to vector<16x16xf32>
    %c2_87 = arith.constant 2 : index
    %c2_88 = arith.constant 2 : index
    %c1_89 = arith.constant 1 : index
    %59 = vector.load %arg7[%c2_87, %c2_88, %c1_89] : memref<4x18x18xf32, #tpu.memory_space<vmem>>, vector<1x16x16xf32>
    %60 = vector.shape_cast %59 : vector<1x16x16xf32> to vector<16x16xf32>
    %c2_90 = arith.constant 2 : index
    %c2_91 = arith.constant 2 : index
    %c2_92 = arith.constant 2 : index
    %61 = vector.load %arg7[%c2_90, %c2_91, %c2_92] : memref<4x18x18xf32, #tpu.memory_space<vmem>>, vector<1x16x16xf32>
    %62 = vector.shape_cast %61 : vector<1x16x16xf32> to vector<16x16xf32>
    %c3 = arith.constant 3 : index
    %c0_93 = arith.constant 0 : index
    %c0_94 = arith.constant 0 : index
    %63 = vector.load %arg7[%c3, %c0_93, %c0_94] : memref<4x18x18xf32, #tpu.memory_space<vmem>>, vector<1x16x16xf32>
    %64 = vector.shape_cast %63 : vector<1x16x16xf32> to vector<16x16xf32>
    %c3_95 = arith.constant 3 : index
    %c0_96 = arith.constant 0 : index
    %c1_97 = arith.constant 1 : index
    %65 = vector.load %arg7[%c3_95, %c0_96, %c1_97] : memref<4x18x18xf32, #tpu.memory_space<vmem>>, vector<1x16x16xf32>
    %66 = vector.shape_cast %65 : vector<1x16x16xf32> to vector<16x16xf32>
    %c3_98 = arith.constant 3 : index
    %c0_99 = arith.constant 0 : index
    %c2_100 = arith.constant 2 : index
    %67 = vector.load %arg7[%c3_98, %c0_99, %c2_100] : memref<4x18x18xf32, #tpu.memory_space<vmem>>, vector<1x16x16xf32>
    %68 = vector.shape_cast %67 : vector<1x16x16xf32> to vector<16x16xf32>
    %c3_101 = arith.constant 3 : index
    %c1_102 = arith.constant 1 : index
    %c0_103 = arith.constant 0 : index
    %69 = vector.load %arg7[%c3_101, %c1_102, %c0_103] : memref<4x18x18xf32, #tpu.memory_space<vmem>>, vector<1x16x16xf32>
    %70 = vector.shape_cast %69 : vector<1x16x16xf32> to vector<16x16xf32>
    %c3_104 = arith.constant 3 : index
    %c1_105 = arith.constant 1 : index
    %c1_106 = arith.constant 1 : index
    %71 = vector.load %arg7[%c3_104, %c1_105, %c1_106] : memref<4x18x18xf32, #tpu.memory_space<vmem>>, vector<1x16x16xf32>
    %72 = vector.shape_cast %71 : vector<1x16x16xf32> to vector<16x16xf32>
    %c3_107 = arith.constant 3 : index
    %c1_108 = arith.constant 1 : index
    %c2_109 = arith.constant 2 : index
    %73 = vector.load %arg7[%c3_107, %c1_108, %c2_109] : memref<4x18x18xf32, #tpu.memory_space<vmem>>, vector<1x16x16xf32>
    %74 = vector.shape_cast %73 : vector<1x16x16xf32> to vector<16x16xf32>
    %c3_110 = arith.constant 3 : index
    %c2_111 = arith.constant 2 : index
    %c0_112 = arith.constant 0 : index
    %75 = vector.load %arg7[%c3_110, %c2_111, %c0_112] : memref<4x18x18xf32, #tpu.memory_space<vmem>>, vector<1x16x16xf32>
    %76 = vector.shape_cast %75 : vector<1x16x16xf32> to vector<16x16xf32>
    %c3_113 = arith.constant 3 : index
    %c2_114 = arith.constant 2 : index
    %c1_115 = arith.constant 1 : index
    %77 = vector.load %arg7[%c3_113, %c2_114, %c1_115] : memref<4x18x18xf32, #tpu.memory_space<vmem>>, vector<1x16x16xf32>
    %78 = vector.shape_cast %77 : vector<1x16x16xf32> to vector<16x16xf32>
    %c3_116 = arith.constant 3 : index
    %c2_117 = arith.constant 2 : index
    %c2_118 = arith.constant 2 : index
    %79 = vector.load %arg7[%c3_116, %c2_117, %c2_118] : memref<4x18x18xf32, #tpu.memory_space<vmem>>, vector<1x16x16xf32>
    %80 = vector.shape_cast %79 : vector<1x16x16xf32> to vector<16x16xf32>
    %cst_119 = arith.constant 0.000000e+00 : f32
    %81 = vector.broadcast %cst_119 : f32 to vector<16x16xf32>
    %c0_120 = arith.constant 0 : index
    %82 = memref.load %arg2[%c0_120] : memref<144xf32, #tpu.memory_space<smem>>
    %83 = vector.broadcast %82 : f32 to vector<16x16xf32>
    %84 = arith.mulf %83, %10 : vector<16x16xf32>
    %85 = arith.addf %81, %84 : vector<16x16xf32>
    %c1_121 = arith.constant 1 : index
    %86 = memref.load %arg2[%c1_121] : memref<144xf32, #tpu.memory_space<smem>>
    %87 = vector.broadcast %86 : f32 to vector<16x16xf32>
    %88 = arith.mulf %87, %12 : vector<16x16xf32>
    %89 = arith.addf %85, %88 : vector<16x16xf32>
    %c2_122 = arith.constant 2 : index
    %90 = memref.load %arg2[%c2_122] : memref<144xf32, #tpu.memory_space<smem>>
    %91 = vector.broadcast %90 : f32 to vector<16x16xf32>
    %92 = arith.mulf %91, %14 : vector<16x16xf32>
    %93 = arith.addf %89, %92 : vector<16x16xf32>
    %c3_123 = arith.constant 3 : index
    %94 = memref.load %arg2[%c3_123] : memref<144xf32, #tpu.memory_space<smem>>
    %95 = vector.broadcast %94 : f32 to vector<16x16xf32>
    %96 = arith.mulf %95, %16 : vector<16x16xf32>
    %97 = arith.addf %93, %96 : vector<16x16xf32>
    %c4 = arith.constant 4 : index
    %98 = memref.load %arg2[%c4] : memref<144xf32, #tpu.memory_space<smem>>
    %99 = vector.broadcast %98 : f32 to vector<16x16xf32>
    %100 = arith.mulf %99, %18 : vector<16x16xf32>
    %101 = arith.addf %97, %100 : vector<16x16xf32>
    %c5 = arith.constant 5 : index
    %102 = memref.load %arg2[%c5] : memref<144xf32, #tpu.memory_space<smem>>
    %103 = vector.broadcast %102 : f32 to vector<16x16xf32>
    %104 = arith.mulf %103, %20 : vector<16x16xf32>
    %105 = arith.addf %101, %104 : vector<16x16xf32>
    %c6 = arith.constant 6 : index
    %106 = memref.load %arg2[%c6] : memref<144xf32, #tpu.memory_space<smem>>
    %107 = vector.broadcast %106 : f32 to vector<16x16xf32>
    %108 = arith.mulf %107, %22 : vector<16x16xf32>
    %109 = arith.addf %105, %108 : vector<16x16xf32>
    %c7 = arith.constant 7 : index
    %110 = memref.load %arg2[%c7] : memref<144xf32, #tpu.memory_space<smem>>
    %111 = vector.broadcast %110 : f32 to vector<16x16xf32>
    %112 = arith.mulf %111, %24 : vector<16x16xf32>
    %113 = arith.addf %109, %112 : vector<16x16xf32>
    %c8 = arith.constant 8 : index
    %114 = memref.load %arg2[%c8] : memref<144xf32, #tpu.memory_space<smem>>
    %115 = vector.broadcast %114 : f32 to vector<16x16xf32>
    %116 = arith.mulf %115, %26 : vector<16x16xf32>
    %117 = arith.addf %113, %116 : vector<16x16xf32>
    %c9 = arith.constant 9 : index
    %118 = memref.load %arg2[%c9] : memref<144xf32, #tpu.memory_space<smem>>
    %119 = vector.broadcast %118 : f32 to vector<16x16xf32>
    %120 = arith.mulf %119, %28 : vector<16x16xf32>
    %121 = arith.addf %117, %120 : vector<16x16xf32>
    %c10 = arith.constant 10 : index
    %122 = memref.load %arg2[%c10] : memref<144xf32, #tpu.memory_space<smem>>
    %123 = vector.broadcast %122 : f32 to vector<16x16xf32>
    %124 = arith.mulf %123, %30 : vector<16x16xf32>
    %125 = arith.addf %121, %124 : vector<16x16xf32>
    %c11 = arith.constant 11 : index
    %126 = memref.load %arg2[%c11] : memref<144xf32, #tpu.memory_space<smem>>
    %127 = vector.broadcast %126 : f32 to vector<16x16xf32>
    %128 = arith.mulf %127, %32 : vector<16x16xf32>
    %129 = arith.addf %125, %128 : vector<16x16xf32>
    %c12 = arith.constant 12 : index
    %130 = memref.load %arg2[%c12] : memref<144xf32, #tpu.memory_space<smem>>
    %131 = vector.broadcast %130 : f32 to vector<16x16xf32>
    %132 = arith.mulf %131, %34 : vector<16x16xf32>
    %133 = arith.addf %129, %132 : vector<16x16xf32>
    %c13 = arith.constant 13 : index
    %134 = memref.load %arg2[%c13] : memref<144xf32, #tpu.memory_space<smem>>
    %135 = vector.broadcast %134 : f32 to vector<16x16xf32>
    %136 = arith.mulf %135, %36 : vector<16x16xf32>
    %137 = arith.addf %133, %136 : vector<16x16xf32>
    %c14 = arith.constant 14 : index
    %138 = memref.load %arg2[%c14] : memref<144xf32, #tpu.memory_space<smem>>
    %139 = vector.broadcast %138 : f32 to vector<16x16xf32>
    %140 = arith.mulf %139, %38 : vector<16x16xf32>
    %141 = arith.addf %137, %140 : vector<16x16xf32>
    %c15 = arith.constant 15 : index
    %142 = memref.load %arg2[%c15] : memref<144xf32, #tpu.memory_space<smem>>
    %143 = vector.broadcast %142 : f32 to vector<16x16xf32>
    %144 = arith.mulf %143, %40 : vector<16x16xf32>
    %145 = arith.addf %141, %144 : vector<16x16xf32>
    %c16 = arith.constant 16 : index
    %146 = memref.load %arg2[%c16] : memref<144xf32, #tpu.memory_space<smem>>
    %147 = vector.broadcast %146 : f32 to vector<16x16xf32>
    %148 = arith.mulf %147, %42 : vector<16x16xf32>
    %149 = arith.addf %145, %148 : vector<16x16xf32>
    %c17 = arith.constant 17 : index
    %150 = memref.load %arg2[%c17] : memref<144xf32, #tpu.memory_space<smem>>
    %151 = vector.broadcast %150 : f32 to vector<16x16xf32>
    %152 = arith.mulf %151, %44 : vector<16x16xf32>
    %153 = arith.addf %149, %152 : vector<16x16xf32>
    %c18 = arith.constant 18 : index
    %154 = memref.load %arg2[%c18] : memref<144xf32, #tpu.memory_space<smem>>
    %155 = vector.broadcast %154 : f32 to vector<16x16xf32>
    %156 = arith.mulf %155, %46 : vector<16x16xf32>
    %157 = arith.addf %153, %156 : vector<16x16xf32>
    %c19 = arith.constant 19 : index
    %158 = memref.load %arg2[%c19] : memref<144xf32, #tpu.memory_space<smem>>
    %159 = vector.broadcast %158 : f32 to vector<16x16xf32>
    %160 = arith.mulf %159, %48 : vector<16x16xf32>
    %161 = arith.addf %157, %160 : vector<16x16xf32>
    %c20 = arith.constant 20 : index
    %162 = memref.load %arg2[%c20] : memref<144xf32, #tpu.memory_space<smem>>
    %163 = vector.broadcast %162 : f32 to vector<16x16xf32>
    %164 = arith.mulf %163, %50 : vector<16x16xf32>
    %165 = arith.addf %161, %164 : vector<16x16xf32>
    %c21 = arith.constant 21 : index
    %166 = memref.load %arg2[%c21] : memref<144xf32, #tpu.memory_space<smem>>
    %167 = vector.broadcast %166 : f32 to vector<16x16xf32>
    %168 = arith.mulf %167, %52 : vector<16x16xf32>
    %169 = arith.addf %165, %168 : vector<16x16xf32>
    %c22 = arith.constant 22 : index
    %170 = memref.load %arg2[%c22] : memref<144xf32, #tpu.memory_space<smem>>
    %171 = vector.broadcast %170 : f32 to vector<16x16xf32>
    %172 = arith.mulf %171, %54 : vector<16x16xf32>
    %173 = arith.addf %169, %172 : vector<16x16xf32>
    %c23 = arith.constant 23 : index
    %174 = memref.load %arg2[%c23] : memref<144xf32, #tpu.memory_space<smem>>
    %175 = vector.broadcast %174 : f32 to vector<16x16xf32>
    %176 = arith.mulf %175, %56 : vector<16x16xf32>
    %177 = arith.addf %173, %176 : vector<16x16xf32>
    %c24 = arith.constant 24 : index
    %178 = memref.load %arg2[%c24] : memref<144xf32, #tpu.memory_space<smem>>
    %179 = vector.broadcast %178 : f32 to vector<16x16xf32>
    %180 = arith.mulf %179, %58 : vector<16x16xf32>
    %181 = arith.addf %177, %180 : vector<16x16xf32>
    %c25 = arith.constant 25 : index
    %182 = memref.load %arg2[%c25] : memref<144xf32, #tpu.memory_space<smem>>
    %183 = vector.broadcast %182 : f32 to vector<16x16xf32>
    %184 = arith.mulf %183, %60 : vector<16x16xf32>
    %185 = arith.addf %181, %184 : vector<16x16xf32>
    %c26 = arith.constant 26 : index
    %186 = memref.load %arg2[%c26] : memref<144xf32, #tpu.memory_space<smem>>
    %187 = vector.broadcast %186 : f32 to vector<16x16xf32>
    %188 = arith.mulf %187, %62 : vector<16x16xf32>
    %189 = arith.addf %185, %188 : vector<16x16xf32>
    %c27 = arith.constant 27 : index
    %190 = memref.load %arg2[%c27] : memref<144xf32, #tpu.memory_space<smem>>
    %191 = vector.broadcast %190 : f32 to vector<16x16xf32>
    %192 = arith.mulf %191, %64 : vector<16x16xf32>
    %193 = arith.addf %189, %192 : vector<16x16xf32>
    %c28 = arith.constant 28 : index
    %194 = memref.load %arg2[%c28] : memref<144xf32, #tpu.memory_space<smem>>
    %195 = vector.broadcast %194 : f32 to vector<16x16xf32>
    %196 = arith.mulf %195, %66 : vector<16x16xf32>
    %197 = arith.addf %193, %196 : vector<16x16xf32>
    %c29 = arith.constant 29 : index
    %198 = memref.load %arg2[%c29] : memref<144xf32, #tpu.memory_space<smem>>
    %199 = vector.broadcast %198 : f32 to vector<16x16xf32>
    %200 = arith.mulf %199, %68 : vector<16x16xf32>
    %201 = arith.addf %197, %200 : vector<16x16xf32>
    %c30 = arith.constant 30 : index
    %202 = memref.load %arg2[%c30] : memref<144xf32, #tpu.memory_space<smem>>
    %203 = vector.broadcast %202 : f32 to vector<16x16xf32>
    %204 = arith.mulf %203, %70 : vector<16x16xf32>
    %205 = arith.addf %201, %204 : vector<16x16xf32>
    %c31 = arith.constant 31 : index
    %206 = memref.load %arg2[%c31] : memref<144xf32, #tpu.memory_space<smem>>
    %207 = vector.broadcast %206 : f32 to vector<16x16xf32>
    %208 = arith.mulf %207, %72 : vector<16x16xf32>
    %209 = arith.addf %205, %208 : vector<16x16xf32>
    %c32 = arith.constant 32 : index
    %210 = memref.load %arg2[%c32] : memref<144xf32, #tpu.memory_space<smem>>
    %211 = vector.broadcast %210 : f32 to vector<16x16xf32>
    %212 = arith.mulf %211, %74 : vector<16x16xf32>
    %213 = arith.addf %209, %212 : vector<16x16xf32>
    %c33 = arith.constant 33 : index
    %214 = memref.load %arg2[%c33] : memref<144xf32, #tpu.memory_space<smem>>
    %215 = vector.broadcast %214 : f32 to vector<16x16xf32>
    %216 = arith.mulf %215, %76 : vector<16x16xf32>
    %217 = arith.addf %213, %216 : vector<16x16xf32>
    %c34 = arith.constant 34 : index
    %218 = memref.load %arg2[%c34] : memref<144xf32, #tpu.memory_space<smem>>
    %219 = vector.broadcast %218 : f32 to vector<16x16xf32>
    %220 = arith.mulf %219, %78 : vector<16x16xf32>
    %221 = arith.addf %217, %220 : vector<16x16xf32>
    %c35 = arith.constant 35 : index
    %222 = memref.load %arg2[%c35] : memref<144xf32, #tpu.memory_space<smem>>
    %223 = vector.broadcast %222 : f32 to vector<16x16xf32>
    %224 = arith.mulf %223, %80 : vector<16x16xf32>
    %225 = arith.addf %221, %224 : vector<16x16xf32>
    %c0_124 = arith.constant 0 : index
    %226 = memref.load %arg3[%c0_124] : memref<4xf32, #tpu.memory_space<smem>>
    %227 = vector.broadcast %226 : f32 to vector<16x16xf32>
    %228 = arith.addf %225, %227 : vector<16x16xf32>
    %cst_125 = arith.constant 0.000000e+00 : f32
    %229 = vector.broadcast %cst_125 : f32 to vector<16x16xf32>
    %c36 = arith.constant 36 : index
    %230 = memref.load %arg2[%c36] : memref<144xf32, #tpu.memory_space<smem>>
    %231 = vector.broadcast %230 : f32 to vector<16x16xf32>
    %232 = arith.mulf %231, %10 : vector<16x16xf32>
    %233 = arith.addf %229, %232 : vector<16x16xf32>
    %c37 = arith.constant 37 : index
    %234 = memref.load %arg2[%c37] : memref<144xf32, #tpu.memory_space<smem>>
    %235 = vector.broadcast %234 : f32 to vector<16x16xf32>
    %236 = arith.mulf %235, %12 : vector<16x16xf32>
    %237 = arith.addf %233, %236 : vector<16x16xf32>
    %c38 = arith.constant 38 : index
    %238 = memref.load %arg2[%c38] : memref<144xf32, #tpu.memory_space<smem>>
    %239 = vector.broadcast %238 : f32 to vector<16x16xf32>
    %240 = arith.mulf %239, %14 : vector<16x16xf32>
    %241 = arith.addf %237, %240 : vector<16x16xf32>
    %c39 = arith.constant 39 : index
    %242 = memref.load %arg2[%c39] : memref<144xf32, #tpu.memory_space<smem>>
    %243 = vector.broadcast %242 : f32 to vector<16x16xf32>
    %244 = arith.mulf %243, %16 : vector<16x16xf32>
    %245 = arith.addf %241, %244 : vector<16x16xf32>
    %c40 = arith.constant 40 : index
    %246 = memref.load %arg2[%c40] : memref<144xf32, #tpu.memory_space<smem>>
    %247 = vector.broadcast %246 : f32 to vector<16x16xf32>
    %248 = arith.mulf %247, %18 : vector<16x16xf32>
    %249 = arith.addf %245, %248 : vector<16x16xf32>
    %c41 = arith.constant 41 : index
    %250 = memref.load %arg2[%c41] : memref<144xf32, #tpu.memory_space<smem>>
    %251 = vector.broadcast %250 : f32 to vector<16x16xf32>
    %252 = arith.mulf %251, %20 : vector<16x16xf32>
    %253 = arith.addf %249, %252 : vector<16x16xf32>
    %c42 = arith.constant 42 : index
    %254 = memref.load %arg2[%c42] : memref<144xf32, #tpu.memory_space<smem>>
    %255 = vector.broadcast %254 : f32 to vector<16x16xf32>
    %256 = arith.mulf %255, %22 : vector<16x16xf32>
    %257 = arith.addf %253, %256 : vector<16x16xf32>
    %c43 = arith.constant 43 : index
    %258 = memref.load %arg2[%c43] : memref<144xf32, #tpu.memory_space<smem>>
    %259 = vector.broadcast %258 : f32 to vector<16x16xf32>
    %260 = arith.mulf %259, %24 : vector<16x16xf32>
    %261 = arith.addf %257, %260 : vector<16x16xf32>
    %c44 = arith.constant 44 : index
    %262 = memref.load %arg2[%c44] : memref<144xf32, #tpu.memory_space<smem>>
    %263 = vector.broadcast %262 : f32 to vector<16x16xf32>
    %264 = arith.mulf %263, %26 : vector<16x16xf32>
    %265 = arith.addf %261, %264 : vector<16x16xf32>
    %c45 = arith.constant 45 : index
    %266 = memref.load %arg2[%c45] : memref<144xf32, #tpu.memory_space<smem>>
    %267 = vector.broadcast %266 : f32 to vector<16x16xf32>
    %268 = arith.mulf %267, %28 : vector<16x16xf32>
    %269 = arith.addf %265, %268 : vector<16x16xf32>
    %c46 = arith.constant 46 : index
    %270 = memref.load %arg2[%c46] : memref<144xf32, #tpu.memory_space<smem>>
    %271 = vector.broadcast %270 : f32 to vector<16x16xf32>
    %272 = arith.mulf %271, %30 : vector<16x16xf32>
    %273 = arith.addf %269, %272 : vector<16x16xf32>
    %c47 = arith.constant 47 : index
    %274 = memref.load %arg2[%c47] : memref<144xf32, #tpu.memory_space<smem>>
    %275 = vector.broadcast %274 : f32 to vector<16x16xf32>
    %276 = arith.mulf %275, %32 : vector<16x16xf32>
    %277 = arith.addf %273, %276 : vector<16x16xf32>
    %c48 = arith.constant 48 : index
    %278 = memref.load %arg2[%c48] : memref<144xf32, #tpu.memory_space<smem>>
    %279 = vector.broadcast %278 : f32 to vector<16x16xf32>
    %280 = arith.mulf %279, %34 : vector<16x16xf32>
    %281 = arith.addf %277, %280 : vector<16x16xf32>
    %c49 = arith.constant 49 : index
    %282 = memref.load %arg2[%c49] : memref<144xf32, #tpu.memory_space<smem>>
    %283 = vector.broadcast %282 : f32 to vector<16x16xf32>
    %284 = arith.mulf %283, %36 : vector<16x16xf32>
    %285 = arith.addf %281, %284 : vector<16x16xf32>
    %c50 = arith.constant 50 : index
    %286 = memref.load %arg2[%c50] : memref<144xf32, #tpu.memory_space<smem>>
    %287 = vector.broadcast %286 : f32 to vector<16x16xf32>
    %288 = arith.mulf %287, %38 : vector<16x16xf32>
    %289 = arith.addf %285, %288 : vector<16x16xf32>
    %c51 = arith.constant 51 : index
    %290 = memref.load %arg2[%c51] : memref<144xf32, #tpu.memory_space<smem>>
    %291 = vector.broadcast %290 : f32 to vector<16x16xf32>
    %292 = arith.mulf %291, %40 : vector<16x16xf32>
    %293 = arith.addf %289, %292 : vector<16x16xf32>
    %c52 = arith.constant 52 : index
    %294 = memref.load %arg2[%c52] : memref<144xf32, #tpu.memory_space<smem>>
    %295 = vector.broadcast %294 : f32 to vector<16x16xf32>
    %296 = arith.mulf %295, %42 : vector<16x16xf32>
    %297 = arith.addf %293, %296 : vector<16x16xf32>
    %c53 = arith.constant 53 : index
    %298 = memref.load %arg2[%c53] : memref<144xf32, #tpu.memory_space<smem>>
    %299 = vector.broadcast %298 : f32 to vector<16x16xf32>
    %300 = arith.mulf %299, %44 : vector<16x16xf32>
    %301 = arith.addf %297, %300 : vector<16x16xf32>
    %c54 = arith.constant 54 : index
    %302 = memref.load %arg2[%c54] : memref<144xf32, #tpu.memory_space<smem>>
    %303 = vector.broadcast %302 : f32 to vector<16x16xf32>
    %304 = arith.mulf %303, %46 : vector<16x16xf32>
    %305 = arith.addf %301, %304 : vector<16x16xf32>
    %c55 = arith.constant 55 : index
    %306 = memref.load %arg2[%c55] : memref<144xf32, #tpu.memory_space<smem>>
    %307 = vector.broadcast %306 : f32 to vector<16x16xf32>
    %308 = arith.mulf %307, %48 : vector<16x16xf32>
    %309 = arith.addf %305, %308 : vector<16x16xf32>
    %c56 = arith.constant 56 : index
    %310 = memref.load %arg2[%c56] : memref<144xf32, #tpu.memory_space<smem>>
    %311 = vector.broadcast %310 : f32 to vector<16x16xf32>
    %312 = arith.mulf %311, %50 : vector<16x16xf32>
    %313 = arith.addf %309, %312 : vector<16x16xf32>
    %c57 = arith.constant 57 : index
    %314 = memref.load %arg2[%c57] : memref<144xf32, #tpu.memory_space<smem>>
    %315 = vector.broadcast %314 : f32 to vector<16x16xf32>
    %316 = arith.mulf %315, %52 : vector<16x16xf32>
    %317 = arith.addf %313, %316 : vector<16x16xf32>
    %c58 = arith.constant 58 : index
    %318 = memref.load %arg2[%c58] : memref<144xf32, #tpu.memory_space<smem>>
    %319 = vector.broadcast %318 : f32 to vector<16x16xf32>
    %320 = arith.mulf %319, %54 : vector<16x16xf32>
    %321 = arith.addf %317, %320 : vector<16x16xf32>
    %c59 = arith.constant 59 : index
    %322 = memref.load %arg2[%c59] : memref<144xf32, #tpu.memory_space<smem>>
    %323 = vector.broadcast %322 : f32 to vector<16x16xf32>
    %324 = arith.mulf %323, %56 : vector<16x16xf32>
    %325 = arith.addf %321, %324 : vector<16x16xf32>
    %c60 = arith.constant 60 : index
    %326 = memref.load %arg2[%c60] : memref<144xf32, #tpu.memory_space<smem>>
    %327 = vector.broadcast %326 : f32 to vector<16x16xf32>
    %328 = arith.mulf %327, %58 : vector<16x16xf32>
    %329 = arith.addf %325, %328 : vector<16x16xf32>
    %c61 = arith.constant 61 : index
    %330 = memref.load %arg2[%c61] : memref<144xf32, #tpu.memory_space<smem>>
    %331 = vector.broadcast %330 : f32 to vector<16x16xf32>
    %332 = arith.mulf %331, %60 : vector<16x16xf32>
    %333 = arith.addf %329, %332 : vector<16x16xf32>
    %c62 = arith.constant 62 : index
    %334 = memref.load %arg2[%c62] : memref<144xf32, #tpu.memory_space<smem>>
    %335 = vector.broadcast %334 : f32 to vector<16x16xf32>
    %336 = arith.mulf %335, %62 : vector<16x16xf32>
    %337 = arith.addf %333, %336 : vector<16x16xf32>
    %c63 = arith.constant 63 : index
    %338 = memref.load %arg2[%c63] : memref<144xf32, #tpu.memory_space<smem>>
    %339 = vector.broadcast %338 : f32 to vector<16x16xf32>
    %340 = arith.mulf %339, %64 : vector<16x16xf32>
    %341 = arith.addf %337, %340 : vector<16x16xf32>
    %c64 = arith.constant 64 : index
    %342 = memref.load %arg2[%c64] : memref<144xf32, #tpu.memory_space<smem>>
    %343 = vector.broadcast %342 : f32 to vector<16x16xf32>
    %344 = arith.mulf %343, %66 : vector<16x16xf32>
    %345 = arith.addf %341, %344 : vector<16x16xf32>
    %c65 = arith.constant 65 : index
    %346 = memref.load %arg2[%c65] : memref<144xf32, #tpu.memory_space<smem>>
    %347 = vector.broadcast %346 : f32 to vector<16x16xf32>
    %348 = arith.mulf %347, %68 : vector<16x16xf32>
    %349 = arith.addf %345, %348 : vector<16x16xf32>
    %c66 = arith.constant 66 : index
    %350 = memref.load %arg2[%c66] : memref<144xf32, #tpu.memory_space<smem>>
    %351 = vector.broadcast %350 : f32 to vector<16x16xf32>
    %352 = arith.mulf %351, %70 : vector<16x16xf32>
    %353 = arith.addf %349, %352 : vector<16x16xf32>
    %c67 = arith.constant 67 : index
    %354 = memref.load %arg2[%c67] : memref<144xf32, #tpu.memory_space<smem>>
    %355 = vector.broadcast %354 : f32 to vector<16x16xf32>
    %356 = arith.mulf %355, %72 : vector<16x16xf32>
    %357 = arith.addf %353, %356 : vector<16x16xf32>
    %c68 = arith.constant 68 : index
    %358 = memref.load %arg2[%c68] : memref<144xf32, #tpu.memory_space<smem>>
    %359 = vector.broadcast %358 : f32 to vector<16x16xf32>
    %360 = arith.mulf %359, %74 : vector<16x16xf32>
    %361 = arith.addf %357, %360 : vector<16x16xf32>
    %c69 = arith.constant 69 : index
    %362 = memref.load %arg2[%c69] : memref<144xf32, #tpu.memory_space<smem>>
    %363 = vector.broadcast %362 : f32 to vector<16x16xf32>
    %364 = arith.mulf %363, %76 : vector<16x16xf32>
    %365 = arith.addf %361, %364 : vector<16x16xf32>
    %c70 = arith.constant 70 : index
    %366 = memref.load %arg2[%c70] : memref<144xf32, #tpu.memory_space<smem>>
    %367 = vector.broadcast %366 : f32 to vector<16x16xf32>
    %368 = arith.mulf %367, %78 : vector<16x16xf32>
    %369 = arith.addf %365, %368 : vector<16x16xf32>
    %c71 = arith.constant 71 : index
    %370 = memref.load %arg2[%c71] : memref<144xf32, #tpu.memory_space<smem>>
    %371 = vector.broadcast %370 : f32 to vector<16x16xf32>
    %372 = arith.mulf %371, %80 : vector<16x16xf32>
    %373 = arith.addf %369, %372 : vector<16x16xf32>
    %c1_126 = arith.constant 1 : index
    %374 = memref.load %arg3[%c1_126] : memref<4xf32, #tpu.memory_space<smem>>
    %375 = vector.broadcast %374 : f32 to vector<16x16xf32>
    %376 = arith.addf %373, %375 : vector<16x16xf32>
    %cst_127 = arith.constant 0.000000e+00 : f32
    %377 = vector.broadcast %cst_127 : f32 to vector<16x16xf32>
    %c72 = arith.constant 72 : index
    %378 = memref.load %arg2[%c72] : memref<144xf32, #tpu.memory_space<smem>>
    %379 = vector.broadcast %378 : f32 to vector<16x16xf32>
    %380 = arith.mulf %379, %10 : vector<16x16xf32>
    %381 = arith.addf %377, %380 : vector<16x16xf32>
    %c73 = arith.constant 73 : index
    %382 = memref.load %arg2[%c73] : memref<144xf32, #tpu.memory_space<smem>>
    %383 = vector.broadcast %382 : f32 to vector<16x16xf32>
    %384 = arith.mulf %383, %12 : vector<16x16xf32>
    %385 = arith.addf %381, %384 : vector<16x16xf32>
    %c74 = arith.constant 74 : index
    %386 = memref.load %arg2[%c74] : memref<144xf32, #tpu.memory_space<smem>>
    %387 = vector.broadcast %386 : f32 to vector<16x16xf32>
    %388 = arith.mulf %387, %14 : vector<16x16xf32>
    %389 = arith.addf %385, %388 : vector<16x16xf32>
    %c75 = arith.constant 75 : index
    %390 = memref.load %arg2[%c75] : memref<144xf32, #tpu.memory_space<smem>>
    %391 = vector.broadcast %390 : f32 to vector<16x16xf32>
    %392 = arith.mulf %391, %16 : vector<16x16xf32>
    %393 = arith.addf %389, %392 : vector<16x16xf32>
    %c76 = arith.constant 76 : index
    %394 = memref.load %arg2[%c76] : memref<144xf32, #tpu.memory_space<smem>>
    %395 = vector.broadcast %394 : f32 to vector<16x16xf32>
    %396 = arith.mulf %395, %18 : vector<16x16xf32>
    %397 = arith.addf %393, %396 : vector<16x16xf32>
    %c77 = arith.constant 77 : index
    %398 = memref.load %arg2[%c77] : memref<144xf32, #tpu.memory_space<smem>>
    %399 = vector.broadcast %398 : f32 to vector<16x16xf32>
    %400 = arith.mulf %399, %20 : vector<16x16xf32>
    %401 = arith.addf %397, %400 : vector<16x16xf32>
    %c78 = arith.constant 78 : index
    %402 = memref.load %arg2[%c78] : memref<144xf32, #tpu.memory_space<smem>>
    %403 = vector.broadcast %402 : f32 to vector<16x16xf32>
    %404 = arith.mulf %403, %22 : vector<16x16xf32>
    %405 = arith.addf %401, %404 : vector<16x16xf32>
    %c79 = arith.constant 79 : index
    %406 = memref.load %arg2[%c79] : memref<144xf32, #tpu.memory_space<smem>>
    %407 = vector.broadcast %406 : f32 to vector<16x16xf32>
    %408 = arith.mulf %407, %24 : vector<16x16xf32>
    %409 = arith.addf %405, %408 : vector<16x16xf32>
    %c80 = arith.constant 80 : index
    %410 = memref.load %arg2[%c80] : memref<144xf32, #tpu.memory_space<smem>>
    %411 = vector.broadcast %410 : f32 to vector<16x16xf32>
    %412 = arith.mulf %411, %26 : vector<16x16xf32>
    %413 = arith.addf %409, %412 : vector<16x16xf32>
    %c81 = arith.constant 81 : index
    %414 = memref.load %arg2[%c81] : memref<144xf32, #tpu.memory_space<smem>>
    %415 = vector.broadcast %414 : f32 to vector<16x16xf32>
    %416 = arith.mulf %415, %28 : vector<16x16xf32>
    %417 = arith.addf %413, %416 : vector<16x16xf32>
    %c82 = arith.constant 82 : index
    %418 = memref.load %arg2[%c82] : memref<144xf32, #tpu.memory_space<smem>>
    %419 = vector.broadcast %418 : f32 to vector<16x16xf32>
    %420 = arith.mulf %419, %30 : vector<16x16xf32>
    %421 = arith.addf %417, %420 : vector<16x16xf32>
    %c83 = arith.constant 83 : index
    %422 = memref.load %arg2[%c83] : memref<144xf32, #tpu.memory_space<smem>>
    %423 = vector.broadcast %422 : f32 to vector<16x16xf32>
    %424 = arith.mulf %423, %32 : vector<16x16xf32>
    %425 = arith.addf %421, %424 : vector<16x16xf32>
    %c84 = arith.constant 84 : index
    %426 = memref.load %arg2[%c84] : memref<144xf32, #tpu.memory_space<smem>>
    %427 = vector.broadcast %426 : f32 to vector<16x16xf32>
    %428 = arith.mulf %427, %34 : vector<16x16xf32>
    %429 = arith.addf %425, %428 : vector<16x16xf32>
    %c85 = arith.constant 85 : index
    %430 = memref.load %arg2[%c85] : memref<144xf32, #tpu.memory_space<smem>>
    %431 = vector.broadcast %430 : f32 to vector<16x16xf32>
    %432 = arith.mulf %431, %36 : vector<16x16xf32>
    %433 = arith.addf %429, %432 : vector<16x16xf32>
    %c86 = arith.constant 86 : index
    %434 = memref.load %arg2[%c86] : memref<144xf32, #tpu.memory_space<smem>>
    %435 = vector.broadcast %434 : f32 to vector<16x16xf32>
    %436 = arith.mulf %435, %38 : vector<16x16xf32>
    %437 = arith.addf %433, %436 : vector<16x16xf32>
    %c87 = arith.constant 87 : index
    %438 = memref.load %arg2[%c87] : memref<144xf32, #tpu.memory_space<smem>>
    %439 = vector.broadcast %438 : f32 to vector<16x16xf32>
    %440 = arith.mulf %439, %40 : vector<16x16xf32>
    %441 = arith.addf %437, %440 : vector<16x16xf32>
    %c88 = arith.constant 88 : index
    %442 = memref.load %arg2[%c88] : memref<144xf32, #tpu.memory_space<smem>>
    %443 = vector.broadcast %442 : f32 to vector<16x16xf32>
    %444 = arith.mulf %443, %42 : vector<16x16xf32>
    %445 = arith.addf %441, %444 : vector<16x16xf32>
    %c89 = arith.constant 89 : index
    %446 = memref.load %arg2[%c89] : memref<144xf32, #tpu.memory_space<smem>>
    %447 = vector.broadcast %446 : f32 to vector<16x16xf32>
    %448 = arith.mulf %447, %44 : vector<16x16xf32>
    %449 = arith.addf %445, %448 : vector<16x16xf32>
    %c90 = arith.constant 90 : index
    %450 = memref.load %arg2[%c90] : memref<144xf32, #tpu.memory_space<smem>>
    %451 = vector.broadcast %450 : f32 to vector<16x16xf32>
    %452 = arith.mulf %451, %46 : vector<16x16xf32>
    %453 = arith.addf %449, %452 : vector<16x16xf32>
    %c91 = arith.constant 91 : index
    %454 = memref.load %arg2[%c91] : memref<144xf32, #tpu.memory_space<smem>>
    %455 = vector.broadcast %454 : f32 to vector<16x16xf32>
    %456 = arith.mulf %455, %48 : vector<16x16xf32>
    %457 = arith.addf %453, %456 : vector<16x16xf32>
    %c92 = arith.constant 92 : index
    %458 = memref.load %arg2[%c92] : memref<144xf32, #tpu.memory_space<smem>>
    %459 = vector.broadcast %458 : f32 to vector<16x16xf32>
    %460 = arith.mulf %459, %50 : vector<16x16xf32>
    %461 = arith.addf %457, %460 : vector<16x16xf32>
    %c93 = arith.constant 93 : index
    %462 = memref.load %arg2[%c93] : memref<144xf32, #tpu.memory_space<smem>>
    %463 = vector.broadcast %462 : f32 to vector<16x16xf32>
    %464 = arith.mulf %463, %52 : vector<16x16xf32>
    %465 = arith.addf %461, %464 : vector<16x16xf32>
    %c94 = arith.constant 94 : index
    %466 = memref.load %arg2[%c94] : memref<144xf32, #tpu.memory_space<smem>>
    %467 = vector.broadcast %466 : f32 to vector<16x16xf32>
    %468 = arith.mulf %467, %54 : vector<16x16xf32>
    %469 = arith.addf %465, %468 : vector<16x16xf32>
    %c95 = arith.constant 95 : index
    %470 = memref.load %arg2[%c95] : memref<144xf32, #tpu.memory_space<smem>>
    %471 = vector.broadcast %470 : f32 to vector<16x16xf32>
    %472 = arith.mulf %471, %56 : vector<16x16xf32>
    %473 = arith.addf %469, %472 : vector<16x16xf32>
    %c96 = arith.constant 96 : index
    %474 = memref.load %arg2[%c96] : memref<144xf32, #tpu.memory_space<smem>>
    %475 = vector.broadcast %474 : f32 to vector<16x16xf32>
    %476 = arith.mulf %475, %58 : vector<16x16xf32>
    %477 = arith.addf %473, %476 : vector<16x16xf32>
    %c97 = arith.constant 97 : index
    %478 = memref.load %arg2[%c97] : memref<144xf32, #tpu.memory_space<smem>>
    %479 = vector.broadcast %478 : f32 to vector<16x16xf32>
    %480 = arith.mulf %479, %60 : vector<16x16xf32>
    %481 = arith.addf %477, %480 : vector<16x16xf32>
    %c98 = arith.constant 98 : index
    %482 = memref.load %arg2[%c98] : memref<144xf32, #tpu.memory_space<smem>>
    %483 = vector.broadcast %482 : f32 to vector<16x16xf32>
    %484 = arith.mulf %483, %62 : vector<16x16xf32>
    %485 = arith.addf %481, %484 : vector<16x16xf32>
    %c99 = arith.constant 99 : index
    %486 = memref.load %arg2[%c99] : memref<144xf32, #tpu.memory_space<smem>>
    %487 = vector.broadcast %486 : f32 to vector<16x16xf32>
    %488 = arith.mulf %487, %64 : vector<16x16xf32>
    %489 = arith.addf %485, %488 : vector<16x16xf32>
    %c100 = arith.constant 100 : index
    %490 = memref.load %arg2[%c100] : memref<144xf32, #tpu.memory_space<smem>>
    %491 = vector.broadcast %490 : f32 to vector<16x16xf32>
    %492 = arith.mulf %491, %66 : vector<16x16xf32>
    %493 = arith.addf %489, %492 : vector<16x16xf32>
    %c101 = arith.constant 101 : index
    %494 = memref.load %arg2[%c101] : memref<144xf32, #tpu.memory_space<smem>>
    %495 = vector.broadcast %494 : f32 to vector<16x16xf32>
    %496 = arith.mulf %495, %68 : vector<16x16xf32>
    %497 = arith.addf %493, %496 : vector<16x16xf32>
    %c102 = arith.constant 102 : index
    %498 = memref.load %arg2[%c102] : memref<144xf32, #tpu.memory_space<smem>>
    %499 = vector.broadcast %498 : f32 to vector<16x16xf32>
    %500 = arith.mulf %499, %70 : vector<16x16xf32>
    %501 = arith.addf %497, %500 : vector<16x16xf32>
    %c103 = arith.constant 103 : index
    %502 = memref.load %arg2[%c103] : memref<144xf32, #tpu.memory_space<smem>>
    %503 = vector.broadcast %502 : f32 to vector<16x16xf32>
    %504 = arith.mulf %503, %72 : vector<16x16xf32>
    %505 = arith.addf %501, %504 : vector<16x16xf32>
    %c104 = arith.constant 104 : index
    %506 = memref.load %arg2[%c104] : memref<144xf32, #tpu.memory_space<smem>>
    %507 = vector.broadcast %506 : f32 to vector<16x16xf32>
    %508 = arith.mulf %507, %74 : vector<16x16xf32>
    %509 = arith.addf %505, %508 : vector<16x16xf32>
    %c105 = arith.constant 105 : index
    %510 = memref.load %arg2[%c105] : memref<144xf32, #tpu.memory_space<smem>>
    %511 = vector.broadcast %510 : f32 to vector<16x16xf32>
    %512 = arith.mulf %511, %76 : vector<16x16xf32>
    %513 = arith.addf %509, %512 : vector<16x16xf32>
    %c106 = arith.constant 106 : index
    %514 = memref.load %arg2[%c106] : memref<144xf32, #tpu.memory_space<smem>>
    %515 = vector.broadcast %514 : f32 to vector<16x16xf32>
    %516 = arith.mulf %515, %78 : vector<16x16xf32>
    %517 = arith.addf %513, %516 : vector<16x16xf32>
    %c107 = arith.constant 107 : index
    %518 = memref.load %arg2[%c107] : memref<144xf32, #tpu.memory_space<smem>>
    %519 = vector.broadcast %518 : f32 to vector<16x16xf32>
    %520 = arith.mulf %519, %80 : vector<16x16xf32>
    %521 = arith.addf %517, %520 : vector<16x16xf32>
    %c2_128 = arith.constant 2 : index
    %522 = memref.load %arg3[%c2_128] : memref<4xf32, #tpu.memory_space<smem>>
    %523 = vector.broadcast %522 : f32 to vector<16x16xf32>
    %524 = arith.addf %521, %523 : vector<16x16xf32>
    %cst_129 = arith.constant 0.000000e+00 : f32
    %525 = vector.broadcast %cst_129 : f32 to vector<16x16xf32>
    %c108 = arith.constant 108 : index
    %526 = memref.load %arg2[%c108] : memref<144xf32, #tpu.memory_space<smem>>
    %527 = vector.broadcast %526 : f32 to vector<16x16xf32>
    %528 = arith.mulf %527, %10 : vector<16x16xf32>
    %529 = arith.addf %525, %528 : vector<16x16xf32>
    %c109 = arith.constant 109 : index
    %530 = memref.load %arg2[%c109] : memref<144xf32, #tpu.memory_space<smem>>
    %531 = vector.broadcast %530 : f32 to vector<16x16xf32>
    %532 = arith.mulf %531, %12 : vector<16x16xf32>
    %533 = arith.addf %529, %532 : vector<16x16xf32>
    %c110 = arith.constant 110 : index
    %534 = memref.load %arg2[%c110] : memref<144xf32, #tpu.memory_space<smem>>
    %535 = vector.broadcast %534 : f32 to vector<16x16xf32>
    %536 = arith.mulf %535, %14 : vector<16x16xf32>
    %537 = arith.addf %533, %536 : vector<16x16xf32>
    %c111 = arith.constant 111 : index
    %538 = memref.load %arg2[%c111] : memref<144xf32, #tpu.memory_space<smem>>
    %539 = vector.broadcast %538 : f32 to vector<16x16xf32>
    %540 = arith.mulf %539, %16 : vector<16x16xf32>
    %541 = arith.addf %537, %540 : vector<16x16xf32>
    %c112 = arith.constant 112 : index
    %542 = memref.load %arg2[%c112] : memref<144xf32, #tpu.memory_space<smem>>
    %543 = vector.broadcast %542 : f32 to vector<16x16xf32>
    %544 = arith.mulf %543, %18 : vector<16x16xf32>
    %545 = arith.addf %541, %544 : vector<16x16xf32>
    %c113 = arith.constant 113 : index
    %546 = memref.load %arg2[%c113] : memref<144xf32, #tpu.memory_space<smem>>
    %547 = vector.broadcast %546 : f32 to vector<16x16xf32>
    %548 = arith.mulf %547, %20 : vector<16x16xf32>
    %549 = arith.addf %545, %548 : vector<16x16xf32>
    %c114 = arith.constant 114 : index
    %550 = memref.load %arg2[%c114] : memref<144xf32, #tpu.memory_space<smem>>
    %551 = vector.broadcast %550 : f32 to vector<16x16xf32>
    %552 = arith.mulf %551, %22 : vector<16x16xf32>
    %553 = arith.addf %549, %552 : vector<16x16xf32>
    %c115 = arith.constant 115 : index
    %554 = memref.load %arg2[%c115] : memref<144xf32, #tpu.memory_space<smem>>
    %555 = vector.broadcast %554 : f32 to vector<16x16xf32>
    %556 = arith.mulf %555, %24 : vector<16x16xf32>
    %557 = arith.addf %553, %556 : vector<16x16xf32>
    %c116 = arith.constant 116 : index
    %558 = memref.load %arg2[%c116] : memref<144xf32, #tpu.memory_space<smem>>
    %559 = vector.broadcast %558 : f32 to vector<16x16xf32>
    %560 = arith.mulf %559, %26 : vector<16x16xf32>
    %561 = arith.addf %557, %560 : vector<16x16xf32>
    %c117 = arith.constant 117 : index
    %562 = memref.load %arg2[%c117] : memref<144xf32, #tpu.memory_space<smem>>
    %563 = vector.broadcast %562 : f32 to vector<16x16xf32>
    %564 = arith.mulf %563, %28 : vector<16x16xf32>
    %565 = arith.addf %561, %564 : vector<16x16xf32>
    %c118 = arith.constant 118 : index
    %566 = memref.load %arg2[%c118] : memref<144xf32, #tpu.memory_space<smem>>
    %567 = vector.broadcast %566 : f32 to vector<16x16xf32>
    %568 = arith.mulf %567, %30 : vector<16x16xf32>
    %569 = arith.addf %565, %568 : vector<16x16xf32>
    %c119 = arith.constant 119 : index
    %570 = memref.load %arg2[%c119] : memref<144xf32, #tpu.memory_space<smem>>
    %571 = vector.broadcast %570 : f32 to vector<16x16xf32>
    %572 = arith.mulf %571, %32 : vector<16x16xf32>
    %573 = arith.addf %569, %572 : vector<16x16xf32>
    %c120 = arith.constant 120 : index
    %574 = memref.load %arg2[%c120] : memref<144xf32, #tpu.memory_space<smem>>
    %575 = vector.broadcast %574 : f32 to vector<16x16xf32>
    %576 = arith.mulf %575, %34 : vector<16x16xf32>
    %577 = arith.addf %573, %576 : vector<16x16xf32>
    %c121 = arith.constant 121 : index
    %578 = memref.load %arg2[%c121] : memref<144xf32, #tpu.memory_space<smem>>
    %579 = vector.broadcast %578 : f32 to vector<16x16xf32>
    %580 = arith.mulf %579, %36 : vector<16x16xf32>
    %581 = arith.addf %577, %580 : vector<16x16xf32>
    %c122 = arith.constant 122 : index
    %582 = memref.load %arg2[%c122] : memref<144xf32, #tpu.memory_space<smem>>
    %583 = vector.broadcast %582 : f32 to vector<16x16xf32>
    %584 = arith.mulf %583, %38 : vector<16x16xf32>
    %585 = arith.addf %581, %584 : vector<16x16xf32>
    %c123 = arith.constant 123 : index
    %586 = memref.load %arg2[%c123] : memref<144xf32, #tpu.memory_space<smem>>
    %587 = vector.broadcast %586 : f32 to vector<16x16xf32>
    %588 = arith.mulf %587, %40 : vector<16x16xf32>
    %589 = arith.addf %585, %588 : vector<16x16xf32>
    %c124 = arith.constant 124 : index
    %590 = memref.load %arg2[%c124] : memref<144xf32, #tpu.memory_space<smem>>
    %591 = vector.broadcast %590 : f32 to vector<16x16xf32>
    %592 = arith.mulf %591, %42 : vector<16x16xf32>
    %593 = arith.addf %589, %592 : vector<16x16xf32>
    %c125 = arith.constant 125 : index
    %594 = memref.load %arg2[%c125] : memref<144xf32, #tpu.memory_space<smem>>
    %595 = vector.broadcast %594 : f32 to vector<16x16xf32>
    %596 = arith.mulf %595, %44 : vector<16x16xf32>
    %597 = arith.addf %593, %596 : vector<16x16xf32>
    %c126 = arith.constant 126 : index
    %598 = memref.load %arg2[%c126] : memref<144xf32, #tpu.memory_space<smem>>
    %599 = vector.broadcast %598 : f32 to vector<16x16xf32>
    %600 = arith.mulf %599, %46 : vector<16x16xf32>
    %601 = arith.addf %597, %600 : vector<16x16xf32>
    %c127 = arith.constant 127 : index
    %602 = memref.load %arg2[%c127] : memref<144xf32, #tpu.memory_space<smem>>
    %603 = vector.broadcast %602 : f32 to vector<16x16xf32>
    %604 = arith.mulf %603, %48 : vector<16x16xf32>
    %605 = arith.addf %601, %604 : vector<16x16xf32>
    %c128 = arith.constant 128 : index
    %606 = memref.load %arg2[%c128] : memref<144xf32, #tpu.memory_space<smem>>
    %607 = vector.broadcast %606 : f32 to vector<16x16xf32>
    %608 = arith.mulf %607, %50 : vector<16x16xf32>
    %609 = arith.addf %605, %608 : vector<16x16xf32>
    %c129 = arith.constant 129 : index
    %610 = memref.load %arg2[%c129] : memref<144xf32, #tpu.memory_space<smem>>
    %611 = vector.broadcast %610 : f32 to vector<16x16xf32>
    %612 = arith.mulf %611, %52 : vector<16x16xf32>
    %613 = arith.addf %609, %612 : vector<16x16xf32>
    %c130 = arith.constant 130 : index
    %614 = memref.load %arg2[%c130] : memref<144xf32, #tpu.memory_space<smem>>
    %615 = vector.broadcast %614 : f32 to vector<16x16xf32>
    %616 = arith.mulf %615, %54 : vector<16x16xf32>
    %617 = arith.addf %613, %616 : vector<16x16xf32>
    %c131 = arith.constant 131 : index
    %618 = memref.load %arg2[%c131] : memref<144xf32, #tpu.memory_space<smem>>
    %619 = vector.broadcast %618 : f32 to vector<16x16xf32>
    %620 = arith.mulf %619, %56 : vector<16x16xf32>
    %621 = arith.addf %617, %620 : vector<16x16xf32>
    %c132 = arith.constant 132 : index
    %622 = memref.load %arg2[%c132] : memref<144xf32, #tpu.memory_space<smem>>
    %623 = vector.broadcast %622 : f32 to vector<16x16xf32>
    %624 = arith.mulf %623, %58 : vector<16x16xf32>
    %625 = arith.addf %621, %624 : vector<16x16xf32>
    %c133 = arith.constant 133 : index
    %626 = memref.load %arg2[%c133] : memref<144xf32, #tpu.memory_space<smem>>
    %627 = vector.broadcast %626 : f32 to vector<16x16xf32>
    %628 = arith.mulf %627, %60 : vector<16x16xf32>
    %629 = arith.addf %625, %628 : vector<16x16xf32>
    %c134 = arith.constant 134 : index
    %630 = memref.load %arg2[%c134] : memref<144xf32, #tpu.memory_space<smem>>
    %631 = vector.broadcast %630 : f32 to vector<16x16xf32>
    %632 = arith.mulf %631, %62 : vector<16x16xf32>
    %633 = arith.addf %629, %632 : vector<16x16xf32>
    %c135 = arith.constant 135 : index
    %634 = memref.load %arg2[%c135] : memref<144xf32, #tpu.memory_space<smem>>
    %635 = vector.broadcast %634 : f32 to vector<16x16xf32>
    %636 = arith.mulf %635, %64 : vector<16x16xf32>
    %637 = arith.addf %633, %636 : vector<16x16xf32>
    %c136 = arith.constant 136 : index
    %638 = memref.load %arg2[%c136] : memref<144xf32, #tpu.memory_space<smem>>
    %639 = vector.broadcast %638 : f32 to vector<16x16xf32>
    %640 = arith.mulf %639, %66 : vector<16x16xf32>
    %641 = arith.addf %637, %640 : vector<16x16xf32>
    %c137 = arith.constant 137 : index
    %642 = memref.load %arg2[%c137] : memref<144xf32, #tpu.memory_space<smem>>
    %643 = vector.broadcast %642 : f32 to vector<16x16xf32>
    %644 = arith.mulf %643, %68 : vector<16x16xf32>
    %645 = arith.addf %641, %644 : vector<16x16xf32>
    %c138 = arith.constant 138 : index
    %646 = memref.load %arg2[%c138] : memref<144xf32, #tpu.memory_space<smem>>
    %647 = vector.broadcast %646 : f32 to vector<16x16xf32>
    %648 = arith.mulf %647, %70 : vector<16x16xf32>
    %649 = arith.addf %645, %648 : vector<16x16xf32>
    %c139 = arith.constant 139 : index
    %650 = memref.load %arg2[%c139] : memref<144xf32, #tpu.memory_space<smem>>
    %651 = vector.broadcast %650 : f32 to vector<16x16xf32>
    %652 = arith.mulf %651, %72 : vector<16x16xf32>
    %653 = arith.addf %649, %652 : vector<16x16xf32>
    %c140 = arith.constant 140 : index
    %654 = memref.load %arg2[%c140] : memref<144xf32, #tpu.memory_space<smem>>
    %655 = vector.broadcast %654 : f32 to vector<16x16xf32>
    %656 = arith.mulf %655, %74 : vector<16x16xf32>
    %657 = arith.addf %653, %656 : vector<16x16xf32>
    %c141 = arith.constant 141 : index
    %658 = memref.load %arg2[%c141] : memref<144xf32, #tpu.memory_space<smem>>
    %659 = vector.broadcast %658 : f32 to vector<16x16xf32>
    %660 = arith.mulf %659, %76 : vector<16x16xf32>
    %661 = arith.addf %657, %660 : vector<16x16xf32>
    %c142 = arith.constant 142 : index
    %662 = memref.load %arg2[%c142] : memref<144xf32, #tpu.memory_space<smem>>
    %663 = vector.broadcast %662 : f32 to vector<16x16xf32>
    %664 = arith.mulf %663, %78 : vector<16x16xf32>
    %665 = arith.addf %661, %664 : vector<16x16xf32>
    %c143 = arith.constant 143 : index
    %666 = memref.load %arg2[%c143] : memref<144xf32, #tpu.memory_space<smem>>
    %667 = vector.broadcast %666 : f32 to vector<16x16xf32>
    %668 = arith.mulf %667, %80 : vector<16x16xf32>
    %669 = arith.addf %665, %668 : vector<16x16xf32>
    %c3_130 = arith.constant 3 : index
    %670 = memref.load %arg3[%c3_130] : memref<4xf32, #tpu.memory_space<smem>>
    %671 = vector.broadcast %670 : f32 to vector<16x16xf32>
    %672 = arith.addf %669, %671 : vector<16x16xf32>
    %cst_131 = arith.constant 0.000000e+00 : f32
    %673 = vector.broadcast %cst_131 : f32 to vector<16x16xf32>
    %674 = arith.maximumf %228, %673 : vector<16x16xf32>
    %c0_132 = arith.constant 0 : index
    %c1_133 = arith.constant 1 : index
    %c1_134 = arith.constant 1 : index
    %675 = vector.load %arg8[%c0_132, %c1_133, %c1_134] : memref<4x18x18xf32, #tpu.memory_space<vmem>>, vector<1x16x16xf32>
    %676 = vector.shape_cast %675 : vector<1x16x16xf32> to vector<16x16xf32>
    %677 = vector.shape_cast %674 : vector<16x16xf32> to vector<1x16x16xf32>
    tpu.vector_store %arg8[%c0_132, %c1_133, %c1_134], %677 {strides = array<i32>} : memref<4x18x18xf32, #tpu.memory_space<vmem>>, vector<1x16x16xf32>,
    %cst_135 = arith.constant 0.000000e+00 : f32
    %678 = vector.broadcast %cst_135 : f32 to vector<16x16xf32>
    %679 = arith.maximumf %376, %678 : vector<16x16xf32>
    %c1_136 = arith.constant 1 : index
    %c1_137 = arith.constant 1 : index
    %c1_138 = arith.constant 1 : index
    %680 = vector.load %arg8[%c1_136, %c1_137, %c1_138] : memref<4x18x18xf32, #tpu.memory_space<vmem>>, vector<1x16x16xf32>
    %681 = vector.shape_cast %680 : vector<1x16x16xf32> to vector<16x16xf32>
    %682 = vector.shape_cast %679 : vector<16x16xf32> to vector<1x16x16xf32>
    tpu.vector_store %arg8[%c1_136, %c1_137, %c1_138], %682 {strides = array<i32>} : memref<4x18x18xf32, #tpu.memory_space<vmem>>, vector<1x16x16xf32>,
    %cst_139 = arith.constant 0.000000e+00 : f32
    %683 = vector.broadcast %cst_139 : f32 to vector<16x16xf32>
    %684 = arith.maximumf %524, %683 : vector<16x16xf32>
    %c2_140 = arith.constant 2 : index
    %c1_141 = arith.constant 1 : index
    %c1_142 = arith.constant 1 : index
    %685 = vector.load %arg8[%c2_140, %c1_141, %c1_142] : memref<4x18x18xf32, #tpu.memory_space<vmem>>, vector<1x16x16xf32>
    %686 = vector.shape_cast %685 : vector<1x16x16xf32> to vector<16x16xf32>
    %687 = vector.shape_cast %684 : vector<16x16xf32> to vector<1x16x16xf32>
    tpu.vector_store %arg8[%c2_140, %c1_141, %c1_142], %687 {strides = array<i32>} : memref<4x18x18xf32, #tpu.memory_space<vmem>>, vector<1x16x16xf32>,
    %cst_143 = arith.constant 0.000000e+00 : f32
    %688 = vector.broadcast %cst_143 : f32 to vector<16x16xf32>
    %689 = arith.maximumf %672, %688 : vector<16x16xf32>
    %c3_144 = arith.constant 3 : index
    %c1_145 = arith.constant 1 : index
    %c1_146 = arith.constant 1 : index
    %690 = vector.load %arg8[%c3_144, %c1_145, %c1_146] : memref<4x18x18xf32, #tpu.memory_space<vmem>>, vector<1x16x16xf32>
    %691 = vector.shape_cast %690 : vector<1x16x16xf32> to vector<16x16xf32>
    %692 = vector.shape_cast %689 : vector<16x16xf32> to vector<1x16x16xf32>
    tpu.vector_store %arg8[%c3_144, %c1_145, %c1_146], %692 {strides = array<i32>} : memref<4x18x18xf32, #tpu.memory_space<vmem>>, vector<1x16x16xf32>,
    %c0_147 = arith.constant 0 : index
    %c0_148 = arith.constant 0 : index
    %c0_149 = arith.constant 0 : index
    %693 = vector.load %arg8[%c0_147, %c0_148, %c0_149] : memref<4x18x18xf32, #tpu.memory_space<vmem>>, vector<1x16x16xf32>
    %694 = vector.shape_cast %693 : vector<1x16x16xf32> to vector<16x16xf32>
    %c0_150 = arith.constant 0 : index
    %c0_151 = arith.constant 0 : index
    %c1_152 = arith.constant 1 : index
    %695 = vector.load %arg8[%c0_150, %c0_151, %c1_152] : memref<4x18x18xf32, #tpu.memory_space<vmem>>, vector<1x16x16xf32>
    %696 = vector.shape_cast %695 : vector<1x16x16xf32> to vector<16x16xf32>
    %c0_153 = arith.constant 0 : index
    %c0_154 = arith.constant 0 : index
    %c2_155 = arith.constant 2 : index
    %697 = vector.load %arg8[%c0_153, %c0_154, %c2_155] : memref<4x18x18xf32, #tpu.memory_space<vmem>>, vector<1x16x16xf32>
    %698 = vector.shape_cast %697 : vector<1x16x16xf32> to vector<16x16xf32>
    %c0_156 = arith.constant 0 : index
    %c1_157 = arith.constant 1 : index
    %c0_158 = arith.constant 0 : index
    %699 = vector.load %arg8[%c0_156, %c1_157, %c0_158] : memref<4x18x18xf32, #tpu.memory_space<vmem>>, vector<1x16x16xf32>
    %700 = vector.shape_cast %699 : vector<1x16x16xf32> to vector<16x16xf32>
    %c0_159 = arith.constant 0 : index
    %c1_160 = arith.constant 1 : index
    %c1_161 = arith.constant 1 : index
    %701 = vector.load %arg8[%c0_159, %c1_160, %c1_161] : memref<4x18x18xf32, #tpu.memory_space<vmem>>, vector<1x16x16xf32>
    %702 = vector.shape_cast %701 : vector<1x16x16xf32> to vector<16x16xf32>
    %c0_162 = arith.constant 0 : index
    %c1_163 = arith.constant 1 : index
    %c2_164 = arith.constant 2 : index
    %703 = vector.load %arg8[%c0_162, %c1_163, %c2_164] : memref<4x18x18xf32, #tpu.memory_space<vmem>>, vector<1x16x16xf32>
    %704 = vector.shape_cast %703 : vector<1x16x16xf32> to vector<16x16xf32>
    %c0_165 = arith.constant 0 : index
    %c2_166 = arith.constant 2 : index
    %c0_167 = arith.constant 0 : index
    %705 = vector.load %arg8[%c0_165, %c2_166, %c0_167] : memref<4x18x18xf32, #tpu.memory_space<vmem>>, vector<1x16x16xf32>
    %706 = vector.shape_cast %705 : vector<1x16x16xf32> to vector<16x16xf32>
    %c0_168 = arith.constant 0 : index
    %c2_169 = arith.constant 2 : index
    %c1_170 = arith.constant 1 : index
    %707 = vector.load %arg8[%c0_168, %c2_169, %c1_170] : memref<4x18x18xf32, #tpu.memory_space<vmem>>, vector<1x16x16xf32>
    %708 = vector.shape_cast %707 : vector<1x16x16xf32> to vector<16x16xf32>
    %c0_171 = arith.constant 0 : index
    %c2_172 = arith.constant 2 : index
    %c2_173 = arith.constant 2 : index
    %709 = vector.load %arg8[%c0_171, %c2_172, %c2_173] : memref<4x18x18xf32, #tpu.memory_space<vmem>>, vector<1x16x16xf32>
    %710 = vector.shape_cast %709 : vector<1x16x16xf32> to vector<16x16xf32>
    %c1_174 = arith.constant 1 : index
    %c0_175 = arith.constant 0 : index
    %c0_176 = arith.constant 0 : index
    %711 = vector.load %arg8[%c1_174, %c0_175, %c0_176] : memref<4x18x18xf32, #tpu.memory_space<vmem>>, vector<1x16x16xf32>
    %712 = vector.shape_cast %711 : vector<1x16x16xf32> to vector<16x16xf32>
    %c1_177 = arith.constant 1 : index
    %c0_178 = arith.constant 0 : index
    %c1_179 = arith.constant 1 : index
    %713 = vector.load %arg8[%c1_177, %c0_178, %c1_179] : memref<4x18x18xf32, #tpu.memory_space<vmem>>, vector<1x16x16xf32>
    %714 = vector.shape_cast %713 : vector<1x16x16xf32> to vector<16x16xf32>
    %c1_180 = arith.constant 1 : index
    %c0_181 = arith.constant 0 : index
    %c2_182 = arith.constant 2 : index
    %715 = vector.load %arg8[%c1_180, %c0_181, %c2_182] : memref<4x18x18xf32, #tpu.memory_space<vmem>>, vector<1x16x16xf32>
    %716 = vector.shape_cast %715 : vector<1x16x16xf32> to vector<16x16xf32>
    %c1_183 = arith.constant 1 : index
    %c1_184 = arith.constant 1 : index
    %c0_185 = arith.constant 0 : index
    %717 = vector.load %arg8[%c1_183, %c1_184, %c0_185] : memref<4x18x18xf32, #tpu.memory_space<vmem>>, vector<1x16x16xf32>
    %718 = vector.shape_cast %717 : vector<1x16x16xf32> to vector<16x16xf32>
    %c1_186 = arith.constant 1 : index
    %c1_187 = arith.constant 1 : index
    %c1_188 = arith.constant 1 : index
    %719 = vector.load %arg8[%c1_186, %c1_187, %c1_188] : memref<4x18x18xf32, #tpu.memory_space<vmem>>, vector<1x16x16xf32>
    %720 = vector.shape_cast %719 : vector<1x16x16xf32> to vector<16x16xf32>
    %c1_189 = arith.constant 1 : index
    %c1_190 = arith.constant 1 : index
    %c2_191 = arith.constant 2 : index
    %721 = vector.load %arg8[%c1_189, %c1_190, %c2_191] : memref<4x18x18xf32, #tpu.memory_space<vmem>>, vector<1x16x16xf32>
    %722 = vector.shape_cast %721 : vector<1x16x16xf32> to vector<16x16xf32>
    %c1_192 = arith.constant 1 : index
    %c2_193 = arith.constant 2 : index
    %c0_194 = arith.constant 0 : index
    %723 = vector.load %arg8[%c1_192, %c2_193, %c0_194] : memref<4x18x18xf32, #tpu.memory_space<vmem>>, vector<1x16x16xf32>
    %724 = vector.shape_cast %723 : vector<1x16x16xf32> to vector<16x16xf32>
    %c1_195 = arith.constant 1 : index
    %c2_196 = arith.constant 2 : index
    %c1_197 = arith.constant 1 : index
    %725 = vector.load %arg8[%c1_195, %c2_196, %c1_197] : memref<4x18x18xf32, #tpu.memory_space<vmem>>, vector<1x16x16xf32>
    %726 = vector.shape_cast %725 : vector<1x16x16xf32> to vector<16x16xf32>
    %c1_198 = arith.constant 1 : index
    %c2_199 = arith.constant 2 : index
    %c2_200 = arith.constant 2 : index
    %727 = vector.load %arg8[%c1_198, %c2_199, %c2_200] : memref<4x18x18xf32, #tpu.memory_space<vmem>>, vector<1x16x16xf32>
    %728 = vector.shape_cast %727 : vector<1x16x16xf32> to vector<16x16xf32>
    %c2_201 = arith.constant 2 : index
    %c0_202 = arith.constant 0 : index
    %c0_203 = arith.constant 0 : index
    %729 = vector.load %arg8[%c2_201, %c0_202, %c0_203] : memref<4x18x18xf32, #tpu.memory_space<vmem>>, vector<1x16x16xf32>
    %730 = vector.shape_cast %729 : vector<1x16x16xf32> to vector<16x16xf32>
    %c2_204 = arith.constant 2 : index
    %c0_205 = arith.constant 0 : index
    %c1_206 = arith.constant 1 : index
    %731 = vector.load %arg8[%c2_204, %c0_205, %c1_206] : memref<4x18x18xf32, #tpu.memory_space<vmem>>, vector<1x16x16xf32>
    %732 = vector.shape_cast %731 : vector<1x16x16xf32> to vector<16x16xf32>
    %c2_207 = arith.constant 2 : index
    %c0_208 = arith.constant 0 : index
    %c2_209 = arith.constant 2 : index
    %733 = vector.load %arg8[%c2_207, %c0_208, %c2_209] : memref<4x18x18xf32, #tpu.memory_space<vmem>>, vector<1x16x16xf32>
    %734 = vector.shape_cast %733 : vector<1x16x16xf32> to vector<16x16xf32>
    %c2_210 = arith.constant 2 : index
    %c1_211 = arith.constant 1 : index
    %c0_212 = arith.constant 0 : index
    %735 = vector.load %arg8[%c2_210, %c1_211, %c0_212] : memref<4x18x18xf32, #tpu.memory_space<vmem>>, vector<1x16x16xf32>
    %736 = vector.shape_cast %735 : vector<1x16x16xf32> to vector<16x16xf32>
    %c2_213 = arith.constant 2 : index
    %c1_214 = arith.constant 1 : index
    %c1_215 = arith.constant 1 : index
    %737 = vector.load %arg8[%c2_213, %c1_214, %c1_215] : memref<4x18x18xf32, #tpu.memory_space<vmem>>, vector<1x16x16xf32>
    %738 = vector.shape_cast %737 : vector<1x16x16xf32> to vector<16x16xf32>
    %c2_216 = arith.constant 2 : index
    %c1_217 = arith.constant 1 : index
    %c2_218 = arith.constant 2 : index
    %739 = vector.load %arg8[%c2_216, %c1_217, %c2_218] : memref<4x18x18xf32, #tpu.memory_space<vmem>>, vector<1x16x16xf32>
    %740 = vector.shape_cast %739 : vector<1x16x16xf32> to vector<16x16xf32>
    %c2_219 = arith.constant 2 : index
    %c2_220 = arith.constant 2 : index
    %c0_221 = arith.constant 0 : index
    %741 = vector.load %arg8[%c2_219, %c2_220, %c0_221] : memref<4x18x18xf32, #tpu.memory_space<vmem>>, vector<1x16x16xf32>
    %742 = vector.shape_cast %741 : vector<1x16x16xf32> to vector<16x16xf32>
    %c2_222 = arith.constant 2 : index
    %c2_223 = arith.constant 2 : index
    %c1_224 = arith.constant 1 : index
    %743 = vector.load %arg8[%c2_222, %c2_223, %c1_224] : memref<4x18x18xf32, #tpu.memory_space<vmem>>, vector<1x16x16xf32>
    %744 = vector.shape_cast %743 : vector<1x16x16xf32> to vector<16x16xf32>
    %c2_225 = arith.constant 2 : index
    %c2_226 = arith.constant 2 : index
    %c2_227 = arith.constant 2 : index
    %745 = vector.load %arg8[%c2_225, %c2_226, %c2_227] : memref<4x18x18xf32, #tpu.memory_space<vmem>>, vector<1x16x16xf32>
    %746 = vector.shape_cast %745 : vector<1x16x16xf32> to vector<16x16xf32>
    %c3_228 = arith.constant 3 : index
    %c0_229 = arith.constant 0 : index
    %c0_230 = arith.constant 0 : index
    %747 = vector.load %arg8[%c3_228, %c0_229, %c0_230] : memref<4x18x18xf32, #tpu.memory_space<vmem>>, vector<1x16x16xf32>
    %748 = vector.shape_cast %747 : vector<1x16x16xf32> to vector<16x16xf32>
    %c3_231 = arith.constant 3 : index
    %c0_232 = arith.constant 0 : index
    %c1_233 = arith.constant 1 : index
    %749 = vector.load %arg8[%c3_231, %c0_232, %c1_233] : memref<4x18x18xf32, #tpu.memory_space<vmem>>, vector<1x16x16xf32>
    %750 = vector.shape_cast %749 : vector<1x16x16xf32> to vector<16x16xf32>
    %c3_234 = arith.constant 3 : index
    %c0_235 = arith.constant 0 : index
    %c2_236 = arith.constant 2 : index
    %751 = vector.load %arg8[%c3_234, %c0_235, %c2_236] : memref<4x18x18xf32, #tpu.memory_space<vmem>>, vector<1x16x16xf32>
    %752 = vector.shape_cast %751 : vector<1x16x16xf32> to vector<16x16xf32>
    %c3_237 = arith.constant 3 : index
    %c1_238 = arith.constant 1 : index
    %c0_239 = arith.constant 0 : index
    %753 = vector.load %arg8[%c3_237, %c1_238, %c0_239] : memref<4x18x18xf32, #tpu.memory_space<vmem>>, vector<1x16x16xf32>
    %754 = vector.shape_cast %753 : vector<1x16x16xf32> to vector<16x16xf32>
    %c3_240 = arith.constant 3 : index
    %c1_241 = arith.constant 1 : index
    %c1_242 = arith.constant 1 : index
    %755 = vector.load %arg8[%c3_240, %c1_241, %c1_242] : memref<4x18x18xf32, #tpu.memory_space<vmem>>, vector<1x16x16xf32>
    %756 = vector.shape_cast %755 : vector<1x16x16xf32> to vector<16x16xf32>
    %c3_243 = arith.constant 3 : index
    %c1_244 = arith.constant 1 : index
    %c2_245 = arith.constant 2 : index
    %757 = vector.load %arg8[%c3_243, %c1_244, %c2_245] : memref<4x18x18xf32, #tpu.memory_space<vmem>>, vector<1x16x16xf32>
    %758 = vector.shape_cast %757 : vector<1x16x16xf32> to vector<16x16xf32>
    %c3_246 = arith.constant 3 : index
    %c2_247 = arith.constant 2 : index
    %c0_248 = arith.constant 0 : index
    %759 = vector.load %arg8[%c3_246, %c2_247, %c0_248] : memref<4x18x18xf32, #tpu.memory_space<vmem>>, vector<1x16x16xf32>
    %760 = vector.shape_cast %759 : vector<1x16x16xf32> to vector<16x16xf32>
    %c3_249 = arith.constant 3 : index
    %c2_250 = arith.constant 2 : index
    %c1_251 = arith.constant 1 : index
    %761 = vector.load %arg8[%c3_249, %c2_250, %c1_251] : memref<4x18x18xf32, #tpu.memory_space<vmem>>, vector<1x16x16xf32>
    %762 = vector.shape_cast %761 : vector<1x16x16xf32> to vector<16x16xf32>
    %c3_252 = arith.constant 3 : index
    %c2_253 = arith.constant 2 : index
    %c2_254 = arith.constant 2 : index
    %763 = vector.load %arg8[%c3_252, %c2_253, %c2_254] : memref<4x18x18xf32, #tpu.memory_space<vmem>>, vector<1x16x16xf32>
    %764 = vector.shape_cast %763 : vector<1x16x16xf32> to vector<16x16xf32>
    %cst_255 = arith.constant 0.000000e+00 : f32
    %765 = vector.broadcast %cst_255 : f32 to vector<16x16xf32>
    %c0_256 = arith.constant 0 : index
    %766 = memref.load %arg4[%c0_256] : memref<144xf32, #tpu.memory_space<smem>>
    %767 = vector.broadcast %766 : f32 to vector<16x16xf32>
    %768 = arith.mulf %767, %694 : vector<16x16xf32>
    %769 = arith.addf %765, %768 : vector<16x16xf32>
    %c1_257 = arith.constant 1 : index
    %770 = memref.load %arg4[%c1_257] : memref<144xf32, #tpu.memory_space<smem>>
    %771 = vector.broadcast %770 : f32 to vector<16x16xf32>
    %772 = arith.mulf %771, %696 : vector<16x16xf32>
    %773 = arith.addf %769, %772 : vector<16x16xf32>
    %c2_258 = arith.constant 2 : index
    %774 = memref.load %arg4[%c2_258] : memref<144xf32, #tpu.memory_space<smem>>
    %775 = vector.broadcast %774 : f32 to vector<16x16xf32>
    %776 = arith.mulf %775, %698 : vector<16x16xf32>
    %777 = arith.addf %773, %776 : vector<16x16xf32>
    %c3_259 = arith.constant 3 : index
    %778 = memref.load %arg4[%c3_259] : memref<144xf32, #tpu.memory_space<smem>>
    %779 = vector.broadcast %778 : f32 to vector<16x16xf32>
    %780 = arith.mulf %779, %700 : vector<16x16xf32>
    %781 = arith.addf %777, %780 : vector<16x16xf32>
    %c4_260 = arith.constant 4 : index
    %782 = memref.load %arg4[%c4_260] : memref<144xf32, #tpu.memory_space<smem>>
    %783 = vector.broadcast %782 : f32 to vector<16x16xf32>
    %784 = arith.mulf %783, %702 : vector<16x16xf32>
    %785 = arith.addf %781, %784 : vector<16x16xf32>
    %c5_261 = arith.constant 5 : index
    %786 = memref.load %arg4[%c5_261] : memref<144xf32, #tpu.memory_space<smem>>
    %787 = vector.broadcast %786 : f32 to vector<16x16xf32>
    %788 = arith.mulf %787, %704 : vector<16x16xf32>
    %789 = arith.addf %785, %788 : vector<16x16xf32>
    %c6_262 = arith.constant 6 : index
    %790 = memref.load %arg4[%c6_262] : memref<144xf32, #tpu.memory_space<smem>>
    %791 = vector.broadcast %790 : f32 to vector<16x16xf32>
    %792 = arith.mulf %791, %706 : vector<16x16xf32>
    %793 = arith.addf %789, %792 : vector<16x16xf32>
    %c7_263 = arith.constant 7 : index
    %794 = memref.load %arg4[%c7_263] : memref<144xf32, #tpu.memory_space<smem>>
    %795 = vector.broadcast %794 : f32 to vector<16x16xf32>
    %796 = arith.mulf %795, %708 : vector<16x16xf32>
    %797 = arith.addf %793, %796 : vector<16x16xf32>
    %c8_264 = arith.constant 8 : index
    %798 = memref.load %arg4[%c8_264] : memref<144xf32, #tpu.memory_space<smem>>
    %799 = vector.broadcast %798 : f32 to vector<16x16xf32>
    %800 = arith.mulf %799, %710 : vector<16x16xf32>
    %801 = arith.addf %797, %800 : vector<16x16xf32>
    %c9_265 = arith.constant 9 : index
    %802 = memref.load %arg4[%c9_265] : memref<144xf32, #tpu.memory_space<smem>>
    %803 = vector.broadcast %802 : f32 to vector<16x16xf32>
    %804 = arith.mulf %803, %712 : vector<16x16xf32>
    %805 = arith.addf %801, %804 : vector<16x16xf32>
    %c10_266 = arith.constant 10 : index
    %806 = memref.load %arg4[%c10_266] : memref<144xf32, #tpu.memory_space<smem>>
    %807 = vector.broadcast %806 : f32 to vector<16x16xf32>
    %808 = arith.mulf %807, %714 : vector<16x16xf32>
    %809 = arith.addf %805, %808 : vector<16x16xf32>
    %c11_267 = arith.constant 11 : index
    %810 = memref.load %arg4[%c11_267] : memref<144xf32, #tpu.memory_space<smem>>
    %811 = vector.broadcast %810 : f32 to vector<16x16xf32>
    %812 = arith.mulf %811, %716 : vector<16x16xf32>
    %813 = arith.addf %809, %812 : vector<16x16xf32>
    %c12_268 = arith.constant 12 : index
    %814 = memref.load %arg4[%c12_268] : memref<144xf32, #tpu.memory_space<smem>>
    %815 = vector.broadcast %814 : f32 to vector<16x16xf32>
    %816 = arith.mulf %815, %718 : vector<16x16xf32>
    %817 = arith.addf %813, %816 : vector<16x16xf32>
    %c13_269 = arith.constant 13 : index
    %818 = memref.load %arg4[%c13_269] : memref<144xf32, #tpu.memory_space<smem>>
    %819 = vector.broadcast %818 : f32 to vector<16x16xf32>
    %820 = arith.mulf %819, %720 : vector<16x16xf32>
    %821 = arith.addf %817, %820 : vector<16x16xf32>
    %c14_270 = arith.constant 14 : index
    %822 = memref.load %arg4[%c14_270] : memref<144xf32, #tpu.memory_space<smem>>
    %823 = vector.broadcast %822 : f32 to vector<16x16xf32>
    %824 = arith.mulf %823, %722 : vector<16x16xf32>
    %825 = arith.addf %821, %824 : vector<16x16xf32>
    %c15_271 = arith.constant 15 : index
    %826 = memref.load %arg4[%c15_271] : memref<144xf32, #tpu.memory_space<smem>>
    %827 = vector.broadcast %826 : f32 to vector<16x16xf32>
    %828 = arith.mulf %827, %724 : vector<16x16xf32>
    %829 = arith.addf %825, %828 : vector<16x16xf32>
    %c16_272 = arith.constant 16 : index
    %830 = memref.load %arg4[%c16_272] : memref<144xf32, #tpu.memory_space<smem>>
    %831 = vector.broadcast %830 : f32 to vector<16x16xf32>
    %832 = arith.mulf %831, %726 : vector<16x16xf32>
    %833 = arith.addf %829, %832 : vector<16x16xf32>
    %c17_273 = arith.constant 17 : index
    %834 = memref.load %arg4[%c17_273] : memref<144xf32, #tpu.memory_space<smem>>
    %835 = vector.broadcast %834 : f32 to vector<16x16xf32>
    %836 = arith.mulf %835, %728 : vector<16x16xf32>
    %837 = arith.addf %833, %836 : vector<16x16xf32>
    %c18_274 = arith.constant 18 : index
    %838 = memref.load %arg4[%c18_274] : memref<144xf32, #tpu.memory_space<smem>>
    %839 = vector.broadcast %838 : f32 to vector<16x16xf32>
    %840 = arith.mulf %839, %730 : vector<16x16xf32>
    %841 = arith.addf %837, %840 : vector<16x16xf32>
    %c19_275 = arith.constant 19 : index
    %842 = memref.load %arg4[%c19_275] : memref<144xf32, #tpu.memory_space<smem>>
    %843 = vector.broadcast %842 : f32 to vector<16x16xf32>
    %844 = arith.mulf %843, %732 : vector<16x16xf32>
    %845 = arith.addf %841, %844 : vector<16x16xf32>
    %c20_276 = arith.constant 20 : index
    %846 = memref.load %arg4[%c20_276] : memref<144xf32, #tpu.memory_space<smem>>
    %847 = vector.broadcast %846 : f32 to vector<16x16xf32>
    %848 = arith.mulf %847, %734 : vector<16x16xf32>
    %849 = arith.addf %845, %848 : vector<16x16xf32>
    %c21_277 = arith.constant 21 : index
    %850 = memref.load %arg4[%c21_277] : memref<144xf32, #tpu.memory_space<smem>>
    %851 = vector.broadcast %850 : f32 to vector<16x16xf32>
    %852 = arith.mulf %851, %736 : vector<16x16xf32>
    %853 = arith.addf %849, %852 : vector<16x16xf32>
    %c22_278 = arith.constant 22 : index
    %854 = memref.load %arg4[%c22_278] : memref<144xf32, #tpu.memory_space<smem>>
    %855 = vector.broadcast %854 : f32 to vector<16x16xf32>
    %856 = arith.mulf %855, %738 : vector<16x16xf32>
    %857 = arith.addf %853, %856 : vector<16x16xf32>
    %c23_279 = arith.constant 23 : index
    %858 = memref.load %arg4[%c23_279] : memref<144xf32, #tpu.memory_space<smem>>
    %859 = vector.broadcast %858 : f32 to vector<16x16xf32>
    %860 = arith.mulf %859, %740 : vector<16x16xf32>
    %861 = arith.addf %857, %860 : vector<16x16xf32>
    %c24_280 = arith.constant 24 : index
    %862 = memref.load %arg4[%c24_280] : memref<144xf32, #tpu.memory_space<smem>>
    %863 = vector.broadcast %862 : f32 to vector<16x16xf32>
    %864 = arith.mulf %863, %742 : vector<16x16xf32>
    %865 = arith.addf %861, %864 : vector<16x16xf32>
    %c25_281 = arith.constant 25 : index
    %866 = memref.load %arg4[%c25_281] : memref<144xf32, #tpu.memory_space<smem>>
    %867 = vector.broadcast %866 : f32 to vector<16x16xf32>
    %868 = arith.mulf %867, %744 : vector<16x16xf32>
    %869 = arith.addf %865, %868 : vector<16x16xf32>
    %c26_282 = arith.constant 26 : index
    %870 = memref.load %arg4[%c26_282] : memref<144xf32, #tpu.memory_space<smem>>
    %871 = vector.broadcast %870 : f32 to vector<16x16xf32>
    %872 = arith.mulf %871, %746 : vector<16x16xf32>
    %873 = arith.addf %869, %872 : vector<16x16xf32>
    %c27_283 = arith.constant 27 : index
    %874 = memref.load %arg4[%c27_283] : memref<144xf32, #tpu.memory_space<smem>>
    %875 = vector.broadcast %874 : f32 to vector<16x16xf32>
    %876 = arith.mulf %875, %748 : vector<16x16xf32>
    %877 = arith.addf %873, %876 : vector<16x16xf32>
    %c28_284 = arith.constant 28 : index
    %878 = memref.load %arg4[%c28_284] : memref<144xf32, #tpu.memory_space<smem>>
    %879 = vector.broadcast %878 : f32 to vector<16x16xf32>
    %880 = arith.mulf %879, %750 : vector<16x16xf32>
    %881 = arith.addf %877, %880 : vector<16x16xf32>
    %c29_285 = arith.constant 29 : index
    %882 = memref.load %arg4[%c29_285] : memref<144xf32, #tpu.memory_space<smem>>
    %883 = vector.broadcast %882 : f32 to vector<16x16xf32>
    %884 = arith.mulf %883, %752 : vector<16x16xf32>
    %885 = arith.addf %881, %884 : vector<16x16xf32>
    %c30_286 = arith.constant 30 : index
    %886 = memref.load %arg4[%c30_286] : memref<144xf32, #tpu.memory_space<smem>>
    %887 = vector.broadcast %886 : f32 to vector<16x16xf32>
    %888 = arith.mulf %887, %754 : vector<16x16xf32>
    %889 = arith.addf %885, %888 : vector<16x16xf32>
    %c31_287 = arith.constant 31 : index
    %890 = memref.load %arg4[%c31_287] : memref<144xf32, #tpu.memory_space<smem>>
    %891 = vector.broadcast %890 : f32 to vector<16x16xf32>
    %892 = arith.mulf %891, %756 : vector<16x16xf32>
    %893 = arith.addf %889, %892 : vector<16x16xf32>
    %c32_288 = arith.constant 32 : index
    %894 = memref.load %arg4[%c32_288] : memref<144xf32, #tpu.memory_space<smem>>
    %895 = vector.broadcast %894 : f32 to vector<16x16xf32>
    %896 = arith.mulf %895, %758 : vector<16x16xf32>
    %897 = arith.addf %893, %896 : vector<16x16xf32>
    %c33_289 = arith.constant 33 : index
    %898 = memref.load %arg4[%c33_289] : memref<144xf32, #tpu.memory_space<smem>>
    %899 = vector.broadcast %898 : f32 to vector<16x16xf32>
    %900 = arith.mulf %899, %760 : vector<16x16xf32>
    %901 = arith.addf %897, %900 : vector<16x16xf32>
    %c34_290 = arith.constant 34 : index
    %902 = memref.load %arg4[%c34_290] : memref<144xf32, #tpu.memory_space<smem>>
    %903 = vector.broadcast %902 : f32 to vector<16x16xf32>
    %904 = arith.mulf %903, %762 : vector<16x16xf32>
    %905 = arith.addf %901, %904 : vector<16x16xf32>
    %c35_291 = arith.constant 35 : index
    %906 = memref.load %arg4[%c35_291] : memref<144xf32, #tpu.memory_space<smem>>
    %907 = vector.broadcast %906 : f32 to vector<16x16xf32>
    %908 = arith.mulf %907, %764 : vector<16x16xf32>
    %909 = arith.addf %905, %908 : vector<16x16xf32>
    %c0_292 = arith.constant 0 : index
    %910 = memref.load %arg5[%c0_292] : memref<4xf32, #tpu.memory_space<smem>>
    %911 = vector.broadcast %910 : f32 to vector<16x16xf32>
    %912 = arith.addf %909, %911 : vector<16x16xf32>
    %cst_293 = arith.constant 0.000000e+00 : f32
    %913 = vector.broadcast %cst_293 : f32 to vector<16x16xf32>
    %c36_294 = arith.constant 36 : index
    %914 = memref.load %arg4[%c36_294] : memref<144xf32, #tpu.memory_space<smem>>
    %915 = vector.broadcast %914 : f32 to vector<16x16xf32>
    %916 = arith.mulf %915, %694 : vector<16x16xf32>
    %917 = arith.addf %913, %916 : vector<16x16xf32>
    %c37_295 = arith.constant 37 : index
    %918 = memref.load %arg4[%c37_295] : memref<144xf32, #tpu.memory_space<smem>>
    %919 = vector.broadcast %918 : f32 to vector<16x16xf32>
    %920 = arith.mulf %919, %696 : vector<16x16xf32>
    %921 = arith.addf %917, %920 : vector<16x16xf32>
    %c38_296 = arith.constant 38 : index
    %922 = memref.load %arg4[%c38_296] : memref<144xf32, #tpu.memory_space<smem>>
    %923 = vector.broadcast %922 : f32 to vector<16x16xf32>
    %924 = arith.mulf %923, %698 : vector<16x16xf32>
    %925 = arith.addf %921, %924 : vector<16x16xf32>
    %c39_297 = arith.constant 39 : index
    %926 = memref.load %arg4[%c39_297] : memref<144xf32, #tpu.memory_space<smem>>
    %927 = vector.broadcast %926 : f32 to vector<16x16xf32>
    %928 = arith.mulf %927, %700 : vector<16x16xf32>
    %929 = arith.addf %925, %928 : vector<16x16xf32>
    %c40_298 = arith.constant 40 : index
    %930 = memref.load %arg4[%c40_298] : memref<144xf32, #tpu.memory_space<smem>>
    %931 = vector.broadcast %930 : f32 to vector<16x16xf32>
    %932 = arith.mulf %931, %702 : vector<16x16xf32>
    %933 = arith.addf %929, %932 : vector<16x16xf32>
    %c41_299 = arith.constant 41 : index
    %934 = memref.load %arg4[%c41_299] : memref<144xf32, #tpu.memory_space<smem>>
    %935 = vector.broadcast %934 : f32 to vector<16x16xf32>
    %936 = arith.mulf %935, %704 : vector<16x16xf32>
    %937 = arith.addf %933, %936 : vector<16x16xf32>
    %c42_300 = arith.constant 42 : index
    %938 = memref.load %arg4[%c42_300] : memref<144xf32, #tpu.memory_space<smem>>
    %939 = vector.broadcast %938 : f32 to vector<16x16xf32>
    %940 = arith.mulf %939, %706 : vector<16x16xf32>
    %941 = arith.addf %937, %940 : vector<16x16xf32>
    %c43_301 = arith.constant 43 : index
    %942 = memref.load %arg4[%c43_301] : memref<144xf32, #tpu.memory_space<smem>>
    %943 = vector.broadcast %942 : f32 to vector<16x16xf32>
    %944 = arith.mulf %943, %708 : vector<16x16xf32>
    %945 = arith.addf %941, %944 : vector<16x16xf32>
    %c44_302 = arith.constant 44 : index
    %946 = memref.load %arg4[%c44_302] : memref<144xf32, #tpu.memory_space<smem>>
    %947 = vector.broadcast %946 : f32 to vector<16x16xf32>
    %948 = arith.mulf %947, %710 : vector<16x16xf32>
    %949 = arith.addf %945, %948 : vector<16x16xf32>
    %c45_303 = arith.constant 45 : index
    %950 = memref.load %arg4[%c45_303] : memref<144xf32, #tpu.memory_space<smem>>
    %951 = vector.broadcast %950 : f32 to vector<16x16xf32>
    %952 = arith.mulf %951, %712 : vector<16x16xf32>
    %953 = arith.addf %949, %952 : vector<16x16xf32>
    %c46_304 = arith.constant 46 : index
    %954 = memref.load %arg4[%c46_304] : memref<144xf32, #tpu.memory_space<smem>>
    %955 = vector.broadcast %954 : f32 to vector<16x16xf32>
    %956 = arith.mulf %955, %714 : vector<16x16xf32>
    %957 = arith.addf %953, %956 : vector<16x16xf32>
    %c47_305 = arith.constant 47 : index
    %958 = memref.load %arg4[%c47_305] : memref<144xf32, #tpu.memory_space<smem>>
    %959 = vector.broadcast %958 : f32 to vector<16x16xf32>
    %960 = arith.mulf %959, %716 : vector<16x16xf32>
    %961 = arith.addf %957, %960 : vector<16x16xf32>
    %c48_306 = arith.constant 48 : index
    %962 = memref.load %arg4[%c48_306] : memref<144xf32, #tpu.memory_space<smem>>
    %963 = vector.broadcast %962 : f32 to vector<16x16xf32>
    %964 = arith.mulf %963, %718 : vector<16x16xf32>
    %965 = arith.addf %961, %964 : vector<16x16xf32>
    %c49_307 = arith.constant 49 : index
    %966 = memref.load %arg4[%c49_307] : memref<144xf32, #tpu.memory_space<smem>>
    %967 = vector.broadcast %966 : f32 to vector<16x16xf32>
    %968 = arith.mulf %967, %720 : vector<16x16xf32>
    %969 = arith.addf %965, %968 : vector<16x16xf32>
    %c50_308 = arith.constant 50 : index
    %970 = memref.load %arg4[%c50_308] : memref<144xf32, #tpu.memory_space<smem>>
    %971 = vector.broadcast %970 : f32 to vector<16x16xf32>
    %972 = arith.mulf %971, %722 : vector<16x16xf32>
    %973 = arith.addf %969, %972 : vector<16x16xf32>
    %c51_309 = arith.constant 51 : index
    %974 = memref.load %arg4[%c51_309] : memref<144xf32, #tpu.memory_space<smem>>
    %975 = vector.broadcast %974 : f32 to vector<16x16xf32>
    %976 = arith.mulf %975, %724 : vector<16x16xf32>
    %977 = arith.addf %973, %976 : vector<16x16xf32>
    %c52_310 = arith.constant 52 : index
    %978 = memref.load %arg4[%c52_310] : memref<144xf32, #tpu.memory_space<smem>>
    %979 = vector.broadcast %978 : f32 to vector<16x16xf32>
    %980 = arith.mulf %979, %726 : vector<16x16xf32>
    %981 = arith.addf %977, %980 : vector<16x16xf32>
    %c53_311 = arith.constant 53 : index
    %982 = memref.load %arg4[%c53_311] : memref<144xf32, #tpu.memory_space<smem>>
    %983 = vector.broadcast %982 : f32 to vector<16x16xf32>
    %984 = arith.mulf %983, %728 : vector<16x16xf32>
    %985 = arith.addf %981, %984 : vector<16x16xf32>
    %c54_312 = arith.constant 54 : index
    %986 = memref.load %arg4[%c54_312] : memref<144xf32, #tpu.memory_space<smem>>
    %987 = vector.broadcast %986 : f32 to vector<16x16xf32>
    %988 = arith.mulf %987, %730 : vector<16x16xf32>
    %989 = arith.addf %985, %988 : vector<16x16xf32>
    %c55_313 = arith.constant 55 : index
    %990 = memref.load %arg4[%c55_313] : memref<144xf32, #tpu.memory_space<smem>>
    %991 = vector.broadcast %990 : f32 to vector<16x16xf32>
    %992 = arith.mulf %991, %732 : vector<16x16xf32>
    %993 = arith.addf %989, %992 : vector<16x16xf32>
    %c56_314 = arith.constant 56 : index
    %994 = memref.load %arg4[%c56_314] : memref<144xf32, #tpu.memory_space<smem>>
    %995 = vector.broadcast %994 : f32 to vector<16x16xf32>
    %996 = arith.mulf %995, %734 : vector<16x16xf32>
    %997 = arith.addf %993, %996 : vector<16x16xf32>
    %c57_315 = arith.constant 57 : index
    %998 = memref.load %arg4[%c57_315] : memref<144xf32, #tpu.memory_space<smem>>
    %999 = vector.broadcast %998 : f32 to vector<16x16xf32>
    %1000 = arith.mulf %999, %736 : vector<16x16xf32>
    %1001 = arith.addf %997, %1000 : vector<16x16xf32>
    %c58_316 = arith.constant 58 : index
    %1002 = memref.load %arg4[%c58_316] : memref<144xf32, #tpu.memory_space<smem>>
    %1003 = vector.broadcast %1002 : f32 to vector<16x16xf32>
    %1004 = arith.mulf %1003, %738 : vector<16x16xf32>
    %1005 = arith.addf %1001, %1004 : vector<16x16xf32>
    %c59_317 = arith.constant 59 : index
    %1006 = memref.load %arg4[%c59_317] : memref<144xf32, #tpu.memory_space<smem>>
    %1007 = vector.broadcast %1006 : f32 to vector<16x16xf32>
    %1008 = arith.mulf %1007, %740 : vector<16x16xf32>
    %1009 = arith.addf %1005, %1008 : vector<16x16xf32>
    %c60_318 = arith.constant 60 : index
    %1010 = memref.load %arg4[%c60_318] : memref<144xf32, #tpu.memory_space<smem>>
    %1011 = vector.broadcast %1010 : f32 to vector<16x16xf32>
    %1012 = arith.mulf %1011, %742 : vector<16x16xf32>
    %1013 = arith.addf %1009, %1012 : vector<16x16xf32>
    %c61_319 = arith.constant 61 : index
    %1014 = memref.load %arg4[%c61_319] : memref<144xf32, #tpu.memory_space<smem>>
    %1015 = vector.broadcast %1014 : f32 to vector<16x16xf32>
    %1016 = arith.mulf %1015, %744 : vector<16x16xf32>
    %1017 = arith.addf %1013, %1016 : vector<16x16xf32>
    %c62_320 = arith.constant 62 : index
    %1018 = memref.load %arg4[%c62_320] : memref<144xf32, #tpu.memory_space<smem>>
    %1019 = vector.broadcast %1018 : f32 to vector<16x16xf32>
    %1020 = arith.mulf %1019, %746 : vector<16x16xf32>
    %1021 = arith.addf %1017, %1020 : vector<16x16xf32>
    %c63_321 = arith.constant 63 : index
    %1022 = memref.load %arg4[%c63_321] : memref<144xf32, #tpu.memory_space<smem>>
    %1023 = vector.broadcast %1022 : f32 to vector<16x16xf32>
    %1024 = arith.mulf %1023, %748 : vector<16x16xf32>
    %1025 = arith.addf %1021, %1024 : vector<16x16xf32>
    %c64_322 = arith.constant 64 : index
    %1026 = memref.load %arg4[%c64_322] : memref<144xf32, #tpu.memory_space<smem>>
    %1027 = vector.broadcast %1026 : f32 to vector<16x16xf32>
    %1028 = arith.mulf %1027, %750 : vector<16x16xf32>
    %1029 = arith.addf %1025, %1028 : vector<16x16xf32>
    %c65_323 = arith.constant 65 : index
    %1030 = memref.load %arg4[%c65_323] : memref<144xf32, #tpu.memory_space<smem>>
    %1031 = vector.broadcast %1030 : f32 to vector<16x16xf32>
    %1032 = arith.mulf %1031, %752 : vector<16x16xf32>
    %1033 = arith.addf %1029, %1032 : vector<16x16xf32>
    %c66_324 = arith.constant 66 : index
    %1034 = memref.load %arg4[%c66_324] : memref<144xf32, #tpu.memory_space<smem>>
    %1035 = vector.broadcast %1034 : f32 to vector<16x16xf32>
    %1036 = arith.mulf %1035, %754 : vector<16x16xf32>
    %1037 = arith.addf %1033, %1036 : vector<16x16xf32>
    %c67_325 = arith.constant 67 : index
    %1038 = memref.load %arg4[%c67_325] : memref<144xf32, #tpu.memory_space<smem>>
    %1039 = vector.broadcast %1038 : f32 to vector<16x16xf32>
    %1040 = arith.mulf %1039, %756 : vector<16x16xf32>
    %1041 = arith.addf %1037, %1040 : vector<16x16xf32>
    %c68_326 = arith.constant 68 : index
    %1042 = memref.load %arg4[%c68_326] : memref<144xf32, #tpu.memory_space<smem>>
    %1043 = vector.broadcast %1042 : f32 to vector<16x16xf32>
    %1044 = arith.mulf %1043, %758 : vector<16x16xf32>
    %1045 = arith.addf %1041, %1044 : vector<16x16xf32>
    %c69_327 = arith.constant 69 : index
    %1046 = memref.load %arg4[%c69_327] : memref<144xf32, #tpu.memory_space<smem>>
    %1047 = vector.broadcast %1046 : f32 to vector<16x16xf32>
    %1048 = arith.mulf %1047, %760 : vector<16x16xf32>
    %1049 = arith.addf %1045, %1048 : vector<16x16xf32>
    %c70_328 = arith.constant 70 : index
    %1050 = memref.load %arg4[%c70_328] : memref<144xf32, #tpu.memory_space<smem>>
    %1051 = vector.broadcast %1050 : f32 to vector<16x16xf32>
    %1052 = arith.mulf %1051, %762 : vector<16x16xf32>
    %1053 = arith.addf %1049, %1052 : vector<16x16xf32>
    %c71_329 = arith.constant 71 : index
    %1054 = memref.load %arg4[%c71_329] : memref<144xf32, #tpu.memory_space<smem>>
    %1055 = vector.broadcast %1054 : f32 to vector<16x16xf32>
    %1056 = arith.mulf %1055, %764 : vector<16x16xf32>
    %1057 = arith.addf %1053, %1056 : vector<16x16xf32>
    %c1_330 = arith.constant 1 : index
    %1058 = memref.load %arg5[%c1_330] : memref<4xf32, #tpu.memory_space<smem>>
    %1059 = vector.broadcast %1058 : f32 to vector<16x16xf32>
    %1060 = arith.addf %1057, %1059 : vector<16x16xf32>
    %cst_331 = arith.constant 0.000000e+00 : f32
    %1061 = vector.broadcast %cst_331 : f32 to vector<16x16xf32>
    %c72_332 = arith.constant 72 : index
    %1062 = memref.load %arg4[%c72_332] : memref<144xf32, #tpu.memory_space<smem>>
    %1063 = vector.broadcast %1062 : f32 to vector<16x16xf32>
    %1064 = arith.mulf %1063, %694 : vector<16x16xf32>
    %1065 = arith.addf %1061, %1064 : vector<16x16xf32>
    %c73_333 = arith.constant 73 : index
    %1066 = memref.load %arg4[%c73_333] : memref<144xf32, #tpu.memory_space<smem>>
    %1067 = vector.broadcast %1066 : f32 to vector<16x16xf32>
    %1068 = arith.mulf %1067, %696 : vector<16x16xf32>
    %1069 = arith.addf %1065, %1068 : vector<16x16xf32>
    %c74_334 = arith.constant 74 : index
    %1070 = memref.load %arg4[%c74_334] : memref<144xf32, #tpu.memory_space<smem>>
    %1071 = vector.broadcast %1070 : f32 to vector<16x16xf32>
    %1072 = arith.mulf %1071, %698 : vector<16x16xf32>
    %1073 = arith.addf %1069, %1072 : vector<16x16xf32>
    %c75_335 = arith.constant 75 : index
    %1074 = memref.load %arg4[%c75_335] : memref<144xf32, #tpu.memory_space<smem>>
    %1075 = vector.broadcast %1074 : f32 to vector<16x16xf32>
    %1076 = arith.mulf %1075, %700 : vector<16x16xf32>
    %1077 = arith.addf %1073, %1076 : vector<16x16xf32>
    %c76_336 = arith.constant 76 : index
    %1078 = memref.load %arg4[%c76_336] : memref<144xf32, #tpu.memory_space<smem>>
    %1079 = vector.broadcast %1078 : f32 to vector<16x16xf32>
    %1080 = arith.mulf %1079, %702 : vector<16x16xf32>
    %1081 = arith.addf %1077, %1080 : vector<16x16xf32>
    %c77_337 = arith.constant 77 : index
    %1082 = memref.load %arg4[%c77_337] : memref<144xf32, #tpu.memory_space<smem>>
    %1083 = vector.broadcast %1082 : f32 to vector<16x16xf32>
    %1084 = arith.mulf %1083, %704 : vector<16x16xf32>
    %1085 = arith.addf %1081, %1084 : vector<16x16xf32>
    %c78_338 = arith.constant 78 : index
    %1086 = memref.load %arg4[%c78_338] : memref<144xf32, #tpu.memory_space<smem>>
    %1087 = vector.broadcast %1086 : f32 to vector<16x16xf32>
    %1088 = arith.mulf %1087, %706 : vector<16x16xf32>
    %1089 = arith.addf %1085, %1088 : vector<16x16xf32>
    %c79_339 = arith.constant 79 : index
    %1090 = memref.load %arg4[%c79_339] : memref<144xf32, #tpu.memory_space<smem>>
    %1091 = vector.broadcast %1090 : f32 to vector<16x16xf32>
    %1092 = arith.mulf %1091, %708 : vector<16x16xf32>
    %1093 = arith.addf %1089, %1092 : vector<16x16xf32>
    %c80_340 = arith.constant 80 : index
    %1094 = memref.load %arg4[%c80_340] : memref<144xf32, #tpu.memory_space<smem>>
    %1095 = vector.broadcast %1094 : f32 to vector<16x16xf32>
    %1096 = arith.mulf %1095, %710 : vector<16x16xf32>
    %1097 = arith.addf %1093, %1096 : vector<16x16xf32>
    %c81_341 = arith.constant 81 : index
    %1098 = memref.load %arg4[%c81_341] : memref<144xf32, #tpu.memory_space<smem>>
    %1099 = vector.broadcast %1098 : f32 to vector<16x16xf32>
    %1100 = arith.mulf %1099, %712 : vector<16x16xf32>
    %1101 = arith.addf %1097, %1100 : vector<16x16xf32>
    %c82_342 = arith.constant 82 : index
    %1102 = memref.load %arg4[%c82_342] : memref<144xf32, #tpu.memory_space<smem>>
    %1103 = vector.broadcast %1102 : f32 to vector<16x16xf32>
    %1104 = arith.mulf %1103, %714 : vector<16x16xf32>
    %1105 = arith.addf %1101, %1104 : vector<16x16xf32>
    %c83_343 = arith.constant 83 : index
    %1106 = memref.load %arg4[%c83_343] : memref<144xf32, #tpu.memory_space<smem>>
    %1107 = vector.broadcast %1106 : f32 to vector<16x16xf32>
    %1108 = arith.mulf %1107, %716 : vector<16x16xf32>
    %1109 = arith.addf %1105, %1108 : vector<16x16xf32>
    %c84_344 = arith.constant 84 : index
    %1110 = memref.load %arg4[%c84_344] : memref<144xf32, #tpu.memory_space<smem>>
    %1111 = vector.broadcast %1110 : f32 to vector<16x16xf32>
    %1112 = arith.mulf %1111, %718 : vector<16x16xf32>
    %1113 = arith.addf %1109, %1112 : vector<16x16xf32>
    %c85_345 = arith.constant 85 : index
    %1114 = memref.load %arg4[%c85_345] : memref<144xf32, #tpu.memory_space<smem>>
    %1115 = vector.broadcast %1114 : f32 to vector<16x16xf32>
    %1116 = arith.mulf %1115, %720 : vector<16x16xf32>
    %1117 = arith.addf %1113, %1116 : vector<16x16xf32>
    %c86_346 = arith.constant 86 : index
    %1118 = memref.load %arg4[%c86_346] : memref<144xf32, #tpu.memory_space<smem>>
    %1119 = vector.broadcast %1118 : f32 to vector<16x16xf32>
    %1120 = arith.mulf %1119, %722 : vector<16x16xf32>
    %1121 = arith.addf %1117, %1120 : vector<16x16xf32>
    %c87_347 = arith.constant 87 : index
    %1122 = memref.load %arg4[%c87_347] : memref<144xf32, #tpu.memory_space<smem>>
    %1123 = vector.broadcast %1122 : f32 to vector<16x16xf32>
    %1124 = arith.mulf %1123, %724 : vector<16x16xf32>
    %1125 = arith.addf %1121, %1124 : vector<16x16xf32>
    %c88_348 = arith.constant 88 : index
    %1126 = memref.load %arg4[%c88_348] : memref<144xf32, #tpu.memory_space<smem>>
    %1127 = vector.broadcast %1126 : f32 to vector<16x16xf32>
    %1128 = arith.mulf %1127, %726 : vector<16x16xf32>
    %1129 = arith.addf %1125, %1128 : vector<16x16xf32>
    %c89_349 = arith.constant 89 : index
    %1130 = memref.load %arg4[%c89_349] : memref<144xf32, #tpu.memory_space<smem>>
    %1131 = vector.broadcast %1130 : f32 to vector<16x16xf32>
    %1132 = arith.mulf %1131, %728 : vector<16x16xf32>
    %1133 = arith.addf %1129, %1132 : vector<16x16xf32>
    %c90_350 = arith.constant 90 : index
    %1134 = memref.load %arg4[%c90_350] : memref<144xf32, #tpu.memory_space<smem>>
    %1135 = vector.broadcast %1134 : f32 to vector<16x16xf32>
    %1136 = arith.mulf %1135, %730 : vector<16x16xf32>
    %1137 = arith.addf %1133, %1136 : vector<16x16xf32>
    %c91_351 = arith.constant 91 : index
    %1138 = memref.load %arg4[%c91_351] : memref<144xf32, #tpu.memory_space<smem>>
    %1139 = vector.broadcast %1138 : f32 to vector<16x16xf32>
    %1140 = arith.mulf %1139, %732 : vector<16x16xf32>
    %1141 = arith.addf %1137, %1140 : vector<16x16xf32>
    %c92_352 = arith.constant 92 : index
    %1142 = memref.load %arg4[%c92_352] : memref<144xf32, #tpu.memory_space<smem>>
    %1143 = vector.broadcast %1142 : f32 to vector<16x16xf32>
    %1144 = arith.mulf %1143, %734 : vector<16x16xf32>
    %1145 = arith.addf %1141, %1144 : vector<16x16xf32>
    %c93_353 = arith.constant 93 : index
    %1146 = memref.load %arg4[%c93_353] : memref<144xf32, #tpu.memory_space<smem>>
    %1147 = vector.broadcast %1146 : f32 to vector<16x16xf32>
    %1148 = arith.mulf %1147, %736 : vector<16x16xf32>
    %1149 = arith.addf %1145, %1148 : vector<16x16xf32>
    %c94_354 = arith.constant 94 : index
    %1150 = memref.load %arg4[%c94_354] : memref<144xf32, #tpu.memory_space<smem>>
    %1151 = vector.broadcast %1150 : f32 to vector<16x16xf32>
    %1152 = arith.mulf %1151, %738 : vector<16x16xf32>
    %1153 = arith.addf %1149, %1152 : vector<16x16xf32>
    %c95_355 = arith.constant 95 : index
    %1154 = memref.load %arg4[%c95_355] : memref<144xf32, #tpu.memory_space<smem>>
    %1155 = vector.broadcast %1154 : f32 to vector<16x16xf32>
    %1156 = arith.mulf %1155, %740 : vector<16x16xf32>
    %1157 = arith.addf %1153, %1156 : vector<16x16xf32>
    %c96_356 = arith.constant 96 : index
    %1158 = memref.load %arg4[%c96_356] : memref<144xf32, #tpu.memory_space<smem>>
    %1159 = vector.broadcast %1158 : f32 to vector<16x16xf32>
    %1160 = arith.mulf %1159, %742 : vector<16x16xf32>
    %1161 = arith.addf %1157, %1160 : vector<16x16xf32>
    %c97_357 = arith.constant 97 : index
    %1162 = memref.load %arg4[%c97_357] : memref<144xf32, #tpu.memory_space<smem>>
    %1163 = vector.broadcast %1162 : f32 to vector<16x16xf32>
    %1164 = arith.mulf %1163, %744 : vector<16x16xf32>
    %1165 = arith.addf %1161, %1164 : vector<16x16xf32>
    %c98_358 = arith.constant 98 : index
    %1166 = memref.load %arg4[%c98_358] : memref<144xf32, #tpu.memory_space<smem>>
    %1167 = vector.broadcast %1166 : f32 to vector<16x16xf32>
    %1168 = arith.mulf %1167, %746 : vector<16x16xf32>
    %1169 = arith.addf %1165, %1168 : vector<16x16xf32>
    %c99_359 = arith.constant 99 : index
    %1170 = memref.load %arg4[%c99_359] : memref<144xf32, #tpu.memory_space<smem>>
    %1171 = vector.broadcast %1170 : f32 to vector<16x16xf32>
    %1172 = arith.mulf %1171, %748 : vector<16x16xf32>
    %1173 = arith.addf %1169, %1172 : vector<16x16xf32>
    %c100_360 = arith.constant 100 : index
    %1174 = memref.load %arg4[%c100_360] : memref<144xf32, #tpu.memory_space<smem>>
    %1175 = vector.broadcast %1174 : f32 to vector<16x16xf32>
    %1176 = arith.mulf %1175, %750 : vector<16x16xf32>
    %1177 = arith.addf %1173, %1176 : vector<16x16xf32>
    %c101_361 = arith.constant 101 : index
    %1178 = memref.load %arg4[%c101_361] : memref<144xf32, #tpu.memory_space<smem>>
    %1179 = vector.broadcast %1178 : f32 to vector<16x16xf32>
    %1180 = arith.mulf %1179, %752 : vector<16x16xf32>
    %1181 = arith.addf %1177, %1180 : vector<16x16xf32>
    %c102_362 = arith.constant 102 : index
    %1182 = memref.load %arg4[%c102_362] : memref<144xf32, #tpu.memory_space<smem>>
    %1183 = vector.broadcast %1182 : f32 to vector<16x16xf32>
    %1184 = arith.mulf %1183, %754 : vector<16x16xf32>
    %1185 = arith.addf %1181, %1184 : vector<16x16xf32>
    %c103_363 = arith.constant 103 : index
    %1186 = memref.load %arg4[%c103_363] : memref<144xf32, #tpu.memory_space<smem>>
    %1187 = vector.broadcast %1186 : f32 to vector<16x16xf32>
    %1188 = arith.mulf %1187, %756 : vector<16x16xf32>
    %1189 = arith.addf %1185, %1188 : vector<16x16xf32>
    %c104_364 = arith.constant 104 : index
    %1190 = memref.load %arg4[%c104_364] : memref<144xf32, #tpu.memory_space<smem>>
    %1191 = vector.broadcast %1190 : f32 to vector<16x16xf32>
    %1192 = arith.mulf %1191, %758 : vector<16x16xf32>
    %1193 = arith.addf %1189, %1192 : vector<16x16xf32>
    %c105_365 = arith.constant 105 : index
    %1194 = memref.load %arg4[%c105_365] : memref<144xf32, #tpu.memory_space<smem>>
    %1195 = vector.broadcast %1194 : f32 to vector<16x16xf32>
    %1196 = arith.mulf %1195, %760 : vector<16x16xf32>
    %1197 = arith.addf %1193, %1196 : vector<16x16xf32>
    %c106_366 = arith.constant 106 : index
    %1198 = memref.load %arg4[%c106_366] : memref<144xf32, #tpu.memory_space<smem>>
    %1199 = vector.broadcast %1198 : f32 to vector<16x16xf32>
    %1200 = arith.mulf %1199, %762 : vector<16x16xf32>
    %1201 = arith.addf %1197, %1200 : vector<16x16xf32>
    %c107_367 = arith.constant 107 : index
    %1202 = memref.load %arg4[%c107_367] : memref<144xf32, #tpu.memory_space<smem>>
    %1203 = vector.broadcast %1202 : f32 to vector<16x16xf32>
    %1204 = arith.mulf %1203, %764 : vector<16x16xf32>
    %1205 = arith.addf %1201, %1204 : vector<16x16xf32>
    %c2_368 = arith.constant 2 : index
    %1206 = memref.load %arg5[%c2_368] : memref<4xf32, #tpu.memory_space<smem>>
    %1207 = vector.broadcast %1206 : f32 to vector<16x16xf32>
    %1208 = arith.addf %1205, %1207 : vector<16x16xf32>
    %cst_369 = arith.constant 0.000000e+00 : f32
    %1209 = vector.broadcast %cst_369 : f32 to vector<16x16xf32>
    %c108_370 = arith.constant 108 : index
    %1210 = memref.load %arg4[%c108_370] : memref<144xf32, #tpu.memory_space<smem>>
    %1211 = vector.broadcast %1210 : f32 to vector<16x16xf32>
    %1212 = arith.mulf %1211, %694 : vector<16x16xf32>
    %1213 = arith.addf %1209, %1212 : vector<16x16xf32>
    %c109_371 = arith.constant 109 : index
    %1214 = memref.load %arg4[%c109_371] : memref<144xf32, #tpu.memory_space<smem>>
    %1215 = vector.broadcast %1214 : f32 to vector<16x16xf32>
    %1216 = arith.mulf %1215, %696 : vector<16x16xf32>
    %1217 = arith.addf %1213, %1216 : vector<16x16xf32>
    %c110_372 = arith.constant 110 : index
    %1218 = memref.load %arg4[%c110_372] : memref<144xf32, #tpu.memory_space<smem>>
    %1219 = vector.broadcast %1218 : f32 to vector<16x16xf32>
    %1220 = arith.mulf %1219, %698 : vector<16x16xf32>
    %1221 = arith.addf %1217, %1220 : vector<16x16xf32>
    %c111_373 = arith.constant 111 : index
    %1222 = memref.load %arg4[%c111_373] : memref<144xf32, #tpu.memory_space<smem>>
    %1223 = vector.broadcast %1222 : f32 to vector<16x16xf32>
    %1224 = arith.mulf %1223, %700 : vector<16x16xf32>
    %1225 = arith.addf %1221, %1224 : vector<16x16xf32>
    %c112_374 = arith.constant 112 : index
    %1226 = memref.load %arg4[%c112_374] : memref<144xf32, #tpu.memory_space<smem>>
    %1227 = vector.broadcast %1226 : f32 to vector<16x16xf32>
    %1228 = arith.mulf %1227, %702 : vector<16x16xf32>
    %1229 = arith.addf %1225, %1228 : vector<16x16xf32>
    %c113_375 = arith.constant 113 : index
    %1230 = memref.load %arg4[%c113_375] : memref<144xf32, #tpu.memory_space<smem>>
    %1231 = vector.broadcast %1230 : f32 to vector<16x16xf32>
    %1232 = arith.mulf %1231, %704 : vector<16x16xf32>
    %1233 = arith.addf %1229, %1232 : vector<16x16xf32>
    %c114_376 = arith.constant 114 : index
    %1234 = memref.load %arg4[%c114_376] : memref<144xf32, #tpu.memory_space<smem>>
    %1235 = vector.broadcast %1234 : f32 to vector<16x16xf32>
    %1236 = arith.mulf %1235, %706 : vector<16x16xf32>
    %1237 = arith.addf %1233, %1236 : vector<16x16xf32>
    %c115_377 = arith.constant 115 : index
    %1238 = memref.load %arg4[%c115_377] : memref<144xf32, #tpu.memory_space<smem>>
    %1239 = vector.broadcast %1238 : f32 to vector<16x16xf32>
    %1240 = arith.mulf %1239, %708 : vector<16x16xf32>
    %1241 = arith.addf %1237, %1240 : vector<16x16xf32>
    %c116_378 = arith.constant 116 : index
    %1242 = memref.load %arg4[%c116_378] : memref<144xf32, #tpu.memory_space<smem>>
    %1243 = vector.broadcast %1242 : f32 to vector<16x16xf32>
    %1244 = arith.mulf %1243, %710 : vector<16x16xf32>
    %1245 = arith.addf %1241, %1244 : vector<16x16xf32>
    %c117_379 = arith.constant 117 : index
    %1246 = memref.load %arg4[%c117_379] : memref<144xf32, #tpu.memory_space<smem>>
    %1247 = vector.broadcast %1246 : f32 to vector<16x16xf32>
    %1248 = arith.mulf %1247, %712 : vector<16x16xf32>
    %1249 = arith.addf %1245, %1248 : vector<16x16xf32>
    %c118_380 = arith.constant 118 : index
    %1250 = memref.load %arg4[%c118_380] : memref<144xf32, #tpu.memory_space<smem>>
    %1251 = vector.broadcast %1250 : f32 to vector<16x16xf32>
    %1252 = arith.mulf %1251, %714 : vector<16x16xf32>
    %1253 = arith.addf %1249, %1252 : vector<16x16xf32>
    %c119_381 = arith.constant 119 : index
    %1254 = memref.load %arg4[%c119_381] : memref<144xf32, #tpu.memory_space<smem>>
    %1255 = vector.broadcast %1254 : f32 to vector<16x16xf32>
    %1256 = arith.mulf %1255, %716 : vector<16x16xf32>
    %1257 = arith.addf %1253, %1256 : vector<16x16xf32>
    %c120_382 = arith.constant 120 : index
    %1258 = memref.load %arg4[%c120_382] : memref<144xf32, #tpu.memory_space<smem>>
    %1259 = vector.broadcast %1258 : f32 to vector<16x16xf32>
    %1260 = arith.mulf %1259, %718 : vector<16x16xf32>
    %1261 = arith.addf %1257, %1260 : vector<16x16xf32>
    %c121_383 = arith.constant 121 : index
    %1262 = memref.load %arg4[%c121_383] : memref<144xf32, #tpu.memory_space<smem>>
    %1263 = vector.broadcast %1262 : f32 to vector<16x16xf32>
    %1264 = arith.mulf %1263, %720 : vector<16x16xf32>
    %1265 = arith.addf %1261, %1264 : vector<16x16xf32>
    %c122_384 = arith.constant 122 : index
    %1266 = memref.load %arg4[%c122_384] : memref<144xf32, #tpu.memory_space<smem>>
    %1267 = vector.broadcast %1266 : f32 to vector<16x16xf32>
    %1268 = arith.mulf %1267, %722 : vector<16x16xf32>
    %1269 = arith.addf %1265, %1268 : vector<16x16xf32>
    %c123_385 = arith.constant 123 : index
    %1270 = memref.load %arg4[%c123_385] : memref<144xf32, #tpu.memory_space<smem>>
    %1271 = vector.broadcast %1270 : f32 to vector<16x16xf32>
    %1272 = arith.mulf %1271, %724 : vector<16x16xf32>
    %1273 = arith.addf %1269, %1272 : vector<16x16xf32>
    %c124_386 = arith.constant 124 : index
    %1274 = memref.load %arg4[%c124_386] : memref<144xf32, #tpu.memory_space<smem>>
    %1275 = vector.broadcast %1274 : f32 to vector<16x16xf32>
    %1276 = arith.mulf %1275, %726 : vector<16x16xf32>
    %1277 = arith.addf %1273, %1276 : vector<16x16xf32>
    %c125_387 = arith.constant 125 : index
    %1278 = memref.load %arg4[%c125_387] : memref<144xf32, #tpu.memory_space<smem>>
    %1279 = vector.broadcast %1278 : f32 to vector<16x16xf32>
    %1280 = arith.mulf %1279, %728 : vector<16x16xf32>
    %1281 = arith.addf %1277, %1280 : vector<16x16xf32>
    %c126_388 = arith.constant 126 : index
    %1282 = memref.load %arg4[%c126_388] : memref<144xf32, #tpu.memory_space<smem>>
    %1283 = vector.broadcast %1282 : f32 to vector<16x16xf32>
    %1284 = arith.mulf %1283, %730 : vector<16x16xf32>
    %1285 = arith.addf %1281, %1284 : vector<16x16xf32>
    %c127_389 = arith.constant 127 : index
    %1286 = memref.load %arg4[%c127_389] : memref<144xf32, #tpu.memory_space<smem>>
    %1287 = vector.broadcast %1286 : f32 to vector<16x16xf32>
    %1288 = arith.mulf %1287, %732 : vector<16x16xf32>
    %1289 = arith.addf %1285, %1288 : vector<16x16xf32>
    %c128_390 = arith.constant 128 : index
    %1290 = memref.load %arg4[%c128_390] : memref<144xf32, #tpu.memory_space<smem>>
    %1291 = vector.broadcast %1290 : f32 to vector<16x16xf32>
    %1292 = arith.mulf %1291, %734 : vector<16x16xf32>
    %1293 = arith.addf %1289, %1292 : vector<16x16xf32>
    %c129_391 = arith.constant 129 : index
    %1294 = memref.load %arg4[%c129_391] : memref<144xf32, #tpu.memory_space<smem>>
    %1295 = vector.broadcast %1294 : f32 to vector<16x16xf32>
    %1296 = arith.mulf %1295, %736 : vector<16x16xf32>
    %1297 = arith.addf %1293, %1296 : vector<16x16xf32>
    %c130_392 = arith.constant 130 : index
    %1298 = memref.load %arg4[%c130_392] : memref<144xf32, #tpu.memory_space<smem>>
    %1299 = vector.broadcast %1298 : f32 to vector<16x16xf32>
    %1300 = arith.mulf %1299, %738 : vector<16x16xf32>
    %1301 = arith.addf %1297, %1300 : vector<16x16xf32>
    %c131_393 = arith.constant 131 : index
    %1302 = memref.load %arg4[%c131_393] : memref<144xf32, #tpu.memory_space<smem>>
    %1303 = vector.broadcast %1302 : f32 to vector<16x16xf32>
    %1304 = arith.mulf %1303, %740 : vector<16x16xf32>
    %1305 = arith.addf %1301, %1304 : vector<16x16xf32>
    %c132_394 = arith.constant 132 : index
    %1306 = memref.load %arg4[%c132_394] : memref<144xf32, #tpu.memory_space<smem>>
    %1307 = vector.broadcast %1306 : f32 to vector<16x16xf32>
    %1308 = arith.mulf %1307, %742 : vector<16x16xf32>
    %1309 = arith.addf %1305, %1308 : vector<16x16xf32>
    %c133_395 = arith.constant 133 : index
    %1310 = memref.load %arg4[%c133_395] : memref<144xf32, #tpu.memory_space<smem>>
    %1311 = vector.broadcast %1310 : f32 to vector<16x16xf32>
    %1312 = arith.mulf %1311, %744 : vector<16x16xf32>
    %1313 = arith.addf %1309, %1312 : vector<16x16xf32>
    %c134_396 = arith.constant 134 : index
    %1314 = memref.load %arg4[%c134_396] : memref<144xf32, #tpu.memory_space<smem>>
    %1315 = vector.broadcast %1314 : f32 to vector<16x16xf32>
    %1316 = arith.mulf %1315, %746 : vector<16x16xf32>
    %1317 = arith.addf %1313, %1316 : vector<16x16xf32>
    %c135_397 = arith.constant 135 : index
    %1318 = memref.load %arg4[%c135_397] : memref<144xf32, #tpu.memory_space<smem>>
    %1319 = vector.broadcast %1318 : f32 to vector<16x16xf32>
    %1320 = arith.mulf %1319, %748 : vector<16x16xf32>
    %1321 = arith.addf %1317, %1320 : vector<16x16xf32>
    %c136_398 = arith.constant 136 : index
    %1322 = memref.load %arg4[%c136_398] : memref<144xf32, #tpu.memory_space<smem>>
    %1323 = vector.broadcast %1322 : f32 to vector<16x16xf32>
    %1324 = arith.mulf %1323, %750 : vector<16x16xf32>
    %1325 = arith.addf %1321, %1324 : vector<16x16xf32>
    %c137_399 = arith.constant 137 : index
    %1326 = memref.load %arg4[%c137_399] : memref<144xf32, #tpu.memory_space<smem>>
    %1327 = vector.broadcast %1326 : f32 to vector<16x16xf32>
    %1328 = arith.mulf %1327, %752 : vector<16x16xf32>
    %1329 = arith.addf %1325, %1328 : vector<16x16xf32>
    %c138_400 = arith.constant 138 : index
    %1330 = memref.load %arg4[%c138_400] : memref<144xf32, #tpu.memory_space<smem>>
    %1331 = vector.broadcast %1330 : f32 to vector<16x16xf32>
    %1332 = arith.mulf %1331, %754 : vector<16x16xf32>
    %1333 = arith.addf %1329, %1332 : vector<16x16xf32>
    %c139_401 = arith.constant 139 : index
    %1334 = memref.load %arg4[%c139_401] : memref<144xf32, #tpu.memory_space<smem>>
    %1335 = vector.broadcast %1334 : f32 to vector<16x16xf32>
    %1336 = arith.mulf %1335, %756 : vector<16x16xf32>
    %1337 = arith.addf %1333, %1336 : vector<16x16xf32>
    %c140_402 = arith.constant 140 : index
    %1338 = memref.load %arg4[%c140_402] : memref<144xf32, #tpu.memory_space<smem>>
    %1339 = vector.broadcast %1338 : f32 to vector<16x16xf32>
    %1340 = arith.mulf %1339, %758 : vector<16x16xf32>
    %1341 = arith.addf %1337, %1340 : vector<16x16xf32>
    %c141_403 = arith.constant 141 : index
    %1342 = memref.load %arg4[%c141_403] : memref<144xf32, #tpu.memory_space<smem>>
    %1343 = vector.broadcast %1342 : f32 to vector<16x16xf32>
    %1344 = arith.mulf %1343, %760 : vector<16x16xf32>
    %1345 = arith.addf %1341, %1344 : vector<16x16xf32>
    %c142_404 = arith.constant 142 : index
    %1346 = memref.load %arg4[%c142_404] : memref<144xf32, #tpu.memory_space<smem>>
    %1347 = vector.broadcast %1346 : f32 to vector<16x16xf32>
    %1348 = arith.mulf %1347, %762 : vector<16x16xf32>
    %1349 = arith.addf %1345, %1348 : vector<16x16xf32>
    %c143_405 = arith.constant 143 : index
    %1350 = memref.load %arg4[%c143_405] : memref<144xf32, #tpu.memory_space<smem>>
    %1351 = vector.broadcast %1350 : f32 to vector<16x16xf32>
    %1352 = arith.mulf %1351, %764 : vector<16x16xf32>
    %1353 = arith.addf %1349, %1352 : vector<16x16xf32>
    %c3_406 = arith.constant 3 : index
    %1354 = memref.load %arg5[%c3_406] : memref<4xf32, #tpu.memory_space<smem>>
    %1355 = vector.broadcast %1354 : f32 to vector<16x16xf32>
    %1356 = arith.addf %1353, %1355 : vector<16x16xf32>
    %c0_407 = arith.constant 0 : index
    %c0_408 = arith.constant 0 : index
    %c0_409 = arith.constant 0 : index
    %c0_410 = arith.constant 0 : index
    %1357 = vector.load %arg6[%c0_407, %c0_408, %c0_409, %c0_410] : memref<1x4x16x16xf32, #tpu.memory_space<vmem>>, vector<1x1x16x16xf32>
    %1358 = vector.shape_cast %1357 : vector<1x1x16x16xf32> to vector<16x16xf32>
    %1359 = vector.shape_cast %912 : vector<16x16xf32> to vector<1x1x16x16xf32>
    tpu.vector_store %arg6[%c0_407, %c0_408, %c0_409, %c0_410], %1359 {strides = array<i32>} : memref<1x4x16x16xf32, #tpu.memory_space<vmem>>, vector<1x1x16x16xf32>,
    %c0_411 = arith.constant 0 : index
    %c1_412 = arith.constant 1 : index
    %c0_413 = arith.constant 0 : index
    %c0_414 = arith.constant 0 : index
    %1360 = vector.load %arg6[%c0_411, %c1_412, %c0_413, %c0_414] : memref<1x4x16x16xf32, #tpu.memory_space<vmem>>, vector<1x1x16x16xf32>
    %1361 = vector.shape_cast %1360 : vector<1x1x16x16xf32> to vector<16x16xf32>
    %1362 = vector.shape_cast %1060 : vector<16x16xf32> to vector<1x1x16x16xf32>
    tpu.vector_store %arg6[%c0_411, %c1_412, %c0_413, %c0_414], %1362 {strides = array<i32>} : memref<1x4x16x16xf32, #tpu.memory_space<vmem>>, vector<1x1x16x16xf32>,
    %c0_415 = arith.constant 0 : index
    %c2_416 = arith.constant 2 : index
    %c0_417 = arith.constant 0 : index
    %c0_418 = arith.constant 0 : index
    %1363 = vector.load %arg6[%c0_415, %c2_416, %c0_417, %c0_418] : memref<1x4x16x16xf32, #tpu.memory_space<vmem>>, vector<1x1x16x16xf32>
    %1364 = vector.shape_cast %1363 : vector<1x1x16x16xf32> to vector<16x16xf32>
    %1365 = vector.shape_cast %1208 : vector<16x16xf32> to vector<1x1x16x16xf32>
    tpu.vector_store %arg6[%c0_415, %c2_416, %c0_417, %c0_418], %1365 {strides = array<i32>} : memref<1x4x16x16xf32, #tpu.memory_space<vmem>>, vector<1x1x16x16xf32>,
    %c0_419 = arith.constant 0 : index
    %c3_420 = arith.constant 3 : index
    %c0_421 = arith.constant 0 : index
    %c0_422 = arith.constant 0 : index
    %1366 = vector.load %arg6[%c0_419, %c3_420, %c0_421, %c0_422] : memref<1x4x16x16xf32, #tpu.memory_space<vmem>>, vector<1x1x16x16xf32>
    %1367 = vector.shape_cast %1366 : vector<1x1x16x16xf32> to vector<16x16xf32>
    %1368 = vector.shape_cast %1356 : vector<16x16xf32> to vector<1x1x16x16xf32>
    tpu.vector_store %arg6[%c0_419, %c3_420, %c0_421, %c0_422], %1368 {strides = array<i32>} : memref<1x4x16x16xf32, #tpu.memory_space<vmem>>, vector<1x1x16x16xf32>,
    return
  }
  func.func @transform_0(%arg0: i32) -> (i32, i32, i32, i32) {
    %c0_i32 = arith.constant 0 : i32
    %c0_i32_0 = arith.constant 0 : i32
    %c0_i32_1 = arith.constant 0 : i32
    %c0_i32_2 = arith.constant 0 : i32
    return %arg0, %c0_i32, %c0_i32_0, %c0_i32_1 : i32, i32, i32, i32
  }
  func.func @transform_1(%arg0: i32) -> i32 {
    %c0_i32 = arith.constant 0 : i32
    %c0_i32_0 = arith.constant 0 : i32
    return %c0_i32 : i32
  }
  func.func @transform_2(%arg0: i32) -> i32 {
    %c0_i32 = arith.constant 0 : i32
    %c0_i32_0 = arith.constant 0 : i32
    return %c0_i32 : i32
  }
  func.func @transform_3(%arg0: i32) -> i32 {
    %c0_i32 = arith.constant 0 : i32
    %c0_i32_0 = arith.constant 0 : i32
    return %c0_i32 : i32
  }
  func.func @transform_4(%arg0: i32) -> i32 {
    %c0_i32 = arith.constant 0 : i32
    %c0_i32_0 = arith.constant 0 : i32
    return %c0_i32 : i32
  }
  func.func @transform_5(%arg0: i32) -> (i32, i32, i32, i32) {
    %c0_i32 = arith.constant 0 : i32
    %c0_i32_0 = arith.constant 0 : i32
    %c0_i32_1 = arith.constant 0 : i32
    %c0_i32_2 = arith.constant 0 : i32
    return %arg0, %c0_i32, %c0_i32_0, %c0_i32_1 : i32, i32, i32, i32
  }
}

</mosaic_0001>

<llo_original>
// kernel: tpu_custom_call.1
$region0: #{tpu_custom_call.1}
  #allocation0 [shape = 'u32[]', space=smem, size = 0x4, offset = 0x4, fixed_abs, tag = 'smem constant byte address 0x4 - core index']
  #allocation1 [shape = 'u32[144,128]{1,0:T(1,128)}', space=vmem, size = 0x12000, scoped, tag = 'internal scratch']
  #allocation2 [shape = 'f32[4,18,18]{2,1,0:T(8,128)}', space=vmem, size = 0xc000, scoped, tag = 'scratch operand']
  #allocation3 [shape = 'f32[4,18,18]{2,1,0:T(8,128)}', space=vmem, size = 0xc000, scoped, tag = 'scratch operand']
  %s0 = inlined_call_operand.hbm [shape: f32[2,4,16,16], index: 0, kind: input, shape index: {}]
  %s1 = inlined_call_operand.hbm [shape: f32[144], index: 1, kind: input, shape index: {}]
  %s2 = inlined_call_operand.vmem [shape: f32[4], index: 2, kind: input, shape index: {}]
  %s3 = inlined_call_operand.vmem [shape: f32[144], index: 3, kind: input, shape index: {}]
  %s4 = inlined_call_operand.vmem [shape: f32[4], index: 4, kind: input, shape index: {}]
  %s5 = inlined_call_operand.hbm [shape: f32[2,4,16,16], index: 5, kind: output, shape index: {}]
  %s6 = sld [smem:[#allocation0]]
  $region73: #{tpu_custom_call.1} parent=0
    _
  %s8 = ssub.s32 1, %s6
  %s9 = scalar_select 0, %s8, %s6
  $region1: #{tpu_custom_call.1} parent=0
    #allocation4 [shape = 'u8[65536]{0}', space=vmem, size = 0x10000, scoped, tag = 'input window, operand 0']
    #allocation5 [shape = 's32[2]{0}', space=sflag, size = 0x8, scoped, tag = 'scoped memory for tpu_custom_call.1']
    #allocation6 [shape = 's32[2]{0}', space=sflag, size = 0x8, scoped, tag = 'scoped memory for tpu_custom_call.1']
    #allocation7 [shape = 's32[2]{0}', space=sflag, size = 0x8, scoped, tag = 'scoped memory for tpu_custom_call.1']
    #allocation8 [shape = 's32[2]{0}', space=sflag, size = 0x8, scoped, tag = 'scoped memory for tpu_custom_call.1']
    #allocation9 [shape = 'u8[1024]{0}', space=smem, size = 0x400, scoped, tag = 'input window, operand 1, single buffered']
    #allocation10 [shape = 'u8[512]{0}', space=smem, size = 0x200, scoped, tag = 'input window, operand 2, single buffered']
    #allocation11 [shape = 'u8[1024]{0}', space=smem, size = 0x400, scoped, tag = 'input window, operand 3, single buffered']
    #allocation12 [shape = 's32[1]{0}', space=sflag, size = 0x4, scoped, tag = 'scoped memory for tpu_custom_call.1']
    #allocation13 [shape = 'u8[512]{0}', space=smem, size = 0x200, scoped, tag = 'input window, operand 4, single buffered']
    #allocation14 [shape = 'u8[65536]{0}', space=vmem, size = 0x10000, scoped, tag = 'output window, operand 0']
    %10 = vsyncpa [#allocation5], 0
    %s11 = scalar_lea.sflag [#allocation5], 1
    %12 = vsyncpa %s11, 0
    %13 = vsyncpa [#allocation7], 0
    %14 = vsyncpa [#allocation8], 0
    %15 = vsyncpa [#allocation12], 0
    %16 = vsyncpa [#allocation6], 0
    %s17 = scalar_lea.sflag [#allocation6], 1
    %18 = vsyncpa %s17, 0
    loop: start=0, step=1, limit=4
    $region2: #{tpu_custom_call.1} parent=1 // loop_pre_header
      _
    $region3: #{tpu_custom_call.1} parent=1 // loop_header
      %s20 = sphi 0, %s24
      %p21 = scmp.ge.s32.totalorder %s20, 4
      %s30 = sphi 0, %s32
      %s33 = sphi 0, %s30
      %s34 = sphi 0, %s33
      %s50 = sphi 0, %s34
      %s54 = sphi 0, %s54
      %s56 = sphi 0, %s54
      %s57 = sphi 0, %s56
      %s71 = sphi 0, %s57
      %s75 = sphi 0, %s75
      %s77 = sphi 0, %s75
      %s78 = sphi 0, %s77
      %s92 = sphi 0, %s78
      %s96 = sphi 0, %s96
      %s98 = sphi 0, %s96
      %s99 = sphi 0, %s98
      %s113 = sphi 0, %s99
      %s117 = sphi 0, %s117
      %s119 = sphi 0, %s117
      %s120 = sphi 0, %s119
      %s134 = sphi 0, %s120
      %s140 = sphi 0, %s142
      %s143 = sphi 0, %s140
      %s144 = sphi 0, %s143
      %s160 = sphi 0, %s144
    $region4: #{tpu_custom_call.1} parent=1 // loop_header_branch
      %23 = sbr.rel (%p21) target = $region8
    $region5: #{tpu_custom_call.1} parent=1 // loop_body
      %s25 = ssub.s32 %s20, 1
      %s26 = ssub.s32 %s20, 2
      %s27 = sadd.s32 %s20, 1
      %s28 = ssub.s32 %s20, %s27
      %p29 = scmp.eq.s32.totalorder %s28, 0
      %s31 = sadd.s32 %s30, 1
      %s32 = scalar_select %p29, %s30, %s31
      %p35 = pneg %p29
      %p36 = scmp.eq.s32.totalorder %s20, 1
      %p37 = por %p35, %p36
      %p38 = scmp.ne.s32.totalorder %s30, %s33
      %p39 = scmp.eq.s32.totalorder %s20, 0
      %p40 = por %p38, %p39
      %p41 = scmp.ne.s32.totalorder %s30, %s33
      %p42 = scmp.eq.s32.totalorder %s25, 1
      %p43 = por %p41, %p42
      %p44 = scmp.ne.s32.totalorder %s33, %s34
      %p45 = scmp.eq.s32.totalorder %s25, 0
      %p46 = por %p44, %p45
      %p47 = scmp.ne.s32.totalorder %s33, %s34
      %p48 = scmp.eq.s32.totalorder %s26, 1
      %p49 = por %p47, %p48
      %p51 = scmp.ne.s32.totalorder %s34, %s50
      %p52 = scmp.eq.s32.totalorder %s26, 0
      %p53 = por %p51, %p52
      %s55 = sadd.s32 %s54, 1
      %p58 = scmp.eq.s32.totalorder %s20, 1
      %p59 = scmp.ne.s32.totalorder %s54, %s56
      %p60 = scmp.eq.s32.totalorder %s20, 0
      %p61 = por %p59, %p60
      %p62 = scmp.ne.s32.totalorder %s54, %s56
      %p63 = scmp.eq.s32.totalorder %s25, 1
      %p64 = por %p62, %p63
      %p65 = scmp.ne.s32.totalorder %s56, %s57
      %p66 = scmp.eq.s32.totalorder %s25, 0
      %p67 = por %p65, %p66
      %p68 = scmp.ne.s32.totalorder %s56, %s57
      %p69 = scmp.eq.s32.totalorder %s26, 1
      %p70 = por %p68, %p69
      %p72 = scmp.ne.s32.totalorder %s57, %s71
      %p73 = scmp.eq.s32.totalorder %s26, 0
      %p74 = por %p72, %p73
      %s76 = sadd.s32 %s75, 1
      %p79 = scmp.eq.s32.totalorder %s20, 1
      %p80 = scmp.ne.s32.totalorder %s75, %s77
      %p81 = scmp.eq.s32.totalorder %s20, 0
      %p82 = por %p80, %p81
      %p83 = scmp.ne.s32.totalorder %s75, %s77
      %p84 = scmp.eq.s32.totalorder %s25, 1
      %p85 = por %p83, %p84
      %p86 = scmp.ne.s32.totalorder %s77, %s78
      %p87 = scmp.eq.s32.totalorder %s25, 0
      %p88 = por %p86, %p87
      %p89 = scmp.ne.s32.totalorder %s77, %s78
      %p90 = scmp.eq.s32.totalorder %s26, 1
      %p91 = por %p89, %p90
      %p93 = scmp.ne.s32.totalorder %s78, %s92
      %p94 = scmp.eq.s32.totalorder %s26, 0
      %p95 = por %p93, %p94
      %s97 = sadd.s32 %s96, 1
      %p100 = scmp.eq.s32.totalorder %s20, 1
      %p101 = scmp.ne.s32.totalorder %s96, %s98
      %p102 = scmp.eq.s32.totalorder %s20, 0
      %p103 = por %p101, %p102
      %p104 = scmp.ne.s32.totalorder %s96, %s98
      %p105 = scmp.eq.s32.totalorder %s25, 1
      %p106 = por %p104, %p105
      %p107 = scmp.ne.s32.totalorder %s98, %s99
      %p108 = scmp.eq.s32.totalorder %s25, 0
      %p109 = por %p107, %p108
      %p110 = scmp.ne.s32.totalorder %s98, %s99
      %p111 = scmp.eq.s32.totalorder %s26, 1
      %p112 = por %p110, %p111
      %p114 = scmp.ne.s32.totalorder %s99, %s113
      %p115 = scmp.eq.s32.totalorder %s26, 0
      %p116 = por %p114, %p115
      %s118 = sadd.s32 %s117, 1
      %p121 = scmp.eq.s32.totalorder %s20, 1
      %p122 = scmp.ne.s32.totalorder %s117, %s119
      %p123 = scmp.eq.s32.totalorder %s20, 0
      %p124 = por %p122, %p123
      %p125 = scmp.ne.s32.totalorder %s117, %s119
      %p126 = scmp.eq.s32.totalorder %s25, 1
      %p127 = por %p125, %p126
      %p128 = scmp.ne.s32.totalorder %s119, %s120
      %p129 = scmp.eq.s32.totalorder %s25, 0
      %p130 = por %p128, %p129
      %p131 = scmp.ne.s32.totalorder %s119, %s120
      %p132 = scmp.eq.s32.totalorder %s26, 1
      %p133 = por %p131, %p132
      %p135 = scmp.ne.s32.totalorder %s120, %s134
      %p136 = scmp.eq.s32.totalorder %s26, 0
      %p137 = por %p135, %p136
      %s138 = ssub.s32 %s20, %s27
      %p139 = scmp.eq.s32.totalorder %s138, 0
      %s141 = sadd.s32 %s140, 1
      %s142 = scalar_select %p139, %s140, %s141
      %p145 = pneg %p139
      %p146 = scmp.eq.s32.totalorder %s20, 1
      %p147 = por %p145, %p146
      %p148 = scmp.ne.s32.totalorder %s140, %s143
      %p149 = scmp.eq.s32.totalorder %s20, 0
      %p150 = por %p148, %p149
      %p151 = scmp.ne.s32.totalorder %s140, %s143
      %p152 = scmp.eq.s32.totalorder %s25, 1
      %p153 = por %p151, %p152
      %p154 = scmp.ne.s32.totalorder %s143, %s144
      %p155 = scmp.eq.s32.totalorder %s25, 0
      %p156 = por %p154, %p155
      %p157 = scmp.ne.s32.totalorder %s143, %s144
      %p158 = scmp.eq.s32.totalorder %s26, 1
      %p159 = por %p157, %p158
      %p161 = scmp.ne.s32.totalorder %s144, %s160
      %p162 = scmp.eq.s32.totalorder %s26, 0
      %p163 = por %p161, %p162
      %p164 = scmp.le.s32.totalorder 1, %s20
      %p165 = scmp.lt.s32.totalorder %s20, 3
      %p166 = pnand %p164, %p165
      %p167 = pneg %p166
      // Predicated region
      $region9: #{tpu_custom_call.1} parent=5 // pred_check
        _
      $region10: #{tpu_custom_call.1} parent=5 // pred_check_branch
        %169 = sbr.rel (%p166) target = $region12
      $region11: #{tpu_custom_call.1} parent=5 // pred_region
        %s170 = ssub.s32 %s20, 1
        // Predicated region
        $region13: #{tpu_custom_call.1} parent=11 // pred_check
          %p171 = pneg %p67
        $region14: #{tpu_custom_call.1} parent=11 // pred_check_branch
          %173 = sbr.rel (%p171) target = $region16
        $region15: #{tpu_custom_call.1} parent=11 // pred_region
          %s175 = ssub.s32 32, 32
          %176 = vsyncadd [#allocation7], %s175
          %179 = dma.hbm_to_smem %s1, 32, [#allocation9], [#allocation7]
        $region16: #{tpu_custom_call.1} parent=11 // pred_fallthru
          _
        // Predicated region
        $region17: #{tpu_custom_call.1} parent=11 // pred_check
          %p180 = pneg %p88
        $region18: #{tpu_custom_call.1} parent=11 // pred_check_branch
          %182 = sbr.rel (%p180) target = $region20
        $region19: #{tpu_custom_call.1} parent=11 // pred_region
          %s184 = ssub.s32 16, 16
          %185 = vsyncadd [#allocation8], %s184
          %s187 = sshll.u32 %s2, 4
          %s188 = int_to_ptr.vmem [resolvable:$true] %s187
          %190 = dma.vmem_to_smem %s188, 16, [#allocation10], [#allocation8]
        $region20: #{tpu_custom_call.1} parent=11 // pred_fallthru
          _
        // Predicated region
        $region21: #{tpu_custom_call.1} parent=11 // pred_check
          %p191 = pneg %p109
        $region22: #{tpu_custom_call.1} parent=11 // pred_check_branch
          %193 = sbr.rel (%p191) target = $region24
        $region23: #{tpu_custom_call.1} parent=11 // pred_region
          %s195 = ssub.s32 32, 32
          %196 = vsyncadd [#allocation12], %s195
          %s198 = sshll.u32 %s3, 4
          %s199 = int_to_ptr.vmem [resolvable:$true] %s198
          %201 = dma.vmem_to_smem %s199, 32, [#allocation11], [#allocation12]
        $region24: #{tpu_custom_call.1} parent=11 // pred_fallthru
          _
        // Predicated region
        $region25: #{tpu_custom_call.1} parent=11 // pred_check
          %p202 = pneg %p130
        $region26: #{tpu_custom_call.1} parent=11 // pred_check_branch
          %204 = sbr.rel (%p202) target = $region28
        $region27: #{tpu_custom_call.1} parent=11 // pred_region
          %s206 = ssub.s32 16, 16
          %207 = vsyncadd [#allocation12], %s206
          %s209 = sshll.u32 %s4, 4
          %s210 = int_to_ptr.vmem [resolvable:$true] %s209
          %212 = dma.vmem_to_smem %s210, 16, [#allocation13], [#allocation12]
        $region28: #{tpu_custom_call.1} parent=11 // pred_fallthru
          _
      $region12: #{tpu_custom_call.1} parent=5 // pred_fallthru
        _
      %p213 = scmp.lt.s32.totalorder %s20, 2
      // Predicated region
      $region29: #{tpu_custom_call.1} parent=5 // pred_check
        %p214 = pneg %p213
      $region30: #{tpu_custom_call.1} parent=5 // pred_check_branch
        %216 = sbr.rel (%p214) target = $region32
      $region31: #{tpu_custom_call.1} parent=5 // pred_region
        // Predicated region
        $region33: #{tpu_custom_call.1} parent=31 // pred_check
          %p217 = pneg %p40
        $region34: #{tpu_custom_call.1} parent=31 // pred_check_branch
          %219 = sbr.rel (%p217) target = $region36
        $region35: #{tpu_custom_call.1} parent=31 // pred_region
          %s220 = sand.u32 %s30, 1
          %s221 = scalar_lea.sflag [#allocation5], %s220
          %s222 = sand.u32 %s30, 1
          %s223 = smul.addr %s222, 64
          %s224 = scalar_lea.vmem [#allocation4], %s223
          %s226 = ssub.s32 1024, 1024
          %227 = vsyncadd %s221, %s226
          %s228 = smul.addr %s20, 8
          %s229 = smul.addr %s228, 128
          %s230 = scalar_lea.hbm %s0, %s229
          %s231 = sshll.u32 %s224, 4
          %s232 = int_to_ptr.vmem [resolvable:$true] %s231
          %237 = dma.hbm_to_vmem [thread:$0]  %s230, 1024, %s232, %s221, 128, 128, 8
        $region36: #{tpu_custom_call.1} parent=31 // pred_fallthru
          _
      $region32: #{tpu_custom_call.1} parent=5 // pred_fallthru
        _
      %p238 = scmp.le.s32.totalorder 1, %s20
      %p239 = scmp.lt.s32.totalorder %s20, 3
      %p240 = pnand %p238, %p239
      %p241 = pneg %p240
      // Predicated region
      $region37: #{tpu_custom_call.1} parent=5 // pred_check
        _
      $region38: #{tpu_custom_call.1} parent=5 // pred_check_branch
        %243 = sbr.rel (%p240) target = $region40
      $region39: #{tpu_custom_call.1} parent=5 // pred_region
        %s244 = ssub.s32 %s20, 1
        %s245 = sand.u32 %s33, 1
        %s246 = scalar_lea.sflag [#allocation5], %s245
        %s247 = sand.u32 %s33, 1
        %s248 = smul.addr %s247, 64
        %s249 = scalar_lea.vmem [#allocation4], %s248
        // Predicated region
        $region41: #{tpu_custom_call.1} parent=39 // pred_check
          %p250 = pneg %p46
        $region42: #{tpu_custom_call.1} parent=39 // pred_check_branch
          %252 = sbr.rel (%p250) target = $region44
        $region43: #{tpu_custom_call.1} parent=39 // pred_region
          %253 = dma.done %s246, 1024
        $region44: #{tpu_custom_call.1} parent=39 // pred_fallthru
          _
        // Predicated region
        $region45: #{tpu_custom_call.1} parent=39 // pred_check
          %p254 = pneg %p67
        $region46: #{tpu_custom_call.1} parent=39 // pred_check_branch
          %256 = sbr.rel (%p254) target = $region48
        $region47: #{tpu_custom_call.1} parent=39 // pred_region
          %257 = dma.done [#allocation7], 32
        $region48: #{tpu_custom_call.1} parent=39 // pred_fallthru
          _
        // Predicated region
        $region49: #{tpu_custom_call.1} parent=39 // pred_check
          %p258 = pneg %p88
        $region50: #{tpu_custom_call.1} parent=39 // pred_check_branch
          %260 = sbr.rel (%p258) target = $region52
        $region51: #{tpu_custom_call.1} parent=39 // pred_region
          %261 = dma.done [#allocation8], 16
        $region52: #{tpu_custom_call.1} parent=39 // pred_fallthru
          _
        // Predicated region
        $region53: #{tpu_custom_call.1} parent=39 // pred_check
          %p262 = pneg %p109
        $region54: #{tpu_custom_call.1} parent=39 // pred_check_branch
          %264 = sbr.rel (%p262) target = $region56
        $region55: #{tpu_custom_call.1} parent=39 // pred_region
          %265 = dma.done [#allocation12], 32
        $region56: #{tpu_custom_call.1} parent=39 // pred_fallthru
          _
        // Predicated region
        $region57: #{tpu_custom_call.1} parent=39 // pred_check
          %p266 = pneg %p130
        $region58: #{tpu_custom_call.1} parent=39 // pred_check_branch
          %268 = sbr.rel (%p266) target = $region60
        $region59: #{tpu_custom_call.1} parent=39 // pred_region
          %269 = dma.done [#allocation12], 16
        $region60: #{tpu_custom_call.1} parent=39 // pred_fallthru
          _
        %270 = sfence
        %s271 = sand.u32 %s33, 1
        %s272 = scalar_lea.sflag [#allocation5], %s271
        %s273 = sand.u32 %s33, 1
        %s274 = smul.addr %s273, 64
        %s275 = scalar_lea.vmem [#allocation4], %s274
        %p276 = pneg %p46
        %p277 = pneg %p43
        %p278 = pneg %p67
        %p279 = pneg %p64
        %p280 = pneg %p88
        %p281 = pneg %p85
        %p282 = pneg %p109
        %p283 = pneg %p106
        %p284 = pneg %p130
        %p285 = pneg %p127
        %p286 = pneg %p156
        %p287 = pneg %p153
        %s288 = sand.u32 %s143, 1
        %s289 = scalar_lea.sflag [#allocation6], %s288
        %s290 = sand.u32 %s143, 1
        %s291 = smul.addr %s290, 64
        %s292 = scalar_lea.vmem [#allocation14], %s291
        %vm293 = vcmask 146432
        %294 = vst.msk [vmem:[#allocation2] sm:$0xff] %vm293, 0.0
        %295 = vst.msk [vmem:[#allocation2 + $0x8] sm:$0xff] %vm293, 0.0
        %vm296 = vcmask 140288
        %297 = vst.msk [vmem:[#allocation2 + $0x10] sm:$0x3] %vm296, 0.0
        %298 = vst.msk [vmem:[#allocation2 + $0x18] sm:$0xff] %vm293, 0.0
        %299 = vst.msk [vmem:[#allocation2 + $0x20] sm:$0xff] %vm293, 0.0
        %300 = vst.msk [vmem:[#allocation2 + $0x28] sm:$0x3] %vm296, 0.0
        %301 = vst.msk [vmem:[#allocation2 + $0x30] sm:$0xff] %vm293, 0.0
        %302 = vst.msk [vmem:[#allocation2 + $0x38] sm:$0xff] %vm293, 0.0
        %303 = vst.msk [vmem:[#allocation2 + $0x40] sm:$0x3] %vm296, 0.0
        %304 = vst.msk [vmem:[#allocation2 + $0x48] sm:$0xff] %vm293, 0.0
        %305 = vst.msk [vmem:[#allocation2 + $0x50] sm:$0xff] %vm293, 0.0
        %306 = vst.msk [vmem:[#allocation2 + $0x58] sm:$0x3] %vm296, 0.0
        %v307 = vld [vmem:[%s249] sm:$0xff]
        %v308 = vld [vmem:[%s249 + $0x8] sm:$0xff]
        %v309 = vld [vmem:[%s249 + $0x10] sm:$0xff]
        %v310 = vld [vmem:[%s249 + $0x18] sm:$0xff]
        %v311 = vld [vmem:[%s249 + $0x20] sm:$0xff]
        %v312 = vld [vmem:[%s249 + $0x28] sm:$0xff]
        %v313 = vld [vmem:[%s249 + $0x30] sm:$0xff]
        %v314 = vld [vmem:[%s249 + $0x38] sm:$0xff]
        %v315 = vmax.f32 %v307, 0.0
        %v316 = vmax.f32 %v308, 0.0
        %v317 = vmax.f32 %v309, 0.0
        %v318 = vmax.f32 %v310, 0.0
        %v319 = vmax.f32 %v311, 0.0
        %v320 = vmax.f32 %v312, 0.0
        %v321 = vmax.f32 %v313, 0.0
        %v322 = vmax.f32 %v314, 0.0
        %331 = vrot.lane.b32.xlu0 %v315, 1
        %v332 = vpop.permute.xlu0 %331
        %333 = vrot.lane.b32.xlu0 %v316, 1
        %v334 = vpop.permute.xlu0 %333
        %335 = vrot.lane.b32.xlu0 %v317, 1
        %v336 = vpop.permute.xlu0 %335
        %337 = vrot.lane.b32.xlu0 %v318, 1
        %v338 = vpop.permute.xlu0 %337
        %339 = vrot.lane.b32.xlu0 %v319, 1
        %v340 = vpop.permute.xlu0 %339
        %341 = vrot.lane.b32.xlu0 %v320, 1
        %v342 = vpop.permute.xlu0 %341
        %343 = vrot.lane.b32.xlu0 %v321, 1
        %v344 = vpop.permute.xlu0 %343
        %345 = vrot.lane.b32.xlu0 %v322, 1
        %v346 = vpop.permute.xlu0 %345
        %vm355 = vcmask 138248
        %356 = vst.msk [vmem:[#allocation2 + $0x1] sm:$0xff] %vm355, %v332
        %357 = vst.msk [vmem:[#allocation2 + $0x9] sm:$0xff] %vm355, %v334
        %358 = vst.msk [vmem:[#allocation2 + $0x19] sm:$0xff] %vm355, %v336
        %359 = vst.msk [vmem:[#allocation2 + $0x21] sm:$0xff] %vm355, %v338
        %360 = vst.msk [vmem:[#allocation2 + $0x31] sm:$0xff] %vm355, %v340
        %361 = vst.msk [vmem:[#allocation2 + $0x39] sm:$0xff] %vm355, %v342
        %362 = vst.msk [vmem:[#allocation2 + $0x49] sm:$0xff] %vm355, %v344
        %363 = vst.msk [vmem:[#allocation2 + $0x51] sm:$0xff] %vm355, %v346
        %364 = vst.msk [vmem:[#allocation3] sm:$0xff] %vm293, 0.0
        %365 = vst.msk [vmem:[#allocation3 + $0x8] sm:$0xff] %vm293, 0.0
        %366 = vst.msk [vmem:[#allocation3 + $0x10] sm:$0x3] %vm296, 0.0
        %367 = vst.msk [vmem:[#allocation3 + $0x18] sm:$0xff] %vm293, 0.0
        %368 = vst.msk [vmem:[#allocation3 + $0x20] sm:$0xff] %vm293, 0.0
        %369 = vst.msk [vmem:[#allocation3 + $0x28] sm:$0x3] %vm296, 0.0
        %370 = vst.msk [vmem:[#allocation3 + $0x30] sm:$0xff] %vm293, 0.0
        %371 = vst.msk [vmem:[#allocation3 + $0x38] sm:$0xff] %vm293, 0.0
        %372 = vst.msk [vmem:[#allocation3 + $0x40] sm:$0x3] %vm296, 0.0
        %373 = vst.msk [vmem:[#allocation3 + $0x48] sm:$0xff] %vm293, 0.0
        %374 = vst.msk [vmem:[#allocation3 + $0x50] sm:$0xff] %vm293, 0.0
        %375 = vst.msk [vmem:[#allocation3 + $0x58] sm:$0x3] %vm296, 0.0
        %v376 = vld [vmem:[#allocation2] sm:$0xff]
        %v377 = vld [vmem:[#allocation2 + $0x8] sm:$0xff]
        %v378 = vld [vmem:[#allocation2 + $0x1] sm:$0xff]
        %v379 = vld [vmem:[#allocation2 + $0x9] sm:$0xff]
        %v380 = vld [vmem:[#allocation2 + $0x2] sm:$0xff]
        %v381 = vld [vmem:[#allocation2 + $0xa] sm:$0xff]
        %s382 = scalar_lea.vmem [#allocation2], 24
        %v383 = vld [vmem:[%s382] sm:$0xff]
        %v384 = vld [vmem:[%s382 + $0x8] sm:$0xff]
        %v385 = vld [vmem:[%s382 + $0x1] sm:$0xff]
        %v386 = vld [vmem:[%s382 + $0x9] sm:$0xff]
        %v387 = vld [vmem:[%s382 + $0x2] sm:$0xff]
        %v388 = vld [vmem:[%s382 + $0xa] sm:$0xff]
        %s389 = scalar_lea.vmem [#allocation2], 48
        %v390 = vld [vmem:[%s389] sm:$0xff]
        %v391 = vld [vmem:[%s389 + $0x8] sm:$0xff]
        %v392 = vld [vmem:[%s389 + $0x1] sm:$0xff]
        %v393 = vld [vmem:[%s389 + $0x9] sm:$0xff]
        %v394 = vld [vmem:[%s389 + $0x2] sm:$0xff]
        %v395 = vld [vmem:[%s389 + $0xa] sm:$0xff]
        %s396 = scalar_lea.vmem [#allocation2], 72
        %v397 = vld [vmem:[%s396] sm:$0xff]
        %v398 = vld [vmem:[%s396 + $0x8] sm:$0xff]
        %v399 = vld [vmem:[%s396 + $0x1] sm:$0xff]
        %v400 = vld [vmem:[%s396 + $0x9] sm:$0xff]
        %v401 = vld [vmem:[%s396 + $0x2] sm:$0xff]
        %v402 = vld [vmem:[%s396 + $0xa] sm:$0xff]
        %s403 = sld [smem:[#allocation9]]
        %v404 = vstv %s403
        %v405 = vmul.f32 %v404, %v376
        %v406 = vmul.f32 %v404, %v377
        %v407 = vadd.f32 %v405, 0.0
        %v408 = vadd.f32 %v406, 0.0
        %s409 = sld [smem:[#allocation9 + $0x1]]
        %v410 = vstv %s409
        %v411 = vmul.f32 %v410, %v376
        %v412 = vmul.f32 %v410, %v377
        %415 = vrot.lane.b32.xlu0 %v411, 127
        %v416 = vpop.permute.xlu0 %415
        %417 = vrot.lane.b32.xlu0 %v412, 127
        %v418 = vpop.permute.xlu0 %417
        %v421 = vadd.f32 %v407, %v416
        %v422 = vadd.f32 %v408, %v418
        %s423 = sld [smem:[#allocation9 + $0x2]]
        %v424 = vstv %s423
        %v425 = vmul.f32 %v424, %v376
        %v426 = vmul.f32 %v424, %v377
        %429 = vrot.lane.b32.xlu0 %v425, 126
        %v430 = vpop.permute.xlu0 %429
        %431 = vrot.lane.b32.xlu0 %v426, 126
        %v432 = vpop.permute.xlu0 %431
        %v435 = vadd.f32 %v421, %v430
        %v436 = vadd.f32 %v422, %v432
        %s437 = sld [smem:[#allocation9 + $0x3]]
        %v438 = vstv %s437
        %v439 = vmul.f32 %v438, %v378
        %v440 = vmul.f32 %v438, %v379
        %v441 = vadd.f32 %v435, %v439
        %v442 = vadd.f32 %v436, %v440
        %s443 = sld [smem:[#allocation9 + $0x4]]
        %v444 = vstv %s443
        %v445 = vmul.f32 %v444, %v378
        %v446 = vmul.f32 %v444, %v379
        %449 = vrot.lane.b32.xlu0 %v445, 127
        %v450 = vpop.permute.xlu0 %449
        %451 = vrot.lane.b32.xlu0 %v446, 127
        %v452 = vpop.permute.xlu0 %451
        %v455 = vadd.f32 %v441, %v450
        %v456 = vadd.f32 %v442, %v452
        %s457 = sld [smem:[#allocation9 + $0x5]]
        %v458 = vstv %s457
        %v459 = vmul.f32 %v458, %v378
        %v460 = vmul.f32 %v458, %v379
        %463 = vrot.lane.b32.xlu0 %v459, 126
        %v464 = vpop.permute.xlu0 %463
        %465 = vrot.lane.b32.xlu0 %v460, 126
        %v466 = vpop.permute.xlu0 %465
        %v469 = vadd.f32 %v455, %v464
        %v470 = vadd.f32 %v456, %v466
        %s471 = sld [smem:[#allocation9 + $0x6]]
        %v472 = vstv %s471
        %v473 = vmul.f32 %v472, %v380
        %v474 = vmul.f32 %v472, %v381
        %v475 = vadd.f32 %v469, %v473
        %v476 = vadd.f32 %v470, %v474
        %s477 = sld [smem:[#allocation9 + $0x7]]
        %v478 = vstv %s477
        %v479 = vmul.f32 %v478, %v380
        %v480 = vmul.f32 %v478, %v381
        %483 = vrot.lane.b32.xlu0 %v479, 127
        %v484 = vpop.permute.xlu0 %483
        %485 = vrot.lane.b32.xlu0 %v480, 127
        %v486 = vpop.permute.xlu0 %485
        %v489 = vadd.f32 %v475, %v484
        %v490 = vadd.f32 %v476, %v486
        %s491 = sld [smem:[#allocation9 + $0x8]]
        %v492 = vstv %s491
        %v493 = vmul.f32 %v492, %v380
        %v494 = vmul.f32 %v492, %v381
        %497 = vrot.lane.b32.xlu0 %v493, 126
        %v498 = vpop.permute.xlu0 %497
        %499 = vrot.lane.b32.xlu0 %v494, 126
        %v500 = vpop.permute.xlu0 %499
        %v503 = vadd.f32 %v489, %v498
        %v504 = vadd.f32 %v490, %v500
        %s505 = sld [smem:[#allocation9 + $0x9]]
        %v506 = vstv %s505
        %v507 = vmul.f32 %v506, %v383
        %v508 = vmul.f32 %v506, %v384
        %v509 = vadd.f32 %v503, %v507
        %v510 = vadd.f32 %v504, %v508
        %s511 = sld [smem:[#allocation9 + $0xa]]
        %v512 = vstv %s511
        %v513 = vmul.f32 %v512, %v383
        %v514 = vmul.f32 %v512, %v384
        %517 = vrot.lane.b32.xlu0 %v513, 127
        %v518 = vpop.permute.xlu0 %517
        %519 = vrot.lane.b32.xlu0 %v514, 127
        %v520 = vpop.permute.xlu0 %519
        %v523 = vadd.f32 %v509, %v518
        %v524 = vadd.f32 %v510, %v520
        %s525 = sld [smem:[#allocation9 + $0xb]]
        %v526 = vstv %s525
        %v527 = vmul.f32 %v526, %v383
        %v528 = vmul.f32 %v526, %v384
        %531 = vrot.lane.b32.xlu0 %v527, 126
        %v532 = vpop.permute.xlu0 %531
        %533 = vrot.lane.b32.xlu0 %v528, 126
        %v534 = vpop.permute.xlu0 %533
        %v537 = vadd.f32 %v523, %v532
        %v538 = vadd.f32 %v524, %v534
        %s539 = sld [smem:[#allocation9 + $0xc]]
        %v540 = vstv %s539
        %v541 = vmul.f32 %v540, %v385
        %v542 = vmul.f32 %v540, %v386
        %v543 = vadd.f32 %v537, %v541
        %v544 = vadd.f32 %v538, %v542
        %s545 = sld [smem:[#allocation9 + $0xd]]
        %v546 = vstv %s545
        %v547 = vmul.f32 %v546, %v385
        %v548 = vmul.f32 %v546, %v386
        %551 = vrot.lane.b32.xlu0 %v547, 127
        %v552 = vpop.permute.xlu0 %551
        %553 = vrot.lane.b32.xlu0 %v548, 127
        %v554 = vpop.permute.xlu0 %553
        %v557 = vadd.f32 %v543, %v552
        %v558 = vadd.f32 %v544, %v554
        %s559 = sld [smem:[#allocation9 + $0xe]]
        %v560 = vstv %s559
        %v561 = vmul.f32 %v560, %v385
        %v562 = vmul.f32 %v560, %v386
        %565 = vrot.lane.b32.xlu0 %v561, 126
        %v566 = vpop.permute.xlu0 %565
        %567 = vrot.lane.b32.xlu0 %v562, 126
        %v568 = vpop.permute.xlu0 %567
        %v571 = vadd.f32 %v557, %v566
        %v572 = vadd.f32 %v558, %v568
        %s573 = sld [smem:[#allocation9 + $0xf]]
        %v574 = vstv %s573
        %v575 = vmul.f32 %v574, %v387
        %v576 = vmul.f32 %v574, %v388
        %v577 = vadd.f32 %v571, %v575
        %v578 = vadd.f32 %v572, %v576
        %s579 = sld [smem:[#allocation9 + $0x10]]
        %v580 = vstv %s579
        %v581 = vmul.f32 %v580, %v387
        %v582 = vmul.f32 %v580, %v388
        %585 = vrot.lane.b32.xlu0 %v581, 127
        %v586 = vpop.permute.xlu0 %585
        %587 = vrot.lane.b32.xlu0 %v582, 127
        %v588 = vpop.permute.xlu0 %587
        %v591 = vadd.f32 %v577, %v586
        %v592 = vadd.f32 %v578, %v588
        %s593 = sld [smem:[#allocation9 + $0x11]]
        %v594 = vstv %s593
        %v595 = vmul.f32 %v594, %v387
        %v596 = vmul.f32 %v594, %v388
        %599 = vrot.lane.b32.xlu0 %v595, 126
        %v600 = vpop.permute.xlu0 %599
        %601 = vrot.lane.b32.xlu0 %v596, 126
        %v602 = vpop.permute.xlu0 %601
        %v605 = vadd.f32 %v591, %v600
        %v606 = vadd.f32 %v592, %v602
        %s607 = sld [smem:[#allocation9 + $0x12]]
        %v608 = vstv %s607
        %v609 = vmul.f32 %v608, %v390
        %v610 = vmul.f32 %v608, %v391
        %v611 = vadd.f32 %v605, %v609
        %v612 = vadd.f32 %v606, %v610
        %s613 = sld [smem:[#allocation9 + $0x13]]
        %v614 = vstv %s613
        %v615 = vmul.f32 %v614, %v390
        %v616 = vmul.f32 %v614, %v391
        %619 = vrot.lane.b32.xlu0 %v615, 127
        %v620 = vpop.permute.xlu0 %619
        %621 = vrot.lane.b32.xlu0 %v616, 127
        %v622 = vpop.permute.xlu0 %621
        %v625 = vadd.f32 %v611, %v620
        %v626 = vadd.f32 %v612, %v622
        %s627 = sld [smem:[#allocation9 + $0x14]]
        %v628 = vstv %s627
        %v629 = vmul.f32 %v628, %v390
        %v630 = vmul.f32 %v628, %v391
        %633 = vrot.lane.b32.xlu0 %v629, 126
        %v634 = vpop.permute.xlu0 %633
        %635 = vrot.lane.b32.xlu0 %v630, 126
        %v636 = vpop.permute.xlu0 %635
        %v639 = vadd.f32 %v625, %v634
        %v640 = vadd.f32 %v626, %v636
        %s641 = sld [smem:[#allocation9 + $0x15]]
        %v642 = vstv %s641
        %v643 = vmul.f32 %v642, %v392
        %v644 = vmul.f32 %v642, %v393
        %v645 = vadd.f32 %v639, %v643
        %v646 = vadd.f32 %v640, %v644
        %s647 = sld [smem:[#allocation9 + $0x16]]
        %v648 = vstv %s647
        %v649 = vmul.f32 %v648, %v392
        %v650 = vmul.f32 %v648, %v393
        %653 = vrot.lane.b32.xlu0 %v649, 127
        %v654 = vpop.permute.xlu0 %653
        %655 = vrot.lane.b32.xlu0 %v650, 127
        %v656 = vpop.permute.xlu0 %655
        %v659 = vadd.f32 %v645, %v654
        %v660 = vadd.f32 %v646, %v656
        %s661 = sld [smem:[#allocation9 + $0x17]]
        %v662 = vstv %s661
        %v663 = vmul.f32 %v662, %v392
        %v664 = vmul.f32 %v662, %v393
        %667 = vrot.lane.b32.xlu0 %v663, 126
        %v668 = vpop.permute.xlu0 %667
        %669 = vrot.lane.b32.xlu0 %v664, 126
        %v670 = vpop.permute.xlu0 %669
        %v673 = vadd.f32 %v659, %v668
        %v674 = vadd.f32 %v660, %v670
        %s675 = sld [smem:[#allocation9 + $0x18]]
        %v676 = vstv %s675
        %v677 = vmul.f32 %v676, %v394
        %v678 = vmul.f32 %v676, %v395
        %v679 = vadd.f32 %v673, %v677
        %v680 = vadd.f32 %v674, %v678
        %s681 = sld [smem:[#allocation9 + $0x19]]
        %v682 = vstv %s681
        %v683 = vmul.f32 %v682, %v394
        %v684 = vmul.f32 %v682, %v395
        %687 = vrot.lane.b32.xlu0 %v683, 127
        %v688 = vpop.permute.xlu0 %687
        %689 = vrot.lane.b32.xlu0 %v684, 127
        %v690 = vpop.permute.xlu0 %689
        %v693 = vadd.f32 %v679, %v688
        %v694 = vadd.f32 %v680, %v690
        %s695 = sld [smem:[#allocation9 + $0x1a]]
        %v696 = vstv %s695
        %v697 = vmul.f32 %v696, %v394
        %v698 = vmul.f32 %v696, %v395
        %701 = vrot.lane.b32.xlu0 %v697, 126
        %v702 = vpop.permute.xlu0 %701
        %703 = vrot.lane.b32.xlu0 %v698, 126
        %v704 = vpop.permute.xlu0 %703
        %v707 = vadd.f32 %v693, %v702
        %v708 = vadd.f32 %v694, %v704
        %s709 = sld [smem:[#allocation9 + $0x1b]]
        %v710 = vstv %s709
        %v711 = vmul.f32 %v710, %v397
        %v712 = vmul.f32 %v710, %v398
        %v713 = vadd.f32 %v707, %v711
        %v714 = vadd.f32 %v708, %v712
        %s715 = sld [smem:[#allocation9 + $0x1c]]
        %v716 = vstv %s715
        %v717 = vmul.f32 %v716, %v397
        %v718 = vmul.f32 %v716, %v398
        %721 = vrot.lane.b32.xlu0 %v717, 127
        %v722 = vpop.permute.xlu0 %721
        %723 = vrot.lane.b32.xlu0 %v718, 127
        %v724 = vpop.permute.xlu0 %723
        %v727 = vadd.f32 %v713, %v722
        %v728 = vadd.f32 %v714, %v724
        %s729 = sld [smem:[#allocation9 + $0x1d]]
        %v730 = vstv %s729
        %v731 = vmul.f32 %v730, %v397
        %v732 = vmul.f32 %v730, %v398
        %735 = vrot.lane.b32.xlu0 %v731, 126
        %v736 = vpop.permute.xlu0 %735
        %737 = vrot.lane.b32.xlu0 %v732, 126
        %v738 = vpop.permute.xlu0 %737
        %v741 = vadd.f32 %v727, %v736
        %v742 = vadd.f32 %v728, %v738
        %s743 = sld [smem:[#allocation9 + $0x1e]]
        %v744 = vstv %s743
        %v745 = vmul.f32 %v744, %v399
        %v746 = vmul.f32 %v744, %v400
        %v747 = vadd.f32 %v741, %v745
        %v748 = vadd.f32 %v742, %v746
        %s749 = sld [smem:[#allocation9 + $0x1f]]
        %v750 = vstv %s749
        %v751 = vmul.f32 %v750, %v399
        %v752 = vmul.f32 %v750, %v400
        %755 = vrot.lane.b32.xlu0 %v751, 127
        %v756 = vpop.permute.xlu0 %755
        %757 = vrot.lane.b32.xlu0 %v752, 127
        %v758 = vpop.permute.xlu0 %757
        %v761 = vadd.f32 %v747, %v756
        %v762 = vadd.f32 %v748, %v758
        %s763 = sld [smem:[#allocation9 + $0x20]]
        %v764 = vstv %s763
        %v765 = vmul.f32 %v764, %v399
        %v766 = vmul.f32 %v764, %v400
        %769 = vrot.lane.b32.xlu0 %v765, 126
        %v770 = vpop.permute.xlu0 %769
        %771 = vrot.lane.b32.xlu0 %v766, 126
        %v772 = vpop.permute.xlu0 %771
        %v775 = vadd.f32 %v761, %v770
        %v776 = vadd.f32 %v762, %v772
        %s777 = sld [smem:[#allocation9 + $0x21]]
        %v778 = vstv %s777
        %v779 = vmul.f32 %v778, %v401
        %v780 = vmul.f32 %v778, %v402
        %v781 = vadd.f32 %v775, %v779
        %v782 = vadd.f32 %v776, %v780
        %s783 = sld [smem:[#allocation9 + $0x22]]
        %v784 = vstv %s783
        %v785 = vmul.f32 %v784, %v401
        %v786 = vmul.f32 %v784, %v402
        %789 = vrot.lane.b32.xlu0 %v785, 127
        %v790 = vpop.permute.xlu0 %789
        %791 = vrot.lane.b32.xlu0 %v786, 127
        %v792 = vpop.permute.xlu0 %791
        %v795 = vadd.f32 %v781, %v790
        %v796 = vadd.f32 %v782, %v792
        %s797 = sld [smem:[#allocation9 + $0x23]]
        %v798 = vstv %s797
        %v799 = vmul.f32 %v798, %v401
        %v800 = vmul.f32 %v798, %v402
        %803 = vrot.lane.b32.xlu0 %v799, 126
        %v804 = vpop.permute.xlu0 %803
        %805 = vrot.lane.b32.xlu0 %v800, 126
        %v806 = vpop.permute.xlu0 %805
        %v809 = vadd.f32 %v795, %v804
        %v810 = vadd.f32 %v796, %v806
        %s811 = sld [smem:[#allocation10]]
        %v812 = vstv %s811
        %v813 = vadd.f32 %v809, %v812
        %v814 = vadd.f32 %v810, %v812
        %s815 = sld [smem:[#allocation9 + $0x24]]
        %v816 = vstv %s815
        %v817 = vmul.f32 %v816, %v376
        %v818 = vmul.f32 %v816, %v377
        %v819 = vadd.f32 %v817, 0.0
        %v820 = vadd.f32 %v818, 0.0
        %s821 = sld [smem:[#allocation9 + $0x25]]
        %v822 = vstv %s821
        %v823 = vmul.f32 %v822, %v376
        %v824 = vmul.f32 %v822, %v377
        %827 = vrot.lane.b32.xlu0 %v823, 127
        %v828 = vpop.permute.xlu0 %827
        %829 = vrot.lane.b32.xlu0 %v824, 127
        %v830 = vpop.permute.xlu0 %829
        %v833 = vadd.f32 %v819, %v828
        %v834 = vadd.f32 %v820, %v830
        %s835 = sld [smem:[#allocation9 + $0x26]]
        %v836 = vstv %s835
        %v837 = vmul.f32 %v836, %v376
        %v838 = vmul.f32 %v836, %v377
        %841 = vrot.lane.b32.xlu0 %v837, 126
        %v842 = vpop.permute.xlu0 %841
        %843 = vrot.lane.b32.xlu0 %v838, 126
        %v844 = vpop.permute.xlu0 %843
        %v847 = vadd.f32 %v833, %v842
        %v848 = vadd.f32 %v834, %v844
        %s849 = sld [smem:[#allocation9 + $0x27]]
        %v850 = vstv %s849
        %v851 = vmul.f32 %v850, %v378
        %v852 = vmul.f32 %v850, %v379
        %v853 = vadd.f32 %v847, %v851
        %v854 = vadd.f32 %v848, %v852
        %s855 = sld [smem:[#allocation9 + $0x28]]
        %v856 = vstv %s855
        %v857 = vmul.f32 %v856, %v378
        %v858 = vmul.f32 %v856, %v379
        %861 = vrot.lane.b32.xlu0 %v857, 127
        %v862 = vpop.permute.xlu0 %861
        %863 = vrot.lane.b32.xlu0 %v858, 127
        %v864 = vpop.permute.xlu0 %863
        %v867 = vadd.f32 %v853, %v862
        %v868 = vadd.f32 %v854, %v864
        %s869 = sld [smem:[#allocation9 + $0x29]]
        %v870 = vstv %s869
        %v871 = vmul.f32 %v870, %v378
        %v872 = vmul.f32 %v870, %v379
        %875 = vrot.lane.b32.xlu0 %v871, 126
        %v876 = vpop.permute.xlu0 %875
        %877 = vrot.lane.b32.xlu0 %v872, 126
        %v878 = vpop.permute.xlu0 %877
        %v881 = vadd.f32 %v867, %v876
        %v882 = vadd.f32 %v868, %v878
        %s883 = sld [smem:[#allocation9 + $0x2a]]
        %v884 = vstv %s883
        %v885 = vmul.f32 %v884, %v380
        %v886 = vmul.f32 %v884, %v381
        %v887 = vadd.f32 %v881, %v885
        %v888 = vadd.f32 %v882, %v886
        %s889 = sld [smem:[#allocation9 + $0x2b]]
        %v890 = vstv %s889
        %v891 = vmul.f32 %v890, %v380
        %v892 = vmul.f32 %v890, %v381
        %895 = vrot.lane.b32.xlu0 %v891, 127
        %v896 = vpop.permute.xlu0 %895
        %897 = vrot.lane.b32.xlu0 %v892, 127
        %v898 = vpop.permute.xlu0 %897
        %v901 = vadd.f32 %v887, %v896
        %v902 = vadd.f32 %v888, %v898
        %s903 = sld [smem:[#allocation9 + $0x2c]]
        %v904 = vstv %s903
        %v905 = vmul.f32 %v904, %v380
        %v906 = vmul.f32 %v904, %v381
        %909 = vrot.lane.b32.xlu0 %v905, 126
        %v910 = vpop.permute.xlu0 %909
        %911 = vrot.lane.b32.xlu0 %v906, 126
        %v912 = vpop.permute.xlu0 %911
        %v915 = vadd.f32 %v901, %v910
        %v916 = vadd.f32 %v902, %v912
        %s917 = sld [smem:[#allocation9 + $0x2d]]
        %v918 = vstv %s917
        %v919 = vmul.f32 %v918, %v383
        %v920 = vmul.f32 %v918, %v384
        %v921 = vadd.f32 %v915, %v919
        %v922 = vadd.f32 %v916, %v920
        %s923 = sld [smem:[#allocation9 + $0x2e]]
        %v924 = vstv %s923
        %v925 = vmul.f32 %v924, %v383
        %v926 = vmul.f32 %v924, %v384
        %929 = vrot.lane.b32.xlu0 %v925, 127
        %v930 = vpop.permute.xlu0 %929
        %931 = vrot.lane.b32.xlu0 %v926, 127
        %v932 = vpop.permute.xlu0 %931
        %v935 = vadd.f32 %v921, %v930
        %v936 = vadd.f32 %v922, %v932
        %s937 = sld [smem:[#allocation9 + $0x2f]]
        %v938 = vstv %s937
        %v939 = vmul.f32 %v938, %v383
        %v940 = vmul.f32 %v938, %v384
        %943 = vrot.lane.b32.xlu0 %v939, 126
        %v944 = vpop.permute.xlu0 %943
        %945 = vrot.lane.b32.xlu0 %v940, 126
        %v946 = vpop.permute.xlu0 %945
        %v949 = vadd.f32 %v935, %v944
        %v950 = vadd.f32 %v936, %v946
        %s951 = sld [smem:[#allocation9 + $0x30]]
        %v952 = vstv %s951
        %v953 = vmul.f32 %v952, %v385
        %v954 = vmul.f32 %v952, %v386
        %v955 = vadd.f32 %v949, %v953
        %v956 = vadd.f32 %v950, %v954
        %s957 = sld [smem:[#allocation9 + $0x31]]
        %v958 = vstv %s957
        %v959 = vmul.f32 %v958, %v385
        %v960 = vmul.f32 %v958, %v386
        %963 = vrot.lane.b32.xlu0 %v959, 127
        %v964 = vpop.permute.xlu0 %963
        %965 = vrot.lane.b32.xlu0 %v960, 127
        %v966 = vpop.permute.xlu0 %965
        %v969 = vadd.f32 %v955, %v964
        %v970 = vadd.f32 %v956, %v966
        %s971 = sld [smem:[#allocation9 + $0x32]]
        %v972 = vstv %s971
        %v973 = vmul.f32 %v972, %v385
        %v974 = vmul.f32 %v972, %v386
        %977 = vrot.lane.b32.xlu0 %v973, 126
        %v978 = vpop.permute.xlu0 %977
        %979 = vrot.lane.b32.xlu0 %v974, 126
        %v980 = vpop.permute.xlu0 %979
        %v983 = vadd.f32 %v969, %v978
        %v984 = vadd.f32 %v970, %v980
        %s985 = sld [smem:[#allocation9 + $0x33]]
        %v986 = vstv %s985
        %v987 = vmul.f32 %v986, %v387
        %v988 = vmul.f32 %v986, %v388
        %v989 = vadd.f32 %v983, %v987
        %v990 = vadd.f32 %v984, %v988
        %s991 = sld [smem:[#allocation9 + $0x34]]
        %v992 = vstv %s991
        %v993 = vmul.f32 %v992, %v387
        %v994 = vmul.f32 %v992, %v388
        %997 = vrot.lane.b32.xlu0 %v993, 127
        %v998 = vpop.permute.xlu0 %997
        %999 = vrot.lane.b32.xlu0 %v994, 127
        %v1000 = vpop.permute.xlu0 %999
        %v1003 = vadd.f32 %v989, %v998
        %v1004 = vadd.f32 %v990, %v1000
        %s1005 = sld [smem:[#allocation9 + $0x35]]
        %v1006 = vstv %s1005
        %v1007 = vmul.f32 %v1006, %v387
        %v1008 = vmul.f32 %v1006, %v388
        %1011 = vrot.lane.b32.xlu0 %v1007, 126
        %v1012 = vpop.permute.xlu0 %1011
        %1013 = vrot.lane.b32.xlu0 %v1008, 126
        %v1014 = vpop.permute.xlu0 %1013
        %v1017 = vadd.f32 %v1003, %v1012
        %v1018 = vadd.f32 %v1004, %v1014
        %s1019 = sld [smem:[#allocation9 + $0x36]]
        %v1020 = vstv %s1019
        %v1021 = vmul.f32 %v1020, %v390
        %v1022 = vmul.f32 %v1020, %v391
        %v1023 = vadd.f32 %v1017, %v1021
        %v1024 = vadd.f32 %v1018, %v1022
        %s1025 = sld [smem:[#allocation9 + $0x37]]
        %v1026 = vstv %s1025
        %v1027 = vmul.f32 %v1026, %v390
        %v1028 = vmul.f32 %v1026, %v391
        %1031 = vrot.lane.b32.xlu0 %v1027, 127
        %v1032 = vpop.permute.xlu0 %1031
        %1033 = vrot.lane.b32.xlu0 %v1028, 127
        %v1034 = vpop.permute.xlu0 %1033
        %v1037 = vadd.f32 %v1023, %v1032
        %v1038 = vadd.f32 %v1024, %v1034
        %s1039 = sld [smem:[#allocation9 + $0x38]]
        %v1040 = vstv %s1039
        %v1041 = vmul.f32 %v1040, %v390
        %v1042 = vmul.f32 %v1040, %v391
        %1045 = vrot.lane.b32.xlu0 %v1041, 126
        %v1046 = vpop.permute.xlu0 %1045
        %1047 = vrot.lane.b32.xlu0 %v1042, 126
        %v1048 = vpop.permute.xlu0 %1047
        %v1051 = vadd.f32 %v1037, %v1046
        %v1052 = vadd.f32 %v1038, %v1048
        %s1053 = sld [smem:[#allocation9 + $0x39]]
        %v1054 = vstv %s1053
        %v1055 = vmul.f32 %v1054, %v392
        %v1056 = vmul.f32 %v1054, %v393
        %v1057 = vadd.f32 %v1051, %v1055
        %v1058 = vadd.f32 %v1052, %v1056
        %s1059 = sld [smem:[#allocation9 + $0x3a]]
        %v1060 = vstv %s1059
        %v1061 = vmul.f32 %v1060, %v392
        %v1062 = vmul.f32 %v1060, %v393
        %1065 = vrot.lane.b32.xlu0 %v1061, 127
        %v1066 = vpop.permute.xlu0 %1065
        %1067 = vrot.lane.b32.xlu0 %v1062, 127
        %v1068 = vpop.permute.xlu0 %1067
        %v1071 = vadd.f32 %v1057, %v1066
        %v1072 = vadd.f32 %v1058, %v1068
        %s1073 = sld [smem:[#allocation9 + $0x3b]]
        %v1074 = vstv %s1073
        %v1075 = vmul.f32 %v1074, %v392
        %v1076 = vmul.f32 %v1074, %v393
        %1079 = vrot.lane.b32.xlu0 %v1075, 126
        %v1080 = vpop.permute.xlu0 %1079
        %1081 = vrot.lane.b32.xlu0 %v1076, 126
        %v1082 = vpop.permute.xlu0 %1081
        %v1085 = vadd.f32 %v1071, %v1080
        %v1086 = vadd.f32 %v1072, %v1082
        %s1087 = sld [smem:[#allocation9 + $0x3c]]
        %v1088 = vstv %s1087
        %v1089 = vmul.f32 %v1088, %v394
        %v1090 = vmul.f32 %v1088, %v395
        %v1091 = vadd.f32 %v1085, %v1089
        %v1092 = vadd.f32 %v1086, %v1090
        %s1093 = sld [smem:[#allocation9 + $0x3d]]
        %v1094 = vstv %s1093
        %v1095 = vmul.f32 %v1094, %v394
        %v1096 = vmul.f32 %v1094, %v395
        %1099 = vrot.lane.b32.xlu0 %v1095, 127
        %v1100 = vpop.permute.xlu0 %1099
        %1101 = vrot.lane.b32.xlu0 %v1096, 127
        %v1102 = vpop.permute.xlu0 %1101
        %v1105 = vadd.f32 %v1091, %v1100
        %v1106 = vadd.f32 %v1092, %v1102
        %s1107 = sld [smem:[#allocation9 + $0x3e]]
        %v1108 = vstv %s1107
        %v1109 = vmul.f32 %v1108, %v394
        %v1110 = vmul.f32 %v1108, %v395
        %1113 = vrot.lane.b32.xlu0 %v1109, 126
        %v1114 = vpop.permute.xlu0 %1113
        %1115 = vrot.lane.b32.xlu0 %v1110, 126
        %v1116 = vpop.permute.xlu0 %1115
        %v1119 = vadd.f32 %v1105, %v1114
        %v1120 = vadd.f32 %v1106, %v1116
        %s1121 = sld [smem:[#allocation9 + $0x3f]]
        %v1122 = vstv %s1121
        %v1123 = vmul.f32 %v1122, %v397
        %v1124 = vmul.f32 %v1122, %v398
        %v1125 = vadd.f32 %v1119, %v1123
        %v1126 = vadd.f32 %v1120, %v1124
        %s1127 = sld [smem:[#allocation9 + $0x40]]
        %v1128 = vstv %s1127
        %v1129 = vmul.f32 %v1128, %v397
        %v1130 = vmul.f32 %v1128, %v398
        %1133 = vrot.lane.b32.xlu0 %v1129, 127
        %v1134 = vpop.permute.xlu0 %1133
        %1135 = vrot.lane.b32.xlu0 %v1130, 127
        %v1136 = vpop.permute.xlu0 %1135
        %v1139 = vadd.f32 %v1125, %v1134
        %v1140 = vadd.f32 %v1126, %v1136
        %s1141 = sld [smem:[#allocation9 + $0x41]]
        %v1142 = vstv %s1141
        %v1143 = vmul.f32 %v1142, %v397
        %v1144 = vmul.f32 %v1142, %v398
        %1147 = vrot.lane.b32.xlu0 %v1143, 126
        %v1148 = vpop.permute.xlu0 %1147
        %1149 = vrot.lane.b32.xlu0 %v1144, 126
        %v1150 = vpop.permute.xlu0 %1149
        %v1153 = vadd.f32 %v1139, %v1148
        %v1154 = vadd.f32 %v1140, %v1150
        %s1155 = sld [smem:[#allocation9 + $0x42]]
        %v1156 = vstv %s1155
        %v1157 = vmul.f32 %v1156, %v399
        %v1158 = vmul.f32 %v1156, %v400
        %v1159 = vadd.f32 %v1153, %v1157
        %v1160 = vadd.f32 %v1154, %v1158
        %s1161 = sld [smem:[#allocation9 + $0x43]]
        %v1162 = vstv %s1161
        %v1163 = vmul.f32 %v1162, %v399
        %v1164 = vmul.f32 %v1162, %v400
        %1167 = vrot.lane.b32.xlu0 %v1163, 127
        %v1168 = vpop.permute.xlu0 %1167
        %1169 = vrot.lane.b32.xlu0 %v1164, 127
        %v1170 = vpop.permute.xlu0 %1169
        %v1173 = vadd.f32 %v1159, %v1168
        %v1174 = vadd.f32 %v1160, %v1170
        %s1175 = sld [smem:[#allocation9 + $0x44]]
        %v1176 = vstv %s1175
        %v1177 = vmul.f32 %v1176, %v399
        %v1178 = vmul.f32 %v1176, %v400
        %1181 = vrot.lane.b32.xlu0 %v1177, 126
        %v1182 = vpop.permute.xlu0 %1181
        %1183 = vrot.lane.b32.xlu0 %v1178, 126
        %v1184 = vpop.permute.xlu0 %1183
        %v1187 = vadd.f32 %v1173, %v1182
        %v1188 = vadd.f32 %v1174, %v1184
        %s1189 = sld [smem:[#allocation9 + $0x45]]
        %v1190 = vstv %s1189
        %v1191 = vmul.f32 %v1190, %v401
        %v1192 = vmul.f32 %v1190, %v402
        %v1193 = vadd.f32 %v1187, %v1191
        %v1194 = vadd.f32 %v1188, %v1192
        %s1195 = sld [smem:[#allocation9 + $0x46]]
        %v1196 = vstv %s1195
        %v1197 = vmul.f32 %v1196, %v401
        %v1198 = vmul.f32 %v1196, %v402
        %1201 = vrot.lane.b32.xlu0 %v1197, 127
        %v1202 = vpop.permute.xlu0 %1201
        %1203 = vrot.lane.b32.xlu0 %v1198, 127
        %v1204 = vpop.permute.xlu0 %1203
        %v1207 = vadd.f32 %v1193, %v1202
        %v1208 = vadd.f32 %v1194, %v1204
        %s1209 = sld [smem:[#allocation9 + $0x47]]
        %v1210 = vstv %s1209
        %v1211 = vmul.f32 %v1210, %v401
        %v1212 = vmul.f32 %v1210, %v402
        %1215 = vrot.lane.b32.xlu0 %v1211, 126
        %v1216 = vpop.permute.xlu0 %1215
        %1217 = vrot.lane.b32.xlu0 %v1212, 126
        %v1218 = vpop.permute.xlu0 %1217
        %v1221 = vadd.f32 %v1207, %v1216
        %v1222 = vadd.f32 %v1208, %v1218
        %s1223 = sld [smem:[#allocation10 + $0x1]]
        %v1224 = vstv %s1223
        %v1225 = vadd.f32 %v1221, %v1224
        %v1226 = vadd.f32 %v1222, %v1224
        %s1227 = sld [smem:[#allocation9 + $0x48]]
        %v1228 = vstv %s1227
        %v1229 = vmul.f32 %v1228, %v376
        %v1230 = vmul.f32 %v1228, %v377
        %v1231 = vadd.f32 %v1229, 0.0
        %v1232 = vadd.f32 %v1230, 0.0
        %s1233 = sld [smem:[#allocation9 + $0x49]]
        %v1234 = vstv %s1233
        %v1235 = vmul.f32 %v1234, %v376
        %v1236 = vmul.f32 %v1234, %v377
        %1239 = vrot.lane.b32.xlu0 %v1235, 127
        %v1240 = vpop.permute.xlu0 %1239
        %1241 = vrot.lane.b32.xlu0 %v1236, 127
        %v1242 = vpop.permute.xlu0 %1241
        %v1245 = vadd.f32 %v1231, %v1240
        %v1246 = vadd.f32 %v1232, %v1242
        %s1247 = sld [smem:[#allocation9 + $0x4a]]
        %v1248 = vstv %s1247
        %v1249 = vmul.f32 %v1248, %v376
        %v1250 = vmul.f32 %v1248, %v377
        %1253 = vrot.lane.b32.xlu0 %v1249, 126
        %v1254 = vpop.permute.xlu0 %1253
        %1255 = vrot.lane.b32.xlu0 %v1250, 126
        %v1256 = vpop.permute.xlu0 %1255
        %v1259 = vadd.f32 %v1245, %v1254
        %v1260 = vadd.f32 %v1246, %v1256
        %s1261 = sld [smem:[#allocation9 + $0x4b]]
        %v1262 = vstv %s1261
        %v1263 = vmul.f32 %v1262, %v378
        %v1264 = vmul.f32 %v1262, %v379
        %v1265 = vadd.f32 %v1259, %v1263
        %v1266 = vadd.f32 %v1260, %v1264
        %s1267 = sld [smem:[#allocation9 + $0x4c]]
        %v1268 = vstv %s1267
        %v1269 = vmul.f32 %v1268, %v378
        %v1270 = vmul.f32 %v1268, %v379
        %1273 = vrot.lane.b32.xlu0 %v1269, 127
        %v1274 = vpop.permute.xlu0 %1273
        %1275 = vrot.lane.b32.xlu0 %v1270, 127
        %v1276 = vpop.permute.xlu0 %1275
        %v1279 = vadd.f32 %v1265, %v1274
        %v1280 = vadd.f32 %v1266, %v1276
        %s1281 = sld [smem:[#allocation9 + $0x4d]]
        %v1282 = vstv %s1281
        %v1283 = vmul.f32 %v1282, %v378
        %v1284 = vmul.f32 %v1282, %v379
        %1287 = vrot.lane.b32.xlu0 %v1283, 126
        %v1288 = vpop.permute.xlu0 %1287
        %1289 = vrot.lane.b32.xlu0 %v1284, 126
        %v1290 = vpop.permute.xlu0 %1289
        %v1293 = vadd.f32 %v1279, %v1288
        %v1294 = vadd.f32 %v1280, %v1290
        %s1295 = sld [smem:[#allocation9 + $0x4e]]
        %v1296 = vstv %s1295
        %v1297 = vmul.f32 %v1296, %v380
        %v1298 = vmul.f32 %v1296, %v381
        %v1299 = vadd.f32 %v1293, %v1297
        %v1300 = vadd.f32 %v1294, %v1298
        %s1301 = sld [smem:[#allocation9 + $0x4f]]
        %v1302 = vstv %s1301
        %v1303 = vmul.f32 %v1302, %v380
        %v1304 = vmul.f32 %v1302, %v381
        %1307 = vrot.lane.b32.xlu0 %v1303, 127
        %v1308 = vpop.permute.xlu0 %1307
        %1309 = vrot.lane.b32.xlu0 %v1304, 127
        %v1310 = vpop.permute.xlu0 %1309
        %v1313 = vadd.f32 %v1299, %v1308
        %v1314 = vadd.f32 %v1300, %v1310
        %s1315 = sld [smem:[#allocation9 + $0x50]]
        %v1316 = vstv %s1315
        %v1317 = vmul.f32 %v1316, %v380
        %v1318 = vmul.f32 %v1316, %v381
        %1321 = vrot.lane.b32.xlu0 %v1317, 126
        %v1322 = vpop.permute.xlu0 %1321
        %1323 = vrot.lane.b32.xlu0 %v1318, 126
        %v1324 = vpop.permute.xlu0 %1323
        %v1327 = vadd.f32 %v1313, %v1322
        %v1328 = vadd.f32 %v1314, %v1324
        %s1329 = sld [smem:[#allocation9 + $0x51]]
        %v1330 = vstv %s1329
        %v1331 = vmul.f32 %v1330, %v383
        %v1332 = vmul.f32 %v1330, %v384
        %v1333 = vadd.f32 %v1327, %v1331
        %v1334 = vadd.f32 %v1328, %v1332
        %s1335 = sld [smem:[#allocation9 + $0x52]]
        %v1336 = vstv %s1335
        %v1337 = vmul.f32 %v1336, %v383
        %v1338 = vmul.f32 %v1336, %v384
        %1341 = vrot.lane.b32.xlu0 %v1337, 127
        %v1342 = vpop.permute.xlu0 %1341
        %1343 = vrot.lane.b32.xlu0 %v1338, 127
        %v1344 = vpop.permute.xlu0 %1343
        %v1347 = vadd.f32 %v1333, %v1342
        %v1348 = vadd.f32 %v1334, %v1344
        %s1349 = sld [smem:[#allocation9 + $0x53]]
        %v1350 = vstv %s1349
        %v1351 = vmul.f32 %v1350, %v383
        %v1352 = vmul.f32 %v1350, %v384
        %1355 = vrot.lane.b32.xlu0 %v1351, 126
        %v1356 = vpop.permute.xlu0 %1355
        %1357 = vrot.lane.b32.xlu0 %v1352, 126
        %v1358 = vpop.permute.xlu0 %1357
        %v1361 = vadd.f32 %v1347, %v1356
        %v1362 = vadd.f32 %v1348, %v1358
        %s1363 = sld [smem:[#allocation9 + $0x54]]
        %v1364 = vstv %s1363
        %v1365 = vmul.f32 %v1364, %v385
        %v1366 = vmul.f32 %v1364, %v386
        %v1367 = vadd.f32 %v1361, %v1365
        %v1368 = vadd.f32 %v1362, %v1366
        %s1369 = sld [smem:[#allocation9 + $0x55]]
        %v1370 = vstv %s1369
        %v1371 = vmul.f32 %v1370, %v385
        %v1372 = vmul.f32 %v1370, %v386
        %1375 = vrot.lane.b32.xlu0 %v1371, 127
        %v1376 = vpop.permute.xlu0 %1375
        %1377 = vrot.lane.b32.xlu0 %v1372, 127
        %v1378 = vpop.permute.xlu0 %1377
        %v1381 = vadd.f32 %v1367, %v1376
        %v1382 = vadd.f32 %v1368, %v1378
        %s1383 = sld [smem:[#allocation9 + $0x56]]
        %v1384 = vstv %s1383
        %v1385 = vmul.f32 %v1384, %v385
        %v1386 = vmul.f32 %v1384, %v386
        %1389 = vrot.lane.b32.xlu0 %v1385, 126
        %v1390 = vpop.permute.xlu0 %1389
        %1391 = vrot.lane.b32.xlu0 %v1386, 126
        %v1392 = vpop.permute.xlu0 %1391
        %v1395 = vadd.f32 %v1381, %v1390
        %v1396 = vadd.f32 %v1382, %v1392
        %s1397 = sld [smem:[#allocation9 + $0x57]]
        %v1398 = vstv %s1397
        %v1399 = vmul.f32 %v1398, %v387
        %v1400 = vmul.f32 %v1398, %v388
        %v1401 = vadd.f32 %v1395, %v1399
        %v1402 = vadd.f32 %v1396, %v1400
        %s1403 = sld [smem:[#allocation9 + $0x58]]
        %v1404 = vstv %s1403
        %v1405 = vmul.f32 %v1404, %v387
        %v1406 = vmul.f32 %v1404, %v388
        %1409 = vrot.lane.b32.xlu0 %v1405, 127
        %v1410 = vpop.permute.xlu0 %1409
        %1411 = vrot.lane.b32.xlu0 %v1406, 127
        %v1412 = vpop.permute.xlu0 %1411
        %v1415 = vadd.f32 %v1401, %v1410
        %v1416 = vadd.f32 %v1402, %v1412
        %s1417 = sld [smem:[#allocation9 + $0x59]]
        %v1418 = vstv %s1417
        %v1419 = vmul.f32 %v1418, %v387
        %v1420 = vmul.f32 %v1418, %v388
        %1423 = vrot.lane.b32.xlu0 %v1419, 126
        %v1424 = vpop.permute.xlu0 %1423
        %1425 = vrot.lane.b32.xlu0 %v1420, 126
        %v1426 = vpop.permute.xlu0 %1425
        %v1429 = vadd.f32 %v1415, %v1424
        %v1430 = vadd.f32 %v1416, %v1426
        %s1431 = sld [smem:[#allocation9 + $0x5a]]
        %v1432 = vstv %s1431
        %v1433 = vmul.f32 %v1432, %v390
        %v1434 = vmul.f32 %v1432, %v391
        %v1435 = vadd.f32 %v1429, %v1433
        %v1436 = vadd.f32 %v1430, %v1434
        %s1437 = sld [smem:[#allocation9 + $0x5b]]
        %v1438 = vstv %s1437
        %v1439 = vmul.f32 %v1438, %v390
        %v1440 = vmul.f32 %v1438, %v391
        %1443 = vrot.lane.b32.xlu0 %v1439, 127
        %v1444 = vpop.permute.xlu0 %1443
        %1445 = vrot.lane.b32.xlu0 %v1440, 127
        %v1446 = vpop.permute.xlu0 %1445
        %v1449 = vadd.f32 %v1435, %v1444
        %v1450 = vadd.f32 %v1436, %v1446
        %s1451 = sld [smem:[#allocation9 + $0x5c]]
        %v1452 = vstv %s1451
        %v1453 = vmul.f32 %v1452, %v390
        %v1454 = vmul.f32 %v1452, %v391
        %1457 = vrot.lane.b32.xlu0 %v1453, 126
        %v1458 = vpop.permute.xlu0 %1457
        %1459 = vrot.lane.b32.xlu0 %v1454, 126
        %v1460 = vpop.permute.xlu0 %1459
        %v1463 = vadd.f32 %v1449, %v1458
        %v1464 = vadd.f32 %v1450, %v1460
        %s1465 = sld [smem:[#allocation9 + $0x5d]]
        %v1466 = vstv %s1465
        %v1467 = vmul.f32 %v1466, %v392
        %v1468 = vmul.f32 %v1466, %v393
        %v1469 = vadd.f32 %v1463, %v1467
        %v1470 = vadd.f32 %v1464, %v1468
        %s1471 = sld [smem:[#allocation9 + $0x5e]]
        %v1472 = vstv %s1471
        %v1473 = vmul.f32 %v1472, %v392
        %v1474 = vmul.f32 %v1472, %v393
        %1477 = vrot.lane.b32.xlu0 %v1473, 127
        %v1478 = vpop.permute.xlu0 %1477
        %1479 = vrot.lane.b32.xlu0 %v1474, 127
        %v1480 = vpop.permute.xlu0 %1479
        %v1483 = vadd.f32 %v1469, %v1478
        %v1484 = vadd.f32 %v1470, %v1480
        %s1485 = sld [smem:[#allocation9 + $0x5f]]
        %v1486 = vstv %s1485
        %v1487 = vmul.f32 %v1486, %v392
        %v1488 = vmul.f32 %v1486, %v393
        %1491 = vrot.lane.b32.xlu0 %v1487, 126
        %v1492 = vpop.permute.xlu0 %1491
        %1493 = vrot.lane.b32.xlu0 %v1488, 126
        %v1494 = vpop.permute.xlu0 %1493
        %v1497 = vadd.f32 %v1483, %v1492
        %v1498 = vadd.f32 %v1484, %v1494
        %s1499 = sld [smem:[#allocation9 + $0x60]]
        %v1500 = vstv %s1499
        %v1501 = vmul.f32 %v1500, %v394
        %v1502 = vmul.f32 %v1500, %v395
        %v1503 = vadd.f32 %v1497, %v1501
        %v1504 = vadd.f32 %v1498, %v1502
        %s1505 = sld [smem:[#allocation9 + $0x61]]
        %v1506 = vstv %s1505
        %v1507 = vmul.f32 %v1506, %v394
        %v1508 = vmul.f32 %v1506, %v395
        %1511 = vrot.lane.b32.xlu0 %v1507, 127
        %v1512 = vpop.permute.xlu0 %1511
        %1513 = vrot.lane.b32.xlu0 %v1508, 127
        %v1514 = vpop.permute.xlu0 %1513
        %v1517 = vadd.f32 %v1503, %v1512
        %v1518 = vadd.f32 %v1504, %v1514
        %s1519 = sld [smem:[#allocation9 + $0x62]]
        %v1520 = vstv %s1519
        %v1521 = vmul.f32 %v1520, %v394
        %v1522 = vmul.f32 %v1520, %v395
        %1525 = vrot.lane.b32.xlu0 %v1521, 126
        %v1526 = vpop.permute.xlu0 %1525
        %1527 = vrot.lane.b32.xlu0 %v1522, 126
        %v1528 = vpop.permute.xlu0 %1527
        %v1531 = vadd.f32 %v1517, %v1526
        %v1532 = vadd.f32 %v1518, %v1528
        %s1533 = sld [smem:[#allocation9 + $0x63]]
        %v1534 = vstv %s1533
        %v1535 = vmul.f32 %v1534, %v397
        %v1536 = vmul.f32 %v1534, %v398
        %v1537 = vadd.f32 %v1531, %v1535
        %v1538 = vadd.f32 %v1532, %v1536
        %s1539 = sld [smem:[#allocation9 + $0x64]]
        %v1540 = vstv %s1539
        %v1541 = vmul.f32 %v1540, %v397
        %v1542 = vmul.f32 %v1540, %v398
        %1545 = vrot.lane.b32.xlu0 %v1541, 127
        %v1546 = vpop.permute.xlu0 %1545
        %1547 = vrot.lane.b32.xlu0 %v1542, 127
        %v1548 = vpop.permute.xlu0 %1547
        %v1551 = vadd.f32 %v1537, %v1546
        %v1552 = vadd.f32 %v1538, %v1548
        %s1553 = sld [smem:[#allocation9 + $0x65]]
        %v1554 = vstv %s1553
        %v1555 = vmul.f32 %v1554, %v397
        %v1556 = vmul.f32 %v1554, %v398
        %1559 = vrot.lane.b32.xlu0 %v1555, 126
        %v1560 = vpop.permute.xlu0 %1559
        %1561 = vrot.lane.b32.xlu0 %v1556, 126
        %v1562 = vpop.permute.xlu0 %1561
        %v1565 = vadd.f32 %v1551, %v1560
        %v1566 = vadd.f32 %v1552, %v1562
        %s1567 = sld [smem:[#allocation9 + $0x66]]
        %v1568 = vstv %s1567
        %v1569 = vmul.f32 %v1568, %v399
        %v1570 = vmul.f32 %v1568, %v400
        %v1571 = vadd.f32 %v1565, %v1569
        %v1572 = vadd.f32 %v1566, %v1570
        %s1573 = sld [smem:[#allocation9 + $0x67]]
        %v1574 = vstv %s1573
        %v1575 = vmul.f32 %v1574, %v399
        %v1576 = vmul.f32 %v1574, %v400
        %1579 = vrot.lane.b32.xlu0 %v1575, 127
        %v1580 = vpop.permute.xlu0 %1579
        %1581 = vrot.lane.b32.xlu0 %v1576, 127
        %v1582 = vpop.permute.xlu0 %1581
        %v1585 = vadd.f32 %v1571, %v1580
        %v1586 = vadd.f32 %v1572, %v1582
        %s1587 = sld [smem:[#allocation9 + $0x68]]
        %v1588 = vstv %s1587
        %v1589 = vmul.f32 %v1588, %v399
        %v1590 = vmul.f32 %v1588, %v400
        %1593 = vrot.lane.b32.xlu0 %v1589, 126
        %v1594 = vpop.permute.xlu0 %1593
        %1595 = vrot.lane.b32.xlu0 %v1590, 126
        %v1596 = vpop.permute.xlu0 %1595
        %v1599 = vadd.f32 %v1585, %v1594
        %v1600 = vadd.f32 %v1586, %v1596
        %s1601 = sld [smem:[#allocation9 + $0x69]]
        %v1602 = vstv %s1601
        %v1603 = vmul.f32 %v1602, %v401
        %v1604 = vmul.f32 %v1602, %v402
        %v1605 = vadd.f32 %v1599, %v1603
        %v1606 = vadd.f32 %v1600, %v1604
        %s1607 = sld [smem:[#allocation9 + $0x6a]]
        %v1608 = vstv %s1607
        %v1609 = vmul.f32 %v1608, %v401
        %v1610 = vmul.f32 %v1608, %v402
        %1613 = vrot.lane.b32.xlu0 %v1609, 127
        %v1614 = vpop.permute.xlu0 %1613
        %1615 = vrot.lane.b32.xlu0 %v1610, 127
        %v1616 = vpop.permute.xlu0 %1615
        %v1619 = vadd.f32 %v1605, %v1614
        %v1620 = vadd.f32 %v1606, %v1616
        %s1621 = sld [smem:[#allocation9 + $0x6b]]
        %v1622 = vstv %s1621
        %v1623 = vmul.f32 %v1622, %v401
        %v1624 = vmul.f32 %v1622, %v402
        %1627 = vrot.lane.b32.xlu0 %v1623, 126
        %v1628 = vpop.permute.xlu0 %1627
        %1629 = vrot.lane.b32.xlu0 %v1624, 126
        %v1630 = vpop.permute.xlu0 %1629
        %v1633 = vadd.f32 %v1619, %v1628
        %v1634 = vadd.f32 %v1620, %v1630
        %s1635 = sld [smem:[#allocation10 + $0x2]]
        %v1636 = vstv %s1635
        %v1637 = vadd.f32 %v1633, %v1636
        %v1638 = vadd.f32 %v1634, %v1636
        %s1639 = sld [smem:[#allocation9 + $0x6c]]
        %v1640 = vstv %s1639
        %v1641 = vmul.f32 %v1640, %v376
        %v1642 = vmul.f32 %v1640, %v377
        %v1643 = vadd.f32 %v1641, 0.0
        %v1644 = vadd.f32 %v1642, 0.0
        %s1645 = sld [smem:[#allocation9 + $0x6d]]
        %v1646 = vstv %s1645
        %v1647 = vmul.f32 %v1646, %v376
        %v1648 = vmul.f32 %v1646, %v377
        %1651 = vrot.lane.b32.xlu0 %v1647, 127
        %v1652 = vpop.permute.xlu0 %1651
        %1653 = vrot.lane.b32.xlu0 %v1648, 127
        %v1654 = vpop.permute.xlu0 %1653
        %v1657 = vadd.f32 %v1643, %v1652
        %v1658 = vadd.f32 %v1644, %v1654
        %s1659 = sld [smem:[#allocation9 + $0x6e]]
        %v1660 = vstv %s1659
        %v1661 = vmul.f32 %v1660, %v376
        %v1662 = vmul.f32 %v1660, %v377
        %1665 = vrot.lane.b32.xlu0 %v1661, 126
        %v1666 = vpop.permute.xlu0 %1665
        %1667 = vrot.lane.b32.xlu0 %v1662, 126
        %v1668 = vpop.permute.xlu0 %1667
        %v1671 = vadd.f32 %v1657, %v1666
        %v1672 = vadd.f32 %v1658, %v1668
        %s1673 = sld [smem:[#allocation9 + $0x6f]]
        %v1674 = vstv %s1673
        %v1675 = vmul.f32 %v1674, %v378
        %v1676 = vmul.f32 %v1674, %v379
        %v1677 = vadd.f32 %v1671, %v1675
        %v1678 = vadd.f32 %v1672, %v1676
        %s1679 = sld [smem:[#allocation9 + $0x70]]
        %v1680 = vstv %s1679
        %v1681 = vmul.f32 %v1680, %v378
        %v1682 = vmul.f32 %v1680, %v379
        %1685 = vrot.lane.b32.xlu0 %v1681, 127
        %v1686 = vpop.permute.xlu0 %1685
        %1687 = vrot.lane.b32.xlu0 %v1682, 127
        %v1688 = vpop.permute.xlu0 %1687
        %v1691 = vadd.f32 %v1677, %v1686
        %v1692 = vadd.f32 %v1678, %v1688
        %s1693 = sld [smem:[#allocation9 + $0x71]]
        %v1694 = vstv %s1693
        %v1695 = vmul.f32 %v1694, %v378
        %v1696 = vmul.f32 %v1694, %v379
        %1699 = vrot.lane.b32.xlu0 %v1695, 126
        %v1700 = vpop.permute.xlu0 %1699
        %1701 = vrot.lane.b32.xlu0 %v1696, 126
        %v1702 = vpop.permute.xlu0 %1701
        %v1705 = vadd.f32 %v1691, %v1700
        %v1706 = vadd.f32 %v1692, %v1702
        %s1707 = sld [smem:[#allocation9 + $0x72]]
        %v1708 = vstv %s1707
        %v1709 = vmul.f32 %v1708, %v380
        %v1710 = vmul.f32 %v1708, %v381
        %v1711 = vadd.f32 %v1705, %v1709
        %v1712 = vadd.f32 %v1706, %v1710
        %s1713 = sld [smem:[#allocation9 + $0x73]]
        %v1714 = vstv %s1713
        %v1715 = vmul.f32 %v1714, %v380
        %v1716 = vmul.f32 %v1714, %v381
        %1719 = vrot.lane.b32.xlu0 %v1715, 127
        %v1720 = vpop.permute.xlu0 %1719
        %1721 = vrot.lane.b32.xlu0 %v1716, 127
        %v1722 = vpop.permute.xlu0 %1721
        %v1725 = vadd.f32 %v1711, %v1720
        %v1726 = vadd.f32 %v1712, %v1722
        %s1727 = sld [smem:[#allocation9 + $0x74]]
        %v1728 = vstv %s1727
        %v1729 = vmul.f32 %v1728, %v380
        %v1730 = vmul.f32 %v1728, %v381
        %1733 = vrot.lane.b32.xlu0 %v1729, 126
        %v1734 = vpop.permute.xlu0 %1733
        %1735 = vrot.lane.b32.xlu0 %v1730, 126
        %v1736 = vpop.permute.xlu0 %1735
        %v1739 = vadd.f32 %v1725, %v1734
        %v1740 = vadd.f32 %v1726, %v1736
        %s1741 = sld [smem:[#allocation9 + $0x75]]
        %v1742 = vstv %s1741
        %v1743 = vmul.f32 %v1742, %v383
        %v1744 = vmul.f32 %v1742, %v384
        %v1745 = vadd.f32 %v1739, %v1743
        %v1746 = vadd.f32 %v1740, %v1744
        %s1747 = sld [smem:[#allocation9 + $0x76]]
        %v1748 = vstv %s1747
        %v1749 = vmul.f32 %v1748, %v383
        %v1750 = vmul.f32 %v1748, %v384
        %1753 = vrot.lane.b32.xlu0 %v1749, 127
        %v1754 = vpop.permute.xlu0 %1753
        %1755 = vrot.lane.b32.xlu0 %v1750, 127
        %v1756 = vpop.permute.xlu0 %1755
        %v1759 = vadd.f32 %v1745, %v1754
        %v1760 = vadd.f32 %v1746, %v1756
        %s1761 = sld [smem:[#allocation9 + $0x77]]
        %v1762 = vstv %s1761
        %v1763 = vmul.f32 %v1762, %v383
        %v1764 = vmul.f32 %v1762, %v384
        %1767 = vrot.lane.b32.xlu0 %v1763, 126
        %v1768 = vpop.permute.xlu0 %1767
        %1769 = vrot.lane.b32.xlu0 %v1764, 126
        %v1770 = vpop.permute.xlu0 %1769
        %v1773 = vadd.f32 %v1759, %v1768
        %v1774 = vadd.f32 %v1760, %v1770
        %s1775 = sld [smem:[#allocation9 + $0x78]]
        %v1776 = vstv %s1775
        %v1777 = vmul.f32 %v1776, %v385
        %v1778 = vmul.f32 %v1776, %v386
        %v1779 = vadd.f32 %v1773, %v1777
        %v1780 = vadd.f32 %v1774, %v1778
        %s1781 = sld [smem:[#allocation9 + $0x79]]
        %v1782 = vstv %s1781
        %v1783 = vmul.f32 %v1782, %v385
        %v1784 = vmul.f32 %v1782, %v386
        %1787 = vrot.lane.b32.xlu0 %v1783, 127
        %v1788 = vpop.permute.xlu0 %1787
        %1789 = vrot.lane.b32.xlu0 %v1784, 127
        %v1790 = vpop.permute.xlu0 %1789
        %v1793 = vadd.f32 %v1779, %v1788
        %v1794 = vadd.f32 %v1780, %v1790
        %s1795 = sld [smem:[#allocation9 + $0x7a]]
        %v1796 = vstv %s1795
        %v1797 = vmul.f32 %v1796, %v385
        %v1798 = vmul.f32 %v1796, %v386
        %1801 = vrot.lane.b32.xlu0 %v1797, 126
        %v1802 = vpop.permute.xlu0 %1801
        %1803 = vrot.lane.b32.xlu0 %v1798, 126
        %v1804 = vpop.permute.xlu0 %1803
        %v1807 = vadd.f32 %v1793, %v1802
        %v1808 = vadd.f32 %v1794, %v1804
        %s1809 = sld [smem:[#allocation9 + $0x7b]]
        %v1810 = vstv %s1809
        %v1811 = vmul.f32 %v1810, %v387
        %v1812 = vmul.f32 %v1810, %v388
        %v1813 = vadd.f32 %v1807, %v1811
        %v1814 = vadd.f32 %v1808, %v1812
        %s1815 = sld [smem:[#allocation9 + $0x7c]]
        %v1816 = vstv %s1815
        %v1817 = vmul.f32 %v1816, %v387
        %v1818 = vmul.f32 %v1816, %v388
        %1821 = vrot.lane.b32.xlu0 %v1817, 127
        %v1822 = vpop.permute.xlu0 %1821
        %1823 = vrot.lane.b32.xlu0 %v1818, 127
        %v1824 = vpop.permute.xlu0 %1823
        %v1827 = vadd.f32 %v1813, %v1822
        %v1828 = vadd.f32 %v1814, %v1824
        %s1829 = sld [smem:[#allocation9 + $0x7d]]
        %v1830 = vstv %s1829
        %v1831 = vmul.f32 %v1830, %v387
        %v1832 = vmul.f32 %v1830, %v388
        %1835 = vrot.lane.b32.xlu0 %v1831, 126
        %v1836 = vpop.permute.xlu0 %1835
        %1837 = vrot.lane.b32.xlu0 %v1832, 126
        %v1838 = vpop.permute.xlu0 %1837
        %v1841 = vadd.f32 %v1827, %v1836
        %v1842 = vadd.f32 %v1828, %v1838
        %s1843 = sld [smem:[#allocation9 + $0x7e]]
        %v1844 = vstv %s1843
        %v1845 = vmul.f32 %v1844, %v390
        %v1846 = vmul.f32 %v1844, %v391
        %v1847 = vadd.f32 %v1841, %v1845
        %v1848 = vadd.f32 %v1842, %v1846
        %s1849 = sld [smem:[#allocation9 + $0x7f]]
        %v1850 = vstv %s1849
        %v1851 = vmul.f32 %v1850, %v390
        %v1852 = vmul.f32 %v1850, %v391
        %1855 = vrot.lane.b32.xlu0 %v1851, 127
        %v1856 = vpop.permute.xlu0 %1855
        %1857 = vrot.lane.b32.xlu0 %v1852, 127
        %v1858 = vpop.permute.xlu0 %1857
        %v1861 = vadd.f32 %v1847, %v1856
        %v1862 = vadd.f32 %v1848, %v1858
        %s1863 = sld [smem:[#allocation9 + $0x80]]
        %v1864 = vstv %s1863
        %v1865 = vmul.f32 %v1864, %v390
        %v1866 = vmul.f32 %v1864, %v391
        %1869 = vrot.lane.b32.xlu0 %v1865, 126
        %v1870 = vpop.permute.xlu0 %1869
        %1871 = vrot.lane.b32.xlu0 %v1866, 126
        %v1872 = vpop.permute.xlu0 %1871
        %v1875 = vadd.f32 %v1861, %v1870
        %v1876 = vadd.f32 %v1862, %v1872
        %s1877 = sld [smem:[#allocation9 + $0x81]]
        %v1878 = vstv %s1877
        %v1879 = vmul.f32 %v1878, %v392
        %v1880 = vmul.f32 %v1878, %v393
        %v1881 = vadd.f32 %v1875, %v1879
        %v1882 = vadd.f32 %v1876, %v1880
        %s1883 = sld [smem:[#allocation9 + $0x82]]
        %v1884 = vstv %s1883
        %v1885 = vmul.f32 %v1884, %v392
        %v1886 = vmul.f32 %v1884, %v393
        %1889 = vrot.lane.b32.xlu0 %v1885, 127
        %v1890 = vpop.permute.xlu0 %1889
        %1891 = vrot.lane.b32.xlu0 %v1886, 127
        %v1892 = vpop.permute.xlu0 %1891
        %v1895 = vadd.f32 %v1881, %v1890
        %v1896 = vadd.f32 %v1882, %v1892
        %s1897 = sld [smem:[#allocation9 + $0x83]]
        %v1898 = vstv %s1897
        %v1899 = vmul.f32 %v1898, %v392
        %v1900 = vmul.f32 %v1898, %v393
        %1903 = vrot.lane.b32.xlu0 %v1899, 126
        %v1904 = vpop.permute.xlu0 %1903
        %1905 = vrot.lane.b32.xlu0 %v1900, 126
        %v1906 = vpop.permute.xlu0 %1905
        %v1909 = vadd.f32 %v1895, %v1904
        %v1910 = vadd.f32 %v1896, %v1906
        %s1911 = sld [smem:[#allocation9 + $0x84]]
        %v1912 = vstv %s1911
        %v1913 = vmul.f32 %v1912, %v394
        %v1914 = vmul.f32 %v1912, %v395
        %v1915 = vadd.f32 %v1909, %v1913
        %v1916 = vadd.f32 %v1910, %v1914
        %s1917 = sld [smem:[#allocation9 + $0x85]]
        %v1918 = vstv %s1917
        %v1919 = vmul.f32 %v1918, %v394
        %v1920 = vmul.f32 %v1918, %v395
        %1923 = vrot.lane.b32.xlu0 %v1919, 127
        %v1924 = vpop.permute.xlu0 %1923
        %1925 = vrot.lane.b32.xlu0 %v1920, 127
        %v1926 = vpop.permute.xlu0 %1925
        %v1929 = vadd.f32 %v1915, %v1924
        %v1930 = vadd.f32 %v1916, %v1926
        %s1931 = sld [smem:[#allocation9 + $0x86]]
        %v1932 = vstv %s1931
        %v1933 = vmul.f32 %v1932, %v394
        %v1934 = vmul.f32 %v1932, %v395
        %1937 = vrot.lane.b32.xlu0 %v1933, 126
        %v1938 = vpop.permute.xlu0 %1937
        %1939 = vrot.lane.b32.xlu0 %v1934, 126
        %v1940 = vpop.permute.xlu0 %1939
        %v1943 = vadd.f32 %v1929, %v1938
        %v1944 = vadd.f32 %v1930, %v1940
        %s1945 = sld [smem:[#allocation9 + $0x87]]
        %v1946 = vstv %s1945
        %v1947 = vmul.f32 %v1946, %v397
        %v1948 = vmul.f32 %v1946, %v398
        %v1949 = vadd.f32 %v1943, %v1947
        %v1950 = vadd.f32 %v1944, %v1948
        %s1951 = sld [smem:[#allocation9 + $0x88]]
        %v1952 = vstv %s1951
        %v1953 = vmul.f32 %v1952, %v397
        %v1954 = vmul.f32 %v1952, %v398
        %1957 = vrot.lane.b32.xlu0 %v1953, 127
        %v1958 = vpop.permute.xlu0 %1957
        %1959 = vrot.lane.b32.xlu0 %v1954, 127
        %v1960 = vpop.permute.xlu0 %1959
        %v1963 = vadd.f32 %v1949, %v1958
        %v1964 = vadd.f32 %v1950, %v1960
        %s1965 = sld [smem:[#allocation9 + $0x89]]
        %v1966 = vstv %s1965
        %v1967 = vmul.f32 %v1966, %v397
        %v1968 = vmul.f32 %v1966, %v398
        %1971 = vrot.lane.b32.xlu0 %v1967, 126
        %v1972 = vpop.permute.xlu0 %1971
        %1973 = vrot.lane.b32.xlu0 %v1968, 126
        %v1974 = vpop.permute.xlu0 %1973
        %v1977 = vadd.f32 %v1963, %v1972
        %v1978 = vadd.f32 %v1964, %v1974
        %s1979 = sld [smem:[#allocation9 + $0x8a]]
        %v1980 = vstv %s1979
        %v1981 = vmul.f32 %v1980, %v399
        %v1982 = vmul.f32 %v1980, %v400
        %v1983 = vadd.f32 %v1977, %v1981
        %v1984 = vadd.f32 %v1978, %v1982
        %s1985 = sld [smem:[#allocation9 + $0x8b]]
        %v1986 = vstv %s1985
        %v1987 = vmul.f32 %v1986, %v399
        %v1988 = vmul.f32 %v1986, %v400
        %1991 = vrot.lane.b32.xlu0 %v1987, 127
        %v1992 = vpop.permute.xlu0 %1991
        %1993 = vrot.lane.b32.xlu0 %v1988, 127
        %v1994 = vpop.permute.xlu0 %1993
        %v1997 = vadd.f32 %v1983, %v1992
        %v1998 = vadd.f32 %v1984, %v1994
        %s1999 = sld [smem:[#allocation9 + $0x8c]]
        %v2000 = vstv %s1999
        %v2001 = vmul.f32 %v2000, %v399
        %v2002 = vmul.f32 %v2000, %v400
        %2005 = vrot.lane.b32.xlu0 %v2001, 126
        %v2006 = vpop.permute.xlu0 %2005
        %2007 = vrot.lane.b32.xlu0 %v2002, 126
        %v2008 = vpop.permute.xlu0 %2007
        %v2011 = vadd.f32 %v1997, %v2006
        %v2012 = vadd.f32 %v1998, %v2008
        %s2013 = sld [smem:[#allocation9 + $0x8d]]
        %v2014 = vstv %s2013
        %v2015 = vmul.f32 %v2014, %v401
        %v2016 = vmul.f32 %v2014, %v402
        %v2017 = vadd.f32 %v2011, %v2015
        %v2018 = vadd.f32 %v2012, %v2016
        %s2019 = sld [smem:[#allocation9 + $0x8e]]
        %v2020 = vstv %s2019
        %v2021 = vmul.f32 %v2020, %v401
        %v2022 = vmul.f32 %v2020, %v402
        %2025 = vrot.lane.b32.xlu0 %v2021, 127
        %v2026 = vpop.permute.xlu0 %2025
        %2027 = vrot.lane.b32.xlu0 %v2022, 127
        %v2028 = vpop.permute.xlu0 %2027
        %v2031 = vadd.f32 %v2017, %v2026
        %v2032 = vadd.f32 %v2018, %v2028
        %s2033 = sld [smem:[#allocation9 + $0x8f]]
        %v2034 = vstv %s2033
        %v2035 = vmul.f32 %v2034, %v401
        %v2036 = vmul.f32 %v2034, %v402
        %2039 = vrot.lane.b32.xlu0 %v2035, 126
        %v2040 = vpop.permute.xlu0 %2039
        %2041 = vrot.lane.b32.xlu0 %v2036, 126
        %v2042 = vpop.permute.xlu0 %2041
        %v2045 = vadd.f32 %v2031, %v2040
        %v2046 = vadd.f32 %v2032, %v2042
        %s2047 = sld [smem:[#allocation10 + $0x3]]
        %v2048 = vstv %s2047
        %v2049 = vadd.f32 %v2045, %v2048
        %v2050 = vadd.f32 %v2046, %v2048
        %v2051 = vmax.f32 %v813, 0.0
        %v2052 = vmax.f32 %v814, 0.0
        %2055 = vrot.lane.b32.xlu0 %v2051, 1
        %v2056 = vpop.permute.xlu0 %2055
        %2057 = vrot.lane.b32.xlu0 %v2052, 1
        %v2058 = vpop.permute.xlu0 %2057
        %2061 = vst.msk [vmem:[#allocation3 + $0x1] sm:$0xff] %vm355, %v2056
        %2062 = vst.msk [vmem:[#allocation3 + $0x9] sm:$0xff] %vm355, %v2058
        %v2063 = vmax.f32 %v1225, 0.0
        %v2064 = vmax.f32 %v1226, 0.0
        %2067 = vrot.lane.b32.xlu0 %v2063, 1
        %v2068 = vpop.permute.xlu0 %2067
        %2069 = vrot.lane.b32.xlu0 %v2064, 1
        %v2070 = vpop.permute.xlu0 %2069
        %s2073 = scalar_lea.vmem [#allocation3], 24
        %2074 = vst.msk [vmem:[%s2073 + $0x1] sm:$0xff] %vm355, %v2068
        %2075 = vst.msk [vmem:[%s2073 + $0x9] sm:$0xff] %vm355, %v2070
        %v2076 = vmax.f32 %v1637, 0.0
        %v2077 = vmax.f32 %v1638, 0.0
        %2080 = vrot.lane.b32.xlu0 %v2076, 1
        %v2081 = vpop.permute.xlu0 %2080
        %2082 = vrot.lane.b32.xlu0 %v2077, 1
        %v2083 = vpop.permute.xlu0 %2082
        %s2086 = scalar_lea.vmem [#allocation3], 48
        %2087 = vst.msk [vmem:[%s2086 + $0x1] sm:$0xff] %vm355, %v2081
        %2088 = vst.msk [vmem:[%s2086 + $0x9] sm:$0xff] %vm355, %v2083
        %v2089 = vmax.f32 %v2049, 0.0
        %v2090 = vmax.f32 %v2050, 0.0
        %2093 = vrot.lane.b32.xlu0 %v2089, 1
        %v2094 = vpop.permute.xlu0 %2093
        %2095 = vrot.lane.b32.xlu0 %v2090, 1
        %v2096 = vpop.permute.xlu0 %2095
        %s2099 = scalar_lea.vmem [#allocation3], 72
        %2100 = vst.msk [vmem:[%s2099 + $0x1] sm:$0xff] %vm355, %v2094
        %2101 = vst.msk [vmem:[%s2099 + $0x9] sm:$0xff] %vm355, %v2096
        %v2102 = vld [vmem:[#allocation3] sm:$0xff]
        %v2103 = vld [vmem:[#allocation3 + $0x8] sm:$0xff]
        %v2104 = vld [vmem:[#allocation3 + $0x1] sm:$0xff]
        %v2105 = vld [vmem:[#allocation3 + $0x9] sm:$0xff]
        %v2106 = vld [vmem:[#allocation3 + $0x2] sm:$0xff]
        %v2107 = vld [vmem:[#allocation3 + $0xa] sm:$0xff]
        %v2108 = vld [vmem:[%s2073] sm:$0xff]
        %v2109 = vld [vmem:[%s2073 + $0x8] sm:$0xff]
        %v2110 = vld [vmem:[%s2073 + $0x1] sm:$0xff]
        %v2111 = vld [vmem:[%s2073 + $0x9] sm:$0xff]
        %v2112 = vld [vmem:[%s2073 + $0x2] sm:$0xff]
        %v2113 = vld [vmem:[%s2073 + $0xa] sm:$0xff]
        %v2114 = vld [vmem:[%s2086] sm:$0xff]
        %v2115 = vld [vmem:[%s2086 + $0x8] sm:$0xff]
        %v2116 = vld [vmem:[%s2086 + $0x1] sm:$0xff]
        %v2117 = vld [vmem:[%s2086 + $0x9] sm:$0xff]
        %v2118 = vld [vmem:[%s2086 + $0x2] sm:$0xff]
        %v2119 = vld [vmem:[%s2086 + $0xa] sm:$0xff]
        %v2120 = vld [vmem:[%s2099] sm:$0xff]
        %v2121 = vld [vmem:[%s2099 + $0x8] sm:$0xff]
        %v2122 = vld [vmem:[%s2099 + $0x1] sm:$0xff]
        %v2123 = vld [vmem:[%s2099 + $0x9] sm:$0xff]
        %v2124 = vld [vmem:[%s2099 + $0x2] sm:$0xff]
        %v2125 = vld [vmem:[%s2099 + $0xa] sm:$0xff]
        %s2126 = sld [smem:[#allocation11]]
        %v2127 = vstv %s2126
        %v2128 = vmul.f32 %v2127, %v2102
        %v2129 = vmul.f32 %v2127, %v2103
        %v2130 = vadd.f32 %v2128, 0.0
        %v2131 = vadd.f32 %v2129, 0.0
        %s2132 = sld [smem:[#allocation11 + $0x1]]
        %v2133 = vstv %s2132
        %v2134 = vmul.f32 %v2133, %v2102
        %v2135 = vmul.f32 %v2133, %v2103
        %2138 = vrot.lane.b32.xlu0 %v2134, 127
        %v2139 = vpop.permute.xlu0 %2138
        %2140 = vrot.lane.b32.xlu0 %v2135, 127
        %v2141 = vpop.permute.xlu0 %2140
        %v2144 = vadd.f32 %v2130, %v2139
        %v2145 = vadd.f32 %v2131, %v2141
        %s2146 = sld [smem:[#allocation11 + $0x2]]
        %v2147 = vstv %s2146
        %v2148 = vmul.f32 %v2147, %v2102
        %v2149 = vmul.f32 %v2147, %v2103
        %2152 = vrot.lane.b32.xlu0 %v2148, 126
        %v2153 = vpop.permute.xlu0 %2152
        %2154 = vrot.lane.b32.xlu0 %v2149, 126
        %v2155 = vpop.permute.xlu0 %2154
        %v2158 = vadd.f32 %v2144, %v2153
        %v2159 = vadd.f32 %v2145, %v2155
        %s2160 = sld [smem:[#allocation11 + $0x3]]
        %v2161 = vstv %s2160
        %v2162 = vmul.f32 %v2161, %v2104
        %v2163 = vmul.f32 %v2161, %v2105
        %v2164 = vadd.f32 %v2158, %v2162
        %v2165 = vadd.f32 %v2159, %v2163
        %s2166 = sld [smem:[#allocation11 + $0x4]]
        %v2167 = vstv %s2166
        %v2168 = vmul.f32 %v2167, %v2104
        %v2169 = vmul.f32 %v2167, %v2105
        %2172 = vrot.lane.b32.xlu0 %v2168, 127
        %v2173 = vpop.permute.xlu0 %2172
        %2174 = vrot.lane.b32.xlu0 %v2169, 127
        %v2175 = vpop.permute.xlu0 %2174
        %v2178 = vadd.f32 %v2164, %v2173
        %v2179 = vadd.f32 %v2165, %v2175
        %s2180 = sld [smem:[#allocation11 + $0x5]]
        %v2181 = vstv %s2180
        %v2182 = vmul.f32 %v2181, %v2104
        %v2183 = vmul.f32 %v2181, %v2105
        %2186 = vrot.lane.b32.xlu0 %v2182, 126
        %v2187 = vpop.permute.xlu0 %2186
        %2188 = vrot.lane.b32.xlu0 %v2183, 126
        %v2189 = vpop.permute.xlu0 %2188
        %v2192 = vadd.f32 %v2178, %v2187
        %v2193 = vadd.f32 %v2179, %v2189
        %s2194 = sld [smem:[#allocation11 + $0x6]]
        %v2195 = vstv %s2194
        %v2196 = vmul.f32 %v2195, %v2106
        %v2197 = vmul.f32 %v2195, %v2107
        %v2198 = vadd.f32 %v2192, %v2196
        %v2199 = vadd.f32 %v2193, %v2197
        %s2200 = sld [smem:[#allocation11 + $0x7]]
        %v2201 = vstv %s2200
        %v2202 = vmul.f32 %v2201, %v2106
        %v2203 = vmul.f32 %v2201, %v2107
        %2206 = vrot.lane.b32.xlu0 %v2202, 127
        %v2207 = vpop.permute.xlu0 %2206
        %2208 = vrot.lane.b32.xlu0 %v2203, 127
        %v2209 = vpop.permute.xlu0 %2208
        %v2212 = vadd.f32 %v2198, %v2207
        %v2213 = vadd.f32 %v2199, %v2209
        %s2214 = sld [smem:[#allocation11 + $0x8]]
        %v2215 = vstv %s2214
        %v2216 = vmul.f32 %v2215, %v2106
        %v2217 = vmul.f32 %v2215, %v2107
        %2220 = vrot.lane.b32.xlu0 %v2216, 126
        %v2221 = vpop.permute.xlu0 %2220
        %2222 = vrot.lane.b32.xlu0 %v2217, 126
        %v2223 = vpop.permute.xlu0 %2222
        %v2226 = vadd.f32 %v2212, %v2221
        %v2227 = vadd.f32 %v2213, %v2223
        %s2228 = sld [smem:[#allocation11 + $0x9]]
        %v2229 = vstv %s2228
        %v2230 = vmul.f32 %v2229, %v2108
        %v2231 = vmul.f32 %v2229, %v2109
        %v2232 = vadd.f32 %v2226, %v2230
        %v2233 = vadd.f32 %v2227, %v2231
        %s2234 = sld [smem:[#allocation11 + $0xa]]
        %v2235 = vstv %s2234
        %v2236 = vmul.f32 %v2235, %v2108
        %v2237 = vmul.f32 %v2235, %v2109
        %2240 = vrot.lane.b32.xlu0 %v2236, 127
        %v2241 = vpop.permute.xlu0 %2240
        %2242 = vrot.lane.b32.xlu0 %v2237, 127
        %v2243 = vpop.permute.xlu0 %2242
        %v2246 = vadd.f32 %v2232, %v2241
        %v2247 = vadd.f32 %v2233, %v2243
        %s2248 = sld [smem:[#allocation11 + $0xb]]
        %v2249 = vstv %s2248
        %v2250 = vmul.f32 %v2249, %v2108
        %v2251 = vmul.f32 %v2249, %v2109
        %2254 = vrot.lane.b32.xlu0 %v2250, 126
        %v2255 = vpop.permute.xlu0 %2254
        %2256 = vrot.lane.b32.xlu0 %v2251, 126
        %v2257 = vpop.permute.xlu0 %2256
        %v2260 = vadd.f32 %v2246, %v2255
        %v2261 = vadd.f32 %v2247, %v2257
        %s2262 = sld [smem:[#allocation11 + $0xc]]
        %v2263 = vstv %s2262
        %v2264 = vmul.f32 %v2263, %v2110
        %v2265 = vmul.f32 %v2263, %v2111
        %v2266 = vadd.f32 %v2260, %v2264
        %v2267 = vadd.f32 %v2261, %v2265
        %s2268 = sld [smem:[#allocation11 + $0xd]]
        %v2269 = vstv %s2268
        %v2270 = vmul.f32 %v2269, %v2110
        %v2271 = vmul.f32 %v2269, %v2111
        %2274 = vrot.lane.b32.xlu0 %v2270, 127
        %v2275 = vpop.permute.xlu0 %2274
        %2276 = vrot.lane.b32.xlu0 %v2271, 127
        %v2277 = vpop.permute.xlu0 %2276
        %v2280 = vadd.f32 %v2266, %v2275
        %v2281 = vadd.f32 %v2267, %v2277
        %s2282 = sld [smem:[#allocation11 + $0xe]]
        %v2283 = vstv %s2282
        %v2284 = vmul.f32 %v2283, %v2110
        %v2285 = vmul.f32 %v2283, %v2111
        %2288 = vrot.lane.b32.xlu0 %v2284, 126
        %v2289 = vpop.permute.xlu0 %2288
        %2290 = vrot.lane.b32.xlu0 %v2285, 126
        %v2291 = vpop.permute.xlu0 %2290
        %v2294 = vadd.f32 %v2280, %v2289
        %v2295 = vadd.f32 %v2281, %v2291
        %s2296 = sld [smem:[#allocation11 + $0xf]]
        %v2297 = vstv %s2296
        %v2298 = vmul.f32 %v2297, %v2112
        %v2299 = vmul.f32 %v2297, %v2113
        %v2300 = vadd.f32 %v2294, %v2298
        %v2301 = vadd.f32 %v2295, %v2299
        %s2302 = sld [smem:[#allocation11 + $0x10]]
        %v2303 = vstv %s2302
        %v2304 = vmul.f32 %v2303, %v2112
        %v2305 = vmul.f32 %v2303, %v2113
        %2308 = vrot.lane.b32.xlu0 %v2304, 127
        %v2309 = vpop.permute.xlu0 %2308
        %2310 = vrot.lane.b32.xlu0 %v2305, 127
        %v2311 = vpop.permute.xlu0 %2310
        %v2314 = vadd.f32 %v2300, %v2309
        %v2315 = vadd.f32 %v2301, %v2311
        %s2316 = sld [smem:[#allocation11 + $0x11]]
        %v2317 = vstv %s2316
        %v2318 = vmul.f32 %v2317, %v2112
        %v2319 = vmul.f32 %v2317, %v2113
        %2322 = vrot.lane.b32.xlu0 %v2318, 126
        %v2323 = vpop.permute.xlu0 %2322
        %2324 = vrot.lane.b32.xlu0 %v2319, 126
        %v2325 = vpop.permute.xlu0 %2324
        %v2328 = vadd.f32 %v2314, %v2323
        %v2329 = vadd.f32 %v2315, %v2325
        %s2330 = sld [smem:[#allocation11 + $0x12]]
        %v2331 = vstv %s2330
        %v2332 = vmul.f32 %v2331, %v2114
        %v2333 = vmul.f32 %v2331, %v2115
        %v2334 = vadd.f32 %v2328, %v2332
        %v2335 = vadd.f32 %v2329, %v2333
        %s2336 = sld [smem:[#allocation11 + $0x13]]
        %v2337 = vstv %s2336
        %v2338 = vmul.f32 %v2337, %v2114
        %v2339 = vmul.f32 %v2337, %v2115
        %2342 = vrot.lane.b32.xlu0 %v2338, 127
        %v2343 = vpop.permute.xlu0 %2342
        %2344 = vrot.lane.b32.xlu0 %v2339, 127
        %v2345 = vpop.permute.xlu0 %2344
        %v2348 = vadd.f32 %v2334, %v2343
        %v2349 = vadd.f32 %v2335, %v2345
        %s2350 = sld [smem:[#allocation11 + $0x14]]
        %v2351 = vstv %s2350
        %v2352 = vmul.f32 %v2351, %v2114
        %v2353 = vmul.f32 %v2351, %v2115
        %2356 = vrot.lane.b32.xlu0 %v2352, 126
        %v2357 = vpop.permute.xlu0 %2356
        %2358 = vrot.lane.b32.xlu0 %v2353, 126
        %v2359 = vpop.permute.xlu0 %2358
        %v2362 = vadd.f32 %v2348, %v2357
        %v2363 = vadd.f32 %v2349, %v2359
        %s2364 = sld [smem:[#allocation11 + $0x15]]
        %v2365 = vstv %s2364
        %v2366 = vmul.f32 %v2365, %v2116
        %v2367 = vmul.f32 %v2365, %v2117
        %v2368 = vadd.f32 %v2362, %v2366
        %v2369 = vadd.f32 %v2363, %v2367
        %s2370 = sld [smem:[#allocation11 + $0x16]]
        %v2371 = vstv %s2370
        %v2372 = vmul.f32 %v2371, %v2116
        %v2373 = vmul.f32 %v2371, %v2117
        %2376 = vrot.lane.b32.xlu0 %v2372, 127
        %v2377 = vpop.permute.xlu0 %2376
        %2378 = vrot.lane.b32.xlu0 %v2373, 127
        %v2379 = vpop.permute.xlu0 %2378
        %v2382 = vadd.f32 %v2368, %v2377
        %v2383 = vadd.f32 %v2369, %v2379
        %s2384 = sld [smem:[#allocation11 + $0x17]]
        %v2385 = vstv %s2384
        %v2386 = vmul.f32 %v2385, %v2116
        %v2387 = vmul.f32 %v2385, %v2117
        %2390 = vrot.lane.b32.xlu0 %v2386, 126
        %v2391 = vpop.permute.xlu0 %2390
        %2392 = vrot.lane.b32.xlu0 %v2387, 126
        %v2393 = vpop.permute.xlu0 %2392
        %v2396 = vadd.f32 %v2382, %v2391
        %v2397 = vadd.f32 %v2383, %v2393
        %s2398 = sld [smem:[#allocation11 + $0x18]]
        %v2399 = vstv %s2398
        %v2400 = vmul.f32 %v2399, %v2118
        %v2401 = vmul.f32 %v2399, %v2119
        %v2402 = vadd.f32 %v2396, %v2400
        %v2403 = vadd.f32 %v2397, %v2401
        %s2404 = sld [smem:[#allocation11 + $0x19]]
        %v2405 = vstv %s2404
        %v2406 = vmul.f32 %v2405, %v2118
        %v2407 = vmul.f32 %v2405, %v2119
        %2410 = vrot.lane.b32.xlu0 %v2406, 127
        %v2411 = vpop.permute.xlu0 %2410
        %2412 = vrot.lane.b32.xlu0 %v2407, 127
        %v2413 = vpop.permute.xlu0 %2412
        %v2416 = vadd.f32 %v2402, %v2411
        %v2417 = vadd.f32 %v2403, %v2413
        %s2418 = sld [smem:[#allocation11 + $0x1a]]
        %v2419 = vstv %s2418
        %v2420 = vmul.f32 %v2419, %v2118
        %v2421 = vmul.f32 %v2419, %v2119
        %2424 = vrot.lane.b32.xlu0 %v2420, 126
        %v2425 = vpop.permute.xlu0 %2424
        %2426 = vrot.lane.b32.xlu0 %v2421, 126
        %v2427 = vpop.permute.xlu0 %2426
        %v2430 = vadd.f32 %v2416, %v2425
        %v2431 = vadd.f32 %v2417, %v2427
        %s2432 = sld [smem:[#allocation11 + $0x1b]]
        %v2433 = vstv %s2432
        %v2434 = vmul.f32 %v2433, %v2120
        %v2435 = vmul.f32 %v2433, %v2121
        %v2436 = vadd.f32 %v2430, %v2434
        %v2437 = vadd.f32 %v2431, %v2435
        %s2438 = sld [smem:[#allocation11 + $0x1c]]
        %v2439 = vstv %s2438
        %v2440 = vmul.f32 %v2439, %v2120
        %v2441 = vmul.f32 %v2439, %v2121
        %2444 = vrot.lane.b32.xlu0 %v2440, 127
        %v2445 = vpop.permute.xlu0 %2444
        %2446 = vrot.lane.b32.xlu0 %v2441, 127
        %v2447 = vpop.permute.xlu0 %2446
        %v2450 = vadd.f32 %v2436, %v2445
        %v2451 = vadd.f32 %v2437, %v2447
        %s2452 = sld [smem:[#allocation11 + $0x1d]]
        %v2453 = vstv %s2452
        %v2454 = vmul.f32 %v2453, %v2120
        %v2455 = vmul.f32 %v2453, %v2121
        %2458 = vrot.lane.b32.xlu0 %v2454, 126
        %v2459 = vpop.permute.xlu0 %2458
        %2460 = vrot.lane.b32.xlu0 %v2455, 126
        %v2461 = vpop.permute.xlu0 %2460
        %v2464 = vadd.f32 %v2450, %v2459
        %v2465 = vadd.f32 %v2451, %v2461
        %s2466 = sld [smem:[#allocation11 + $0x1e]]
        %v2467 = vstv %s2466
        %v2468 = vmul.f32 %v2467, %v2122
        %v2469 = vmul.f32 %v2467, %v2123
        %v2470 = vadd.f32 %v2464, %v2468
        %v2471 = vadd.f32 %v2465, %v2469
        %s2472 = sld [smem:[#allocation11 + $0x1f]]
        %v2473 = vstv %s2472
        %v2474 = vmul.f32 %v2473, %v2122
        %v2475 = vmul.f32 %v2473, %v2123
        %2478 = vrot.lane.b32.xlu0 %v2474, 127
        %v2479 = vpop.permute.xlu0 %2478
        %2480 = vrot.lane.b32.xlu0 %v2475, 127
        %v2481 = vpop.permute.xlu0 %2480
        %v2484 = vadd.f32 %v2470, %v2479
        %v2485 = vadd.f32 %v2471, %v2481
        %s2486 = sld [smem:[#allocation11 + $0x20]]
        %v2487 = vstv %s2486
        %v2488 = vmul.f32 %v2487, %v2122
        %v2489 = vmul.f32 %v2487, %v2123
        %2492 = vrot.lane.b32.xlu0 %v2488, 126
        %v2493 = vpop.permute.xlu0 %2492
        %2494 = vrot.lane.b32.xlu0 %v2489, 126
        %v2495 = vpop.permute.xlu0 %2494
        %v2498 = vadd.f32 %v2484, %v2493
        %v2499 = vadd.f32 %v2485, %v2495
        %s2500 = sld [smem:[#allocation11 + $0x21]]
        %v2501 = vstv %s2500
        %v2502 = vmul.f32 %v2501, %v2124
        %v2503 = vmul.f32 %v2501, %v2125
        %v2504 = vadd.f32 %v2498, %v2502
        %v2505 = vadd.f32 %v2499, %v2503
        %s2506 = sld [smem:[#allocation11 + $0x22]]
        %v2507 = vstv %s2506
        %v2508 = vmul.f32 %v2507, %v2124
        %v2509 = vmul.f32 %v2507, %v2125
        %2512 = vrot.lane.b32.xlu0 %v2508, 127
        %v2513 = vpop.permute.xlu0 %2512
        %2514 = vrot.lane.b32.xlu0 %v2509, 127
        %v2515 = vpop.permute.xlu0 %2514
        %v2518 = vadd.f32 %v2504, %v2513
        %v2519 = vadd.f32 %v2505, %v2515
        %s2520 = sld [smem:[#allocation11 + $0x23]]
        %v2521 = vstv %s2520
        %v2522 = vmul.f32 %v2521, %v2124
        %v2523 = vmul.f32 %v2521, %v2125
        %2526 = vrot.lane.b32.xlu0 %v2522, 126
        %v2527 = vpop.permute.xlu0 %2526
        %2528 = vrot.lane.b32.xlu0 %v2523, 126
        %v2529 = vpop.permute.xlu0 %2528
        %v2532 = vadd.f32 %v2518, %v2527
        %v2533 = vadd.f32 %v2519, %v2529
        %s2534 = sld [smem:[#allocation13]]
        %v2535 = vstv %s2534
        %v2536 = vadd.f32 %v2532, %v2535
        %v2537 = vadd.f32 %v2533, %v2535
        %s2538 = sld [smem:[#allocation11 + $0x24]]
        %v2539 = vstv %s2538
        %v2540 = vmul.f32 %v2539, %v2102
        %v2541 = vmul.f32 %v2539, %v2103
        %v2542 = vadd.f32 %v2540, 0.0
        %v2543 = vadd.f32 %v2541, 0.0
        %s2544 = sld [smem:[#allocation11 + $0x25]]
        %v2545 = vstv %s2544
        %v2546 = vmul.f32 %v2545, %v2102
        %v2547 = vmul.f32 %v2545, %v2103
        %2550 = vrot.lane.b32.xlu0 %v2546, 127
        %v2551 = vpop.permute.xlu0 %2550
        %2552 = vrot.lane.b32.xlu0 %v2547, 127
        %v2553 = vpop.permute.xlu0 %2552
        %v2556 = vadd.f32 %v2542, %v2551
        %v2557 = vadd.f32 %v2543, %v2553
        %s2558 = sld [smem:[#allocation11 + $0x26]]
        %v2559 = vstv %s2558
        %v2560 = vmul.f32 %v2559, %v2102
        %v2561 = vmul.f32 %v2559, %v2103
        %2564 = vrot.lane.b32.xlu0 %v2560, 126
        %v2565 = vpop.permute.xlu0 %2564
        %2566 = vrot.lane.b32.xlu0 %v2561, 126
        %v2567 = vpop.permute.xlu0 %2566
        %v2570 = vadd.f32 %v2556, %v2565
        %v2571 = vadd.f32 %v2557, %v2567
        %s2572 = sld [smem:[#allocation11 + $0x27]]
        %v2573 = vstv %s2572
        %v2574 = vmul.f32 %v2573, %v2104
        %v2575 = vmul.f32 %v2573, %v2105
        %v2576 = vadd.f32 %v2570, %v2574
        %v2577 = vadd.f32 %v2571, %v2575
        %s2578 = sld [smem:[#allocation11 + $0x28]]
        %v2579 = vstv %s2578
        %v2580 = vmul.f32 %v2579, %v2104
        %v2581 = vmul.f32 %v2579, %v2105
        %2584 = vrot.lane.b32.xlu0 %v2580, 127
        %v2585 = vpop.permute.xlu0 %2584
        %2586 = vrot.lane.b32.xlu0 %v2581, 127
        %v2587 = vpop.permute.xlu0 %2586
        %v2590 = vadd.f32 %v2576, %v2585
        %v2591 = vadd.f32 %v2577, %v2587
        %s2592 = sld [smem:[#allocation11 + $0x29]]
        %v2593 = vstv %s2592
        %v2594 = vmul.f32 %v2593, %v2104
        %v2595 = vmul.f32 %v2593, %v2105
        %2598 = vrot.lane.b32.xlu0 %v2594, 126
        %v2599 = vpop.permute.xlu0 %2598
        %2600 = vrot.lane.b32.xlu0 %v2595, 126
        %v2601 = vpop.permute.xlu0 %2600
        %v2604 = vadd.f32 %v2590, %v2599
        %v2605 = vadd.f32 %v2591, %v2601
        %s2606 = sld [smem:[#allocation11 + $0x2a]]
        %v2607 = vstv %s2606
        %v2608 = vmul.f32 %v2607, %v2106
        %v2609 = vmul.f32 %v2607, %v2107
        %v2610 = vadd.f32 %v2604, %v2608
        %v2611 = vadd.f32 %v2605, %v2609
        %s2612 = sld [smem:[#allocation11 + $0x2b]]
        %v2613 = vstv %s2612
        %v2614 = vmul.f32 %v2613, %v2106
        %v2615 = vmul.f32 %v2613, %v2107
        %2618 = vrot.lane.b32.xlu0 %v2614, 127
        %v2619 = vpop.permute.xlu0 %2618
        %2620 = vrot.lane.b32.xlu0 %v2615, 127
        %v2621 = vpop.permute.xlu0 %2620
        %v2624 = vadd.f32 %v2610, %v2619
        %v2625 = vadd.f32 %v2611, %v2621
        %s2626 = sld [smem:[#allocation11 + $0x2c]]
        %v2627 = vstv %s2626
        %v2628 = vmul.f32 %v2627, %v2106
        %v2629 = vmul.f32 %v2627, %v2107
        %2632 = vrot.lane.b32.xlu0 %v2628, 126
        %v2633 = vpop.permute.xlu0 %2632
        %2634 = vrot.lane.b32.xlu0 %v2629, 126
        %v2635 = vpop.permute.xlu0 %2634
        %v2638 = vadd.f32 %v2624, %v2633
        %v2639 = vadd.f32 %v2625, %v2635
        %s2640 = sld [smem:[#allocation11 + $0x2d]]
        %v2641 = vstv %s2640
        %v2642 = vmul.f32 %v2641, %v2108
        %v2643 = vmul.f32 %v2641, %v2109
        %v2644 = vadd.f32 %v2638, %v2642
        %v2645 = vadd.f32 %v2639, %v2643
        %s2646 = sld [smem:[#allocation11 + $0x2e]]
        %v2647 = vstv %s2646
        %v2648 = vmul.f32 %v2647, %v2108
        %v2649 = vmul.f32 %v2647, %v2109
        %2652 = vrot.lane.b32.xlu0 %v2648, 127
        %v2653 = vpop.permute.xlu0 %2652
        %2654 = vrot.lane.b32.xlu0 %v2649, 127
        %v2655 = vpop.permute.xlu0 %2654
        %v2658 = vadd.f32 %v2644, %v2653
        %v2659 = vadd.f32 %v2645, %v2655
        %s2660 = sld [smem:[#allocation11 + $0x2f]]
        %v2661 = vstv %s2660
        %v2662 = vmul.f32 %v2661, %v2108
        %v2663 = vmul.f32 %v2661, %v2109
        %2666 = vrot.lane.b32.xlu0 %v2662, 126
        %v2667 = vpop.permute.xlu0 %2666
        %2668 = vrot.lane.b32.xlu0 %v2663, 126
        %v2669 = vpop.permute.xlu0 %2668
        %v2672 = vadd.f32 %v2658, %v2667
        %v2673 = vadd.f32 %v2659, %v2669
        %s2674 = sld [smem:[#allocation11 + $0x30]]
        %v2675 = vstv %s2674
        %v2676 = vmul.f32 %v2675, %v2110
        %v2677 = vmul.f32 %v2675, %v2111
        %v2678 = vadd.f32 %v2672, %v2676
        %v2679 = vadd.f32 %v2673, %v2677
        %s2680 = sld [smem:[#allocation11 + $0x31]]
        %v2681 = vstv %s2680
        %v2682 = vmul.f32 %v2681, %v2110
        %v2683 = vmul.f32 %v2681, %v2111
        %2686 = vrot.lane.b32.xlu0 %v2682, 127
        %v2687 = vpop.permute.xlu0 %2686
        %2688 = vrot.lane.b32.xlu0 %v2683, 127
        %v2689 = vpop.permute.xlu0 %2688
        %v2692 = vadd.f32 %v2678, %v2687
        %v2693 = vadd.f32 %v2679, %v2689
        %s2694 = sld [smem:[#allocation11 + $0x32]]
        %v2695 = vstv %s2694
        %v2696 = vmul.f32 %v2695, %v2110
        %v2697 = vmul.f32 %v2695, %v2111
        %2700 = vrot.lane.b32.xlu0 %v2696, 126
        %v2701 = vpop.permute.xlu0 %2700
        %2702 = vrot.lane.b32.xlu0 %v2697, 126
        %v2703 = vpop.permute.xlu0 %2702
        %v2706 = vadd.f32 %v2692, %v2701
        %v2707 = vadd.f32 %v2693, %v2703
        %s2708 = sld [smem:[#allocation11 + $0x33]]
        %v2709 = vstv %s2708
        %v2710 = vmul.f32 %v2709, %v2112
        %v2711 = vmul.f32 %v2709, %v2113
        %v2712 = vadd.f32 %v2706, %v2710
        %v2713 = vadd.f32 %v2707, %v2711
        %s2714 = sld [smem:[#allocation11 + $0x34]]
        %v2715 = vstv %s2714
        %v2716 = vmul.f32 %v2715, %v2112
        %v2717 = vmul.f32 %v2715, %v2113
        %2720 = vrot.lane.b32.xlu0 %v2716, 127
        %v2721 = vpop.permute.xlu0 %2720
        %2722 = vrot.lane.b32.xlu0 %v2717, 127
        %v2723 = vpop.permute.xlu0 %2722
        %v2726 = vadd.f32 %v2712, %v2721
        %v2727 = vadd.f32 %v2713, %v2723
        %s2728 = sld [smem:[#allocation11 + $0x35]]
        %v2729 = vstv %s2728
        %v2730 = vmul.f32 %v2729, %v2112
        %v2731 = vmul.f32 %v2729, %v2113
        %2734 = vrot.lane.b32.xlu0 %v2730, 126
        %v2735 = vpop.permute.xlu0 %2734
        %2736 = vrot.lane.b32.xlu0 %v2731, 126
        %v2737 = vpop.permute.xlu0 %2736
        %v2740 = vadd.f32 %v2726, %v2735
        %v2741 = vadd.f32 %v2727, %v2737
        %s2742 = sld [smem:[#allocation11 + $0x36]]
        %v2743 = vstv %s2742
        %v2744 = vmul.f32 %v2743, %v2114
        %v2745 = vmul.f32 %v2743, %v2115
        %v2746 = vadd.f32 %v2740, %v2744
        %v2747 = vadd.f32 %v2741, %v2745
        %s2748 = sld [smem:[#allocation11 + $0x37]]
        %v2749 = vstv %s2748
        %v2750 = vmul.f32 %v2749, %v2114
        %v2751 = vmul.f32 %v2749, %v2115
        %2754 = vrot.lane.b32.xlu0 %v2750, 127
        %v2755 = vpop.permute.xlu0 %2754
        %2756 = vrot.lane.b32.xlu0 %v2751, 127
        %v2757 = vpop.permute.xlu0 %2756
        %v2760 = vadd.f32 %v2746, %v2755
        %v2761 = vadd.f32 %v2747, %v2757
        %s2762 = sld [smem:[#allocation11 + $0x38]]
        %v2763 = vstv %s2762
        %v2764 = vmul.f32 %v2763, %v2114
        %v2765 = vmul.f32 %v2763, %v2115
        %2768 = vrot.lane.b32.xlu0 %v2764, 126
        %v2769 = vpop.permute.xlu0 %2768
        %2770 = vrot.lane.b32.xlu0 %v2765, 126
        %v2771 = vpop.permute.xlu0 %2770
        %v2774 = vadd.f32 %v2760, %v2769
        %v2775 = vadd.f32 %v2761, %v2771
        %s2776 = sld [smem:[#allocation11 + $0x39]]
        %v2777 = vstv %s2776
        %v2778 = vmul.f32 %v2777, %v2116
        %v2779 = vmul.f32 %v2777, %v2117
        %v2780 = vadd.f32 %v2774, %v2778
        %v2781 = vadd.f32 %v2775, %v2779
        %s2782 = sld [smem:[#allocation11 + $0x3a]]
        %v2783 = vstv %s2782
        %v2784 = vmul.f32 %v2783, %v2116
        %v2785 = vmul.f32 %v2783, %v2117
        %2788 = vrot.lane.b32.xlu0 %v2784, 127
        %v2789 = vpop.permute.xlu0 %2788
        %2790 = vrot.lane.b32.xlu0 %v2785, 127
        %v2791 = vpop.permute.xlu0 %2790
        %v2794 = vadd.f32 %v2780, %v2789
        %v2795 = vadd.f32 %v2781, %v2791
        %s2796 = sld [smem:[#allocation11 + $0x3b]]
        %v2797 = vstv %s2796
        %v2798 = vmul.f32 %v2797, %v2116
        %v2799 = vmul.f32 %v2797, %v2117
        %2802 = vrot.lane.b32.xlu0 %v2798, 126
        %v2803 = vpop.permute.xlu0 %2802
        %2804 = vrot.lane.b32.xlu0 %v2799, 126
        %v2805 = vpop.permute.xlu0 %2804
        %v2808 = vadd.f32 %v2794, %v2803
        %v2809 = vadd.f32 %v2795, %v2805
        %s2810 = sld [smem:[#allocation11 + $0x3c]]
        %v2811 = vstv %s2810
        %v2812 = vmul.f32 %v2811, %v2118
        %v2813 = vmul.f32 %v2811, %v2119
        %v2814 = vadd.f32 %v2808, %v2812
        %v2815 = vadd.f32 %v2809, %v2813
        %s2816 = sld [smem:[#allocation11 + $0x3d]]
        %v2817 = vstv %s2816
        %v2818 = vmul.f32 %v2817, %v2118
        %v2819 = vmul.f32 %v2817, %v2119
        %2822 = vrot.lane.b32.xlu0 %v2818, 127
        %v2823 = vpop.permute.xlu0 %2822
        %2824 = vrot.lane.b32.xlu0 %v2819, 127
        %v2825 = vpop.permute.xlu0 %2824
        %v2828 = vadd.f32 %v2814, %v2823
        %v2829 = vadd.f32 %v2815, %v2825
        %s2830 = sld [smem:[#allocation11 + $0x3e]]
        %v2831 = vstv %s2830
        %v2832 = vmul.f32 %v2831, %v2118
        %v2833 = vmul.f32 %v2831, %v2119
        %2836 = vrot.lane.b32.xlu0 %v2832, 126
        %v2837 = vpop.permute.xlu0 %2836
        %2838 = vrot.lane.b32.xlu0 %v2833, 126
        %v2839 = vpop.permute.xlu0 %2838
        %v2842 = vadd.f32 %v2828, %v2837
        %v2843 = vadd.f32 %v2829, %v2839
        %s2844 = sld [smem:[#allocation11 + $0x3f]]
        %v2845 = vstv %s2844
        %v2846 = vmul.f32 %v2845, %v2120
        %v2847 = vmul.f32 %v2845, %v2121
        %v2848 = vadd.f32 %v2842, %v2846
        %v2849 = vadd.f32 %v2843, %v2847
        %s2850 = sld [smem:[#allocation11 + $0x40]]
        %v2851 = vstv %s2850
        %v2852 = vmul.f32 %v2851, %v2120
        %v2853 = vmul.f32 %v2851, %v2121
        %2856 = vrot.lane.b32.xlu0 %v2852, 127
        %v2857 = vpop.permute.xlu0 %2856
        %2858 = vrot.lane.b32.xlu0 %v2853, 127
        %v2859 = vpop.permute.xlu0 %2858
        %v2862 = vadd.f32 %v2848, %v2857
        %v2863 = vadd.f32 %v2849, %v2859
        %s2864 = sld [smem:[#allocation11 + $0x41]]
        %v2865 = vstv %s2864
        %v2866 = vmul.f32 %v2865, %v2120
        %v2867 = vmul.f32 %v2865, %v2121
        %2870 = vrot.lane.b32.xlu0 %v2866, 126
        %v2871 = vpop.permute.xlu0 %2870
        %2872 = vrot.lane.b32.xlu0 %v2867, 126
        %v2873 = vpop.permute.xlu0 %2872
        %v2876 = vadd.f32 %v2862, %v2871
        %v2877 = vadd.f32 %v2863, %v2873
        %s2878 = sld [smem:[#allocation11 + $0x42]]
        %v2879 = vstv %s2878
        %v2880 = vmul.f32 %v2879, %v2122
        %v2881 = vmul.f32 %v2879, %v2123
        %v2882 = vadd.f32 %v2876, %v2880
        %v2883 = vadd.f32 %v2877, %v2881
        %s2884 = sld [smem:[#allocation11 + $0x43]]
        %v2885 = vstv %s2884
        %v2886 = vmul.f32 %v2885, %v2122
        %v2887 = vmul.f32 %v2885, %v2123
        %2890 = vrot.lane.b32.xlu0 %v2886, 127
        %v2891 = vpop.permute.xlu0 %2890
        %2892 = vrot.lane.b32.xlu0 %v2887, 127
        %v2893 = vpop.permute.xlu0 %2892
        %v2896 = vadd.f32 %v2882, %v2891
        %v2897 = vadd.f32 %v2883, %v2893
        %s2898 = sld [smem:[#allocation11 + $0x44]]
        %v2899 = vstv %s2898
        %v2900 = vmul.f32 %v2899, %v2122
        %v2901 = vmul.f32 %v2899, %v2123
        %2904 = vrot.lane.b32.xlu0 %v2900, 126
        %v2905 = vpop.permute.xlu0 %2904
        %2906 = vrot.lane.b32.xlu0 %v2901, 126
        %v2907 = vpop.permute.xlu0 %2906
        %v2910 = vadd.f32 %v2896, %v2905
        %v2911 = vadd.f32 %v2897, %v2907
        %s2912 = sld [smem:[#allocation11 + $0x45]]
        %v2913 = vstv %s2912
        %v2914 = vmul.f32 %v2913, %v2124
        %v2915 = vmul.f32 %v2913, %v2125
        %v2916 = vadd.f32 %v2910, %v2914
        %v2917 = vadd.f32 %v2911, %v2915
        %s2918 = sld [smem:[#allocation11 + $0x46]]
        %v2919 = vstv %s2918
        %v2920 = vmul.f32 %v2919, %v2124
        %v2921 = vmul.f32 %v2919, %v2125
        %2924 = vrot.lane.b32.xlu0 %v2920, 127
        %v2925 = vpop.permute.xlu0 %2924
        %2926 = vrot.lane.b32.xlu0 %v2921, 127
        %v2927 = vpop.permute.xlu0 %2926
        %v2930 = vadd.f32 %v2916, %v2925
        %v2931 = vadd.f32 %v2917, %v2927
        %s2932 = sld [smem:[#allocation11 + $0x47]]
        %v2933 = vstv %s2932
        %v2934 = vmul.f32 %v2933, %v2124
        %v2935 = vmul.f32 %v2933, %v2125
        %2938 = vrot.lane.b32.xlu0 %v2934, 126
        %v2939 = vpop.permute.xlu0 %2938
        %2940 = vrot.lane.b32.xlu0 %v2935, 126
        %v2941 = vpop.permute.xlu0 %2940
        %v2944 = vadd.f32 %v2930, %v2939
        %v2945 = vadd.f32 %v2931, %v2941
        %s2946 = sld [smem:[#allocation13 + $0x1]]
        %v2947 = vstv %s2946
        %v2948 = vadd.f32 %v2944, %v2947
        %v2949 = vadd.f32 %v2945, %v2947
        %s2950 = sld [smem:[#allocation11 + $0x48]]
        %v2951 = vstv %s2950
        %v2952 = vmul.f32 %v2951, %v2102
        %v2953 = vmul.f32 %v2951, %v2103
        %v2954 = vadd.f32 %v2952, 0.0
        %v2955 = vadd.f32 %v2953, 0.0
        %s2956 = sld [smem:[#allocation11 + $0x49]]
        %v2957 = vstv %s2956
        %v2958 = vmul.f32 %v2957, %v2102
        %v2959 = vmul.f32 %v2957, %v2103
        %2962 = vrot.lane.b32.xlu0 %v2958, 127
        %v2963 = vpop.permute.xlu0 %2962
        %2964 = vrot.lane.b32.xlu0 %v2959, 127
        %v2965 = vpop.permute.xlu0 %2964
        %v2968 = vadd.f32 %v2954, %v2963
        %v2969 = vadd.f32 %v2955, %v2965
        %s2970 = sld [smem:[#allocation11 + $0x4a]]
        %v2971 = vstv %s2970
        %v2972 = vmul.f32 %v2971, %v2102
        %v2973 = vmul.f32 %v2971, %v2103
        %2976 = vrot.lane.b32.xlu0 %v2972, 126
        %v2977 = vpop.permute.xlu0 %2976
        %2978 = vrot.lane.b32.xlu0 %v2973, 126
        %v2979 = vpop.permute.xlu0 %2978
        %v2982 = vadd.f32 %v2968, %v2977
        %v2983 = vadd.f32 %v2969, %v2979
        %s2984 = sld [smem:[#allocation11 + $0x4b]]
        %v2985 = vstv %s2984
        %v2986 = vmul.f32 %v2985, %v2104
        %v2987 = vmul.f32 %v2985, %v2105
        %v2988 = vadd.f32 %v2982, %v2986
        %v2989 = vadd.f32 %v2983, %v2987
        %s2990 = sld [smem:[#allocation11 + $0x4c]]
        %v2991 = vstv %s2990
        %v2992 = vmul.f32 %v2991, %v2104
        %v2993 = vmul.f32 %v2991, %v2105
        %2996 = vrot.lane.b32.xlu0 %v2992, 127
        %v2997 = vpop.permute.xlu0 %2996
        %2998 = vrot.lane.b32.xlu0 %v2993, 127
        %v2999 = vpop.permute.xlu0 %2998
        %v3002 = vadd.f32 %v2988, %v2997
        %v3003 = vadd.f32 %v2989, %v2999
        %s3004 = sld [smem:[#allocation11 + $0x4d]]
        %v3005 = vstv %s3004
        %v3006 = vmul.f32 %v3005, %v2104
        %v3007 = vmul.f32 %v3005, %v2105
        %3010 = vrot.lane.b32.xlu0 %v3006, 126
        %v3011 = vpop.permute.xlu0 %3010
        %3012 = vrot.lane.b32.xlu0 %v3007, 126
        %v3013 = vpop.permute.xlu0 %3012
        %v3016 = vadd.f32 %v3002, %v3011
        %v3017 = vadd.f32 %v3003, %v3013
        %s3018 = sld [smem:[#allocation11 + $0x4e]]
        %v3019 = vstv %s3018
        %v3020 = vmul.f32 %v3019, %v2106
        %v3021 = vmul.f32 %v3019, %v2107
        %v3022 = vadd.f32 %v3016, %v3020
        %v3023 = vadd.f32 %v3017, %v3021
        %s3024 = sld [smem:[#allocation11 + $0x4f]]
        %v3025 = vstv %s3024
        %v3026 = vmul.f32 %v3025, %v2106
        %v3027 = vmul.f32 %v3025, %v2107
        %3030 = vrot.lane.b32.xlu0 %v3026, 127
        %v3031 = vpop.permute.xlu0 %3030
        %3032 = vrot.lane.b32.xlu0 %v3027, 127
        %v3033 = vpop.permute.xlu0 %3032
        %v3036 = vadd.f32 %v3022, %v3031
        %v3037 = vadd.f32 %v3023, %v3033
        %s3038 = sld [smem:[#allocation11 + $0x50]]
        %v3039 = vstv %s3038
        %v3040 = vmul.f32 %v3039, %v2106
        %v3041 = vmul.f32 %v3039, %v2107
        %3044 = vrot.lane.b32.xlu0 %v3040, 126
        %v3045 = vpop.permute.xlu0 %3044
        %3046 = vrot.lane.b32.xlu0 %v3041, 126
        %v3047 = vpop.permute.xlu0 %3046
        %v3050 = vadd.f32 %v3036, %v3045
        %v3051 = vadd.f32 %v3037, %v3047
        %s3052 = sld [smem:[#allocation11 + $0x51]]
        %v3053 = vstv %s3052
        %v3054 = vmul.f32 %v3053, %v2108
        %v3055 = vmul.f32 %v3053, %v2109
        %v3056 = vadd.f32 %v3050, %v3054
        %v3057 = vadd.f32 %v3051, %v3055
        %s3058 = sld [smem:[#allocation11 + $0x52]]
        %v3059 = vstv %s3058
        %v3060 = vmul.f32 %v3059, %v2108
        %v3061 = vmul.f32 %v3059, %v2109
        %3064 = vrot.lane.b32.xlu0 %v3060, 127
        %v3065 = vpop.permute.xlu0 %3064
        %3066 = vrot.lane.b32.xlu0 %v3061, 127
        %v3067 = vpop.permute.xlu0 %3066
        %v3070 = vadd.f32 %v3056, %v3065
        %v3071 = vadd.f32 %v3057, %v3067
        %s3072 = sld [smem:[#allocation11 + $0x53]]
        %v3073 = vstv %s3072
        %v3074 = vmul.f32 %v3073, %v2108
        %v3075 = vmul.f32 %v3073, %v2109
        %3078 = vrot.lane.b32.xlu0 %v3074, 126
        %v3079 = vpop.permute.xlu0 %3078
        %3080 = vrot.lane.b32.xlu0 %v3075, 126
        %v3081 = vpop.permute.xlu0 %3080
        %v3084 = vadd.f32 %v3070, %v3079
        %v3085 = vadd.f32 %v3071, %v3081
        %s3086 = sld [smem:[#allocation11 + $0x54]]
        %v3087 = vstv %s3086
        %v3088 = vmul.f32 %v3087, %v2110
        %v3089 = vmul.f32 %v3087, %v2111
        %v3090 = vadd.f32 %v3084, %v3088
        %v3091 = vadd.f32 %v3085, %v3089
        %s3092 = sld [smem:[#allocation11 + $0x55]]
        %v3093 = vstv %s3092
        %v3094 = vmul.f32 %v3093, %v2110
        %v3095 = vmul.f32 %v3093, %v2111
        %3098 = vrot.lane.b32.xlu0 %v3094, 127
        %v3099 = vpop.permute.xlu0 %3098
        %3100 = vrot.lane.b32.xlu0 %v3095, 127
        %v3101 = vpop.permute.xlu0 %3100
        %v3104 = vadd.f32 %v3090, %v3099
        %v3105 = vadd.f32 %v3091, %v3101
        %s3106 = sld [smem:[#allocation11 + $0x56]]
        %v3107 = vstv %s3106
        %v3108 = vmul.f32 %v3107, %v2110
        %v3109 = vmul.f32 %v3107, %v2111
        %3112 = vrot.lane.b32.xlu0 %v3108, 126
        %v3113 = vpop.permute.xlu0 %3112
        %3114 = vrot.lane.b32.xlu0 %v3109, 126
        %v3115 = vpop.permute.xlu0 %3114
        %v3118 = vadd.f32 %v3104, %v3113
        %v3119 = vadd.f32 %v3105, %v3115
        %s3120 = sld [smem:[#allocation11 + $0x57]]
        %v3121 = vstv %s3120
        %v3122 = vmul.f32 %v3121, %v2112
        %v3123 = vmul.f32 %v3121, %v2113
        %v3124 = vadd.f32 %v3118, %v3122
        %v3125 = vadd.f32 %v3119, %v3123
        %s3126 = sld [smem:[#allocation11 + $0x58]]
        %v3127 = vstv %s3126
        %v3128 = vmul.f32 %v3127, %v2112
        %v3129 = vmul.f32 %v3127, %v2113
        %3132 = vrot.lane.b32.xlu0 %v3128, 127
        %v3133 = vpop.permute.xlu0 %3132
        %3134 = vrot.lane.b32.xlu0 %v3129, 127
        %v3135 = vpop.permute.xlu0 %3134
        %v3138 = vadd.f32 %v3124, %v3133
        %v3139 = vadd.f32 %v3125, %v3135
        %s3140 = sld [smem:[#allocation11 + $0x59]]
        %v3141 = vstv %s3140
        %v3142 = vmul.f32 %v3141, %v2112
        %v3143 = vmul.f32 %v3141, %v2113
        %3146 = vrot.lane.b32.xlu0 %v3142, 126
        %v3147 = vpop.permute.xlu0 %3146
        %3148 = vrot.lane.b32.xlu0 %v3143, 126
        %v3149 = vpop.permute.xlu0 %3148
        %v3152 = vadd.f32 %v3138, %v3147
        %v3153 = vadd.f32 %v3139, %v3149
        %s3154 = sld [smem:[#allocation11 + $0x5a]]
        %v3155 = vstv %s3154
        %v3156 = vmul.f32 %v3155, %v2114
        %v3157 = vmul.f32 %v3155, %v2115
        %v3158 = vadd.f32 %v3152, %v3156
        %v3159 = vadd.f32 %v3153, %v3157
        %s3160 = sld [smem:[#allocation11 + $0x5b]]
        %v3161 = vstv %s3160
        %v3162 = vmul.f32 %v3161, %v2114
        %v3163 = vmul.f32 %v3161, %v2115
        %3166 = vrot.lane.b32.xlu0 %v3162, 127
        %v3167 = vpop.permute.xlu0 %3166
        %3168 = vrot.lane.b32.xlu0 %v3163, 127
        %v3169 = vpop.permute.xlu0 %3168
        %v3172 = vadd.f32 %v3158, %v3167
        %v3173 = vadd.f32 %v3159, %v3169
        %s3174 = sld [smem:[#allocation11 + $0x5c]]
        %v3175 = vstv %s3174
        %v3176 = vmul.f32 %v3175, %v2114
        %v3177 = vmul.f32 %v3175, %v2115
        %3180 = vrot.lane.b32.xlu0 %v3176, 126
        %v3181 = vpop.permute.xlu0 %3180
        %3182 = vrot.lane.b32.xlu0 %v3177, 126
        %v3183 = vpop.permute.xlu0 %3182
        %v3186 = vadd.f32 %v3172, %v3181
        %v3187 = vadd.f32 %v3173, %v3183
        %s3188 = sld [smem:[#allocation11 + $0x5d]]
        %v3189 = vstv %s3188
        %v3190 = vmul.f32 %v3189, %v2116
        %v3191 = vmul.f32 %v3189, %v2117
        %v3192 = vadd.f32 %v3186, %v3190
        %v3193 = vadd.f32 %v3187, %v3191
        %s3194 = sld [smem:[#allocation11 + $0x5e]]
        %v3195 = vstv %s3194
        %v3196 = vmul.f32 %v3195, %v2116
        %v3197 = vmul.f32 %v3195, %v2117
        %3200 = vrot.lane.b32.xlu0 %v3196, 127
        %v3201 = vpop.permute.xlu0 %3200
        %3202 = vrot.lane.b32.xlu0 %v3197, 127
        %v3203 = vpop.permute.xlu0 %3202
        %v3206 = vadd.f32 %v3192, %v3201
        %v3207 = vadd.f32 %v3193, %v3203
        %s3208 = sld [smem:[#allocation11 + $0x5f]]
        %v3209 = vstv %s3208
        %v3210 = vmul.f32 %v3209, %v2116
        %v3211 = vmul.f32 %v3209, %v2117
        %3214 = vrot.lane.b32.xlu0 %v3210, 126
        %v3215 = vpop.permute.xlu0 %3214
        %3216 = vrot.lane.b32.xlu0 %v3211, 126
        %v3217 = vpop.permute.xlu0 %3216
        %v3220 = vadd.f32 %v3206, %v3215
        %v3221 = vadd.f32 %v3207, %v3217
        %s3222 = sld [smem:[#allocation11 + $0x60]]
        %v3223 = vstv %s3222
        %v3224 = vmul.f32 %v3223, %v2118
        %v3225 = vmul.f32 %v3223, %v2119
        %v3226 = vadd.f32 %v3220, %v3224
        %v3227 = vadd.f32 %v3221, %v3225
        %s3228 = sld [smem:[#allocation11 + $0x61]]
        %v3229 = vstv %s3228
        %v3230 = vmul.f32 %v3229, %v2118
        %v3231 = vmul.f32 %v3229, %v2119
        %3234 = vrot.lane.b32.xlu0 %v3230, 127
        %v3235 = vpop.permute.xlu0 %3234
        %3236 = vrot.lane.b32.xlu0 %v3231, 127
        %v3237 = vpop.permute.xlu0 %3236
        %v3240 = vadd.f32 %v3226, %v3235
        %v3241 = vadd.f32 %v3227, %v3237
        %s3242 = sld [smem:[#allocation11 + $0x62]]
        %v3243 = vstv %s3242
        %v3244 = vmul.f32 %v3243, %v2118
        %v3245 = vmul.f32 %v3243, %v2119
        %3248 = vrot.lane.b32.xlu0 %v3244, 126
        %v3249 = vpop.permute.xlu0 %3248
        %3250 = vrot.lane.b32.xlu0 %v3245, 126
        %v3251 = vpop.permute.xlu0 %3250
        %v3254 = vadd.f32 %v3240, %v3249
        %v3255 = vadd.f32 %v3241, %v3251
        %s3256 = sld [smem:[#allocation11 + $0x63]]
        %v3257 = vstv %s3256
        %v3258 = vmul.f32 %v3257, %v2120
        %v3259 = vmul.f32 %v3257, %v2121
        %v3260 = vadd.f32 %v3254, %v3258
        %v3261 = vadd.f32 %v3255, %v3259
        %s3262 = sld [smem:[#allocation11 + $0x64]]
        %v3263 = vstv %s3262
        %v3264 = vmul.f32 %v3263, %v2120
        %v3265 = vmul.f32 %v3263, %v2121
        %3268 = vrot.lane.b32.xlu0 %v3264, 127
        %v3269 = vpop.permute.xlu0 %3268
        %3270 = vrot.lane.b32.xlu0 %v3265, 127
        %v3271 = vpop.permute.xlu0 %3270
        %v3274 = vadd.f32 %v3260, %v3269
        %v3275 = vadd.f32 %v3261, %v3271
        %s3276 = sld [smem:[#allocation11 + $0x65]]
        %v3277 = vstv %s3276
        %v3278 = vmul.f32 %v3277, %v2120
        %v3279 = vmul.f32 %v3277, %v2121
        %3282 = vrot.lane.b32.xlu0 %v3278, 126
        %v3283 = vpop.permute.xlu0 %3282
        %3284 = vrot.lane.b32.xlu0 %v3279, 126
        %v3285 = vpop.permute.xlu0 %3284
        %v3288 = vadd.f32 %v3274, %v3283
        %v3289 = vadd.f32 %v3275, %v3285
        %s3290 = sld [smem:[#allocation11 + $0x66]]
        %v3291 = vstv %s3290
        %v3292 = vmul.f32 %v3291, %v2122
        %v3293 = vmul.f32 %v3291, %v2123
        %v3294 = vadd.f32 %v3288, %v3292
        %v3295 = vadd.f32 %v3289, %v3293
        %s3296 = sld [smem:[#allocation11 + $0x67]]
        %v3297 = vstv %s3296
        %v3298 = vmul.f32 %v3297, %v2122
        %v3299 = vmul.f32 %v3297, %v2123
        %3302 = vrot.lane.b32.xlu0 %v3298, 127
        %v3303 = vpop.permute.xlu0 %3302
        %3304 = vrot.lane.b32.xlu0 %v3299, 127
        %v3305 = vpop.permute.xlu0 %3304
        %v3308 = vadd.f32 %v3294, %v3303
        %v3309 = vadd.f32 %v3295, %v3305
        %s3310 = sld [smem:[#allocation11 + $0x68]]
        %v3311 = vstv %s3310
        %v3312 = vmul.f32 %v3311, %v2122
        %v3313 = vmul.f32 %v3311, %v2123
        %3316 = vrot.lane.b32.xlu0 %v3312, 126
        %v3317 = vpop.permute.xlu0 %3316
        %3318 = vrot.lane.b32.xlu0 %v3313, 126
        %v3319 = vpop.permute.xlu0 %3318
        %v3322 = vadd.f32 %v3308, %v3317
        %v3323 = vadd.f32 %v3309, %v3319
        %s3324 = sld [smem:[#allocation11 + $0x69]]
        %v3325 = vstv %s3324
        %v3326 = vmul.f32 %v3325, %v2124
        %v3327 = vmul.f32 %v3325, %v2125
        %v3328 = vadd.f32 %v3322, %v3326
        %v3329 = vadd.f32 %v3323, %v3327
        %s3330 = sld [smem:[#allocation11 + $0x6a]]
        %v3331 = vstv %s3330
        %v3332 = vmul.f32 %v3331, %v2124
        %v3333 = vmul.f32 %v3331, %v2125
        %3336 = vrot.lane.b32.xlu0 %v3332, 127
        %v3337 = vpop.permute.xlu0 %3336
        %3338 = vrot.lane.b32.xlu0 %v3333, 127
        %v3339 = vpop.permute.xlu0 %3338
        %v3342 = vadd.f32 %v3328, %v3337
        %v3343 = vadd.f32 %v3329, %v3339
        %s3344 = sld [smem:[#allocation11 + $0x6b]]
        %v3345 = vstv %s3344
        %v3346 = vmul.f32 %v3345, %v2124
        %v3347 = vmul.f32 %v3345, %v2125
        %3350 = vrot.lane.b32.xlu0 %v3346, 126
        %v3351 = vpop.permute.xlu0 %3350
        %3352 = vrot.lane.b32.xlu0 %v3347, 126
        %v3353 = vpop.permute.xlu0 %3352
        %v3356 = vadd.f32 %v3342, %v3351
        %v3357 = vadd.f32 %v3343, %v3353
        %s3358 = sld [smem:[#allocation13 + $0x2]]
        %v3359 = vstv %s3358
        %v3360 = vadd.f32 %v3356, %v3359
        %v3361 = vadd.f32 %v3357, %v3359
        %s3362 = sld [smem:[#allocation11 + $0x6c]]
        %v3363 = vstv %s3362
        %v3364 = vmul.f32 %v3363, %v2102
        %v3365 = vmul.f32 %v3363, %v2103
        %v3366 = vadd.f32 %v3364, 0.0
        %v3367 = vadd.f32 %v3365, 0.0
        %s3368 = sld [smem:[#allocation11 + $0x6d]]
        %v3369 = vstv %s3368
        %v3370 = vmul.f32 %v3369, %v2102
        %v3371 = vmul.f32 %v3369, %v2103
        %3374 = vrot.lane.b32.xlu0 %v3370, 127
        %v3375 = vpop.permute.xlu0 %3374
        %3376 = vrot.lane.b32.xlu0 %v3371, 127
        %v3377 = vpop.permute.xlu0 %3376
        %v3380 = vadd.f32 %v3366, %v3375
        %v3381 = vadd.f32 %v3367, %v3377
        %s3382 = sld [smem:[#allocation11 + $0x6e]]
        %v3383 = vstv %s3382
        %v3384 = vmul.f32 %v3383, %v2102
        %v3385 = vmul.f32 %v3383, %v2103
        %3388 = vrot.lane.b32.xlu0 %v3384, 126
        %v3389 = vpop.permute.xlu0 %3388
        %3390 = vrot.lane.b32.xlu0 %v3385, 126
        %v3391 = vpop.permute.xlu0 %3390
        %v3394 = vadd.f32 %v3380, %v3389
        %v3395 = vadd.f32 %v3381, %v3391
        %s3396 = sld [smem:[#allocation11 + $0x6f]]
        %v3397 = vstv %s3396
        %v3398 = vmul.f32 %v3397, %v2104
        %v3399 = vmul.f32 %v3397, %v2105
        %v3400 = vadd.f32 %v3394, %v3398
        %v3401 = vadd.f32 %v3395, %v3399
        %s3402 = sld [smem:[#allocation11 + $0x70]]
        %v3403 = vstv %s3402
        %v3404 = vmul.f32 %v3403, %v2104
        %v3405 = vmul.f32 %v3403, %v2105
        %3408 = vrot.lane.b32.xlu0 %v3404, 127
        %v3409 = vpop.permute.xlu0 %3408
        %3410 = vrot.lane.b32.xlu0 %v3405, 127
        %v3411 = vpop.permute.xlu0 %3410
        %v3414 = vadd.f32 %v3400, %v3409
        %v3415 = vadd.f32 %v3401, %v3411
        %s3416 = sld [smem:[#allocation11 + $0x71]]
        %v3417 = vstv %s3416
        %v3418 = vmul.f32 %v3417, %v2104
        %v3419 = vmul.f32 %v3417, %v2105
        %3422 = vrot.lane.b32.xlu0 %v3418, 126
        %v3423 = vpop.permute.xlu0 %3422
        %3424 = vrot.lane.b32.xlu0 %v3419, 126
        %v3425 = vpop.permute.xlu0 %3424
        %v3428 = vadd.f32 %v3414, %v3423
        %v3429 = vadd.f32 %v3415, %v3425
        %s3430 = sld [smem:[#allocation11 + $0x72]]
        %v3431 = vstv %s3430
        %v3432 = vmul.f32 %v3431, %v2106
        %v3433 = vmul.f32 %v3431, %v2107
        %v3434 = vadd.f32 %v3428, %v3432
        %v3435 = vadd.f32 %v3429, %v3433
        %s3436 = sld [smem:[#allocation11 + $0x73]]
        %v3437 = vstv %s3436
        %v3438 = vmul.f32 %v3437, %v2106
        %v3439 = vmul.f32 %v3437, %v2107
        %3442 = vrot.lane.b32.xlu0 %v3438, 127
        %v3443 = vpop.permute.xlu0 %3442
        %3444 = vrot.lane.b32.xlu0 %v3439, 127
        %v3445 = vpop.permute.xlu0 %3444
        %v3448 = vadd.f32 %v3434, %v3443
        %v3449 = vadd.f32 %v3435, %v3445
        %s3450 = sld [smem:[#allocation11 + $0x74]]
        %v3451 = vstv %s3450
        %v3452 = vmul.f32 %v3451, %v2106
        %v3453 = vmul.f32 %v3451, %v2107
        %3456 = vrot.lane.b32.xlu0 %v3452, 126
        %v3457 = vpop.permute.xlu0 %3456
        %3458 = vrot.lane.b32.xlu0 %v3453, 126
        %v3459 = vpop.permute.xlu0 %3458
        %v3462 = vadd.f32 %v3448, %v3457
        %v3463 = vadd.f32 %v3449, %v3459
        %s3464 = sld [smem:[#allocation11 + $0x75]]
        %v3465 = vstv %s3464
        %v3466 = vmul.f32 %v3465, %v2108
        %v3467 = vmul.f32 %v3465, %v2109
        %v3468 = vadd.f32 %v3462, %v3466
        %v3469 = vadd.f32 %v3463, %v3467
        %s3470 = sld [smem:[#allocation11 + $0x76]]
        %v3471 = vstv %s3470
        %v3472 = vmul.f32 %v3471, %v2108
        %v3473 = vmul.f32 %v3471, %v2109
        %3476 = vrot.lane.b32.xlu0 %v3472, 127
        %v3477 = vpop.permute.xlu0 %3476
        %3478 = vrot.lane.b32.xlu0 %v3473, 127
        %v3479 = vpop.permute.xlu0 %3478
        %v3482 = vadd.f32 %v3468, %v3477
        %v3483 = vadd.f32 %v3469, %v3479
        %s3484 = sld [smem:[#allocation11 + $0x77]]
        %v3485 = vstv %s3484
        %v3486 = vmul.f32 %v3485, %v2108
        %v3487 = vmul.f32 %v3485, %v2109
        %3490 = vrot.lane.b32.xlu0 %v3486, 126
        %v3491 = vpop.permute.xlu0 %3490
        %3492 = vrot.lane.b32.xlu0 %v3487, 126
        %v3493 = vpop.permute.xlu0 %3492
        %v3496 = vadd.f32 %v3482, %v3491
        %v3497 = vadd.f32 %v3483, %v3493
        %s3498 = sld [smem:[#allocation11 + $0x78]]
        %v3499 = vstv %s3498
        %v3500 = vmul.f32 %v3499, %v2110
        %v3501 = vmul.f32 %v3499, %v2111
        %v3502 = vadd.f32 %v3496, %v3500
        %v3503 = vadd.f32 %v3497, %v3501
        %s3504 = sld [smem:[#allocation11 + $0x79]]
        %v3505 = vstv %s3504
        %v3506 = vmul.f32 %v3505, %v2110
        %v3507 = vmul.f32 %v3505, %v2111
        %3510 = vrot.lane.b32.xlu0 %v3506, 127
        %v3511 = vpop.permute.xlu0 %3510
        %3512 = vrot.lane.b32.xlu0 %v3507, 127
        %v3513 = vpop.permute.xlu0 %3512
        %v3516 = vadd.f32 %v3502, %v3511
        %v3517 = vadd.f32 %v3503, %v3513
        %s3518 = sld [smem:[#allocation11 + $0x7a]]
        %v3519 = vstv %s3518
        %v3520 = vmul.f32 %v3519, %v2110
        %v3521 = vmul.f32 %v3519, %v2111
        %3524 = vrot.lane.b32.xlu0 %v3520, 126
        %v3525 = vpop.permute.xlu0 %3524
        %3526 = vrot.lane.b32.xlu0 %v3521, 126
        %v3527 = vpop.permute.xlu0 %3526
        %v3530 = vadd.f32 %v3516, %v3525
        %v3531 = vadd.f32 %v3517, %v3527
        %s3532 = sld [smem:[#allocation11 + $0x7b]]
        %v3533 = vstv %s3532
        %v3534 = vmul.f32 %v3533, %v2112
        %v3535 = vmul.f32 %v3533, %v2113
        %v3536 = vadd.f32 %v3530, %v3534
        %v3537 = vadd.f32 %v3531, %v3535
        %s3538 = sld [smem:[#allocation11 + $0x7c]]
        %v3539 = vstv %s3538
        %v3540 = vmul.f32 %v3539, %v2112
        %v3541 = vmul.f32 %v3539, %v2113
        %3544 = vrot.lane.b32.xlu0 %v3540, 127
        %v3545 = vpop.permute.xlu0 %3544
        %3546 = vrot.lane.b32.xlu0 %v3541, 127
        %v3547 = vpop.permute.xlu0 %3546
        %v3550 = vadd.f32 %v3536, %v3545
        %v3551 = vadd.f32 %v3537, %v3547
        %s3552 = sld [smem:[#allocation11 + $0x7d]]
        %v3553 = vstv %s3552
        %v3554 = vmul.f32 %v3553, %v2112
        %v3555 = vmul.f32 %v3553, %v2113
        %3558 = vrot.lane.b32.xlu0 %v3554, 126
        %v3559 = vpop.permute.xlu0 %3558
        %3560 = vrot.lane.b32.xlu0 %v3555, 126
        %v3561 = vpop.permute.xlu0 %3560
        %v3564 = vadd.f32 %v3550, %v3559
        %v3565 = vadd.f32 %v3551, %v3561
        %s3566 = sld [smem:[#allocation11 + $0x7e]]
        %v3567 = vstv %s3566
        %v3568 = vmul.f32 %v3567, %v2114
        %v3569 = vmul.f32 %v3567, %v2115
        %v3570 = vadd.f32 %v3564, %v3568
        %v3571 = vadd.f32 %v3565, %v3569
        %s3572 = sld [smem:[#allocation11 + $0x7f]]
        %v3573 = vstv %s3572
        %v3574 = vmul.f32 %v3573, %v2114
        %v3575 = vmul.f32 %v3573, %v2115
        %3578 = vrot.lane.b32.xlu0 %v3574, 127
        %v3579 = vpop.permute.xlu0 %3578
        %3580 = vrot.lane.b32.xlu0 %v3575, 127
        %v3581 = vpop.permute.xlu0 %3580
        %v3584 = vadd.f32 %v3570, %v3579
        %v3585 = vadd.f32 %v3571, %v3581
        %s3586 = sld [smem:[#allocation11 + $0x80]]
        %v3587 = vstv %s3586
        %v3588 = vmul.f32 %v3587, %v2114
        %v3589 = vmul.f32 %v3587, %v2115
        %3592 = vrot.lane.b32.xlu0 %v3588, 126
        %v3593 = vpop.permute.xlu0 %3592
        %3594 = vrot.lane.b32.xlu0 %v3589, 126
        %v3595 = vpop.permute.xlu0 %3594
        %v3598 = vadd.f32 %v3584, %v3593
        %v3599 = vadd.f32 %v3585, %v3595
        %s3600 = sld [smem:[#allocation11 + $0x81]]
        %v3601 = vstv %s3600
        %v3602 = vmul.f32 %v3601, %v2116
        %v3603 = vmul.f32 %v3601, %v2117
        %v3604 = vadd.f32 %v3598, %v3602
        %v3605 = vadd.f32 %v3599, %v3603
        %s3606 = sld [smem:[#allocation11 + $0x82]]
        %v3607 = vstv %s3606
        %v3608 = vmul.f32 %v3607, %v2116
        %v3609 = vmul.f32 %v3607, %v2117
        %3612 = vrot.lane.b32.xlu0 %v3608, 127
        %v3613 = vpop.permute.xlu0 %3612
        %3614 = vrot.lane.b32.xlu0 %v3609, 127
        %v3615 = vpop.permute.xlu0 %3614
        %v3618 = vadd.f32 %v3604, %v3613
        %v3619 = vadd.f32 %v3605, %v3615
        %s3620 = sld [smem:[#allocation11 + $0x83]]
        %v3621 = vstv %s3620
        %v3622 = vmul.f32 %v3621, %v2116
        %v3623 = vmul.f32 %v3621, %v2117
        %3626 = vrot.lane.b32.xlu0 %v3622, 126
        %v3627 = vpop.permute.xlu0 %3626
        %3628 = vrot.lane.b32.xlu0 %v3623, 126
        %v3629 = vpop.permute.xlu0 %3628
        %v3632 = vadd.f32 %v3618, %v3627
        %v3633 = vadd.f32 %v3619, %v3629
        %s3634 = sld [smem:[#allocation11 + $0x84]]
        %v3635 = vstv %s3634
        %v3636 = vmul.f32 %v3635, %v2118
        %v3637 = vmul.f32 %v3635, %v2119
        %v3638 = vadd.f32 %v3632, %v3636
        %v3639 = vadd.f32 %v3633, %v3637
        %s3640 = sld [smem:[#allocation11 + $0x85]]
        %v3641 = vstv %s3640
        %v3642 = vmul.f32 %v3641, %v2118
        %v3643 = vmul.f32 %v3641, %v2119
        %3646 = vrot.lane.b32.xlu0 %v3642, 127
        %v3647 = vpop.permute.xlu0 %3646
        %3648 = vrot.lane.b32.xlu0 %v3643, 127
        %v3649 = vpop.permute.xlu0 %3648
        %v3652 = vadd.f32 %v3638, %v3647
        %v3653 = vadd.f32 %v3639, %v3649
        %s3654 = sld [smem:[#allocation11 + $0x86]]
        %v3655 = vstv %s3654
        %v3656 = vmul.f32 %v3655, %v2118
        %v3657 = vmul.f32 %v3655, %v2119
        %3660 = vrot.lane.b32.xlu0 %v3656, 126
        %v3661 = vpop.permute.xlu0 %3660
        %3662 = vrot.lane.b32.xlu0 %v3657, 126
        %v3663 = vpop.permute.xlu0 %3662
        %v3666 = vadd.f32 %v3652, %v3661
        %v3667 = vadd.f32 %v3653, %v3663
        %s3668 = sld [smem:[#allocation11 + $0x87]]
        %v3669 = vstv %s3668
        %v3670 = vmul.f32 %v3669, %v2120
        %v3671 = vmul.f32 %v3669, %v2121
        %v3672 = vadd.f32 %v3666, %v3670
        %v3673 = vadd.f32 %v3667, %v3671
        %s3674 = sld [smem:[#allocation11 + $0x88]]
        %v3675 = vstv %s3674
        %v3676 = vmul.f32 %v3675, %v2120
        %v3677 = vmul.f32 %v3675, %v2121
        %3680 = vrot.lane.b32.xlu0 %v3676, 127
        %v3681 = vpop.permute.xlu0 %3680
        %3682 = vrot.lane.b32.xlu0 %v3677, 127
        %v3683 = vpop.permute.xlu0 %3682
        %v3686 = vadd.f32 %v3672, %v3681
        %v3687 = vadd.f32 %v3673, %v3683
        %s3688 = sld [smem:[#allocation11 + $0x89]]
        %v3689 = vstv %s3688
        %v3690 = vmul.f32 %v3689, %v2120
        %v3691 = vmul.f32 %v3689, %v2121
        %3694 = vrot.lane.b32.xlu0 %v3690, 126
        %v3695 = vpop.permute.xlu0 %3694
        %3696 = vrot.lane.b32.xlu0 %v3691, 126
        %v3697 = vpop.permute.xlu0 %3696
        %v3700 = vadd.f32 %v3686, %v3695
        %v3701 = vadd.f32 %v3687, %v3697
        %s3702 = sld [smem:[#allocation11 + $0x8a]]
        %v3703 = vstv %s3702
        %v3704 = vmul.f32 %v3703, %v2122
        %v3705 = vmul.f32 %v3703, %v2123
        %v3706 = vadd.f32 %v3700, %v3704
        %v3707 = vadd.f32 %v3701, %v3705
        %s3708 = sld [smem:[#allocation11 + $0x8b]]
        %v3709 = vstv %s3708
        %v3710 = vmul.f32 %v3709, %v2122
        %v3711 = vmul.f32 %v3709, %v2123
        %3714 = vrot.lane.b32.xlu0 %v3710, 127
        %v3715 = vpop.permute.xlu0 %3714
        %3716 = vrot.lane.b32.xlu0 %v3711, 127
        %v3717 = vpop.permute.xlu0 %3716
        %v3720 = vadd.f32 %v3706, %v3715
        %v3721 = vadd.f32 %v3707, %v3717
        %s3722 = sld [smem:[#allocation11 + $0x8c]]
        %v3723 = vstv %s3722
        %v3724 = vmul.f32 %v3723, %v2122
        %v3725 = vmul.f32 %v3723, %v2123
        %3728 = vrot.lane.b32.xlu0 %v3724, 126
        %v3729 = vpop.permute.xlu0 %3728
        %3730 = vrot.lane.b32.xlu0 %v3725, 126
        %v3731 = vpop.permute.xlu0 %3730
        %v3734 = vadd.f32 %v3720, %v3729
        %v3735 = vadd.f32 %v3721, %v3731
        %s3736 = sld [smem:[#allocation11 + $0x8d]]
        %v3737 = vstv %s3736
        %v3738 = vmul.f32 %v3737, %v2124
        %v3739 = vmul.f32 %v3737, %v2125
        %v3740 = vadd.f32 %v3734, %v3738
        %v3741 = vadd.f32 %v3735, %v3739
        %s3742 = sld [smem:[#allocation11 + $0x8e]]
        %v3743 = vstv %s3742
        %v3744 = vmul.f32 %v3743, %v2124
        %v3745 = vmul.f32 %v3743, %v2125
        %3748 = vrot.lane.b32.xlu0 %v3744, 127
        %v3749 = vpop.permute.xlu0 %3748
        %3750 = vrot.lane.b32.xlu0 %v3745, 127
        %v3751 = vpop.permute.xlu0 %3750
        %v3754 = vadd.f32 %v3740, %v3749
        %v3755 = vadd.f32 %v3741, %v3751
        %s3756 = sld [smem:[#allocation11 + $0x8f]]
        %v3757 = vstv %s3756
        %v3758 = vmul.f32 %v3757, %v2124
        %v3759 = vmul.f32 %v3757, %v2125
        %3762 = vrot.lane.b32.xlu0 %v3758, 126
        %v3763 = vpop.permute.xlu0 %3762
        %3764 = vrot.lane.b32.xlu0 %v3759, 126
        %v3765 = vpop.permute.xlu0 %3764
        %v3768 = vadd.f32 %v3754, %v3763
        %v3769 = vadd.f32 %v3755, %v3765
        %s3770 = sld [smem:[#allocation13 + $0x3]]
        %v3771 = vstv %s3770
        %v3772 = vadd.f32 %v3768, %v3771
        %v3773 = vadd.f32 %v3769, %v3771
        %vm3774 = vcmask 130048
        %3775 = vst.msk [vmem:[%s292] sm:$0xff] %vm3774, %v2536
        %3776 = vst.msk [vmem:[%s292 + $0x8] sm:$0xff] %vm3774, %v2537
        %s3777 = scalar_lea.vmem %s292, 16 [#allocation14]
        %3778 = vst.msk [vmem:[%s3777] sm:$0xff] %vm3774, %v2948
        %3779 = vst.msk [vmem:[%s3777 + $0x8] sm:$0xff] %vm3774, %v2949
        %s3780 = scalar_lea.vmem %s292, 32 [#allocation14]
        %3781 = vst.msk [vmem:[%s3780] sm:$0xff] %vm3774, %v3360
        %3782 = vst.msk [vmem:[%s3780 + $0x8] sm:$0xff] %vm3774, %v3361
        %s3783 = scalar_lea.vmem %s292, 48 [#allocation14]
        %3784 = vst.msk [vmem:[%s3783] sm:$0xff] %vm3774, %v3772
        %3785 = vst.msk [vmem:[%s3783 + $0x8] sm:$0xff] %vm3774, %v3773
        %s3786 = sand.u32 %s143, 1
        %s3787 = scalar_lea.sflag [#allocation6], %s3786
        %s3788 = sand.u32 %s143, 1
        %s3789 = smul.addr %s3788, 64
        %s3790 = scalar_lea.vmem [#allocation14], %s3789
        // Predicated region
        $region61: #{tpu_custom_call.1} parent=39 // pred_check
          %p3791 = pneg %p153
        $region62: #{tpu_custom_call.1} parent=39 // pred_check_branch
          %3793 = sbr.rel (%p3791) target = $region64
        $region63: #{tpu_custom_call.1} parent=39 // pred_region
          %s3795 = ssub.s32 1024, 1024
          %3796 = vsyncadd %s3787, %s3795
          %s3797 = smul.addr %s25, 8
          %s3798 = smul.addr %s3797, 128
          %s3799 = scalar_lea.hbm %s5, %s3798
          %s3800 = sshll.u32 %s3790, 4
          %s3801 = int_to_ptr.vmem [resolvable:$true] %s3800
          %3806 = dma.vmem_to_hbm [thread:$0]  %s3801, 1024, %s3799, %s3787, 128, 128, 8
        $region64: #{tpu_custom_call.1} parent=39 // pred_fallthru
          _
      $region40: #{tpu_custom_call.1} parent=5 // pred_fallthru
        _
      %p3807 = scmp.le.s32.totalorder 2, %s20
      // Predicated region
      $region65: #{tpu_custom_call.1} parent=5 // pred_check
        %p3808 = pneg %p3807
      $region66: #{tpu_custom_call.1} parent=5 // pred_check_branch
        %3810 = sbr.rel (%p3808) target = $region68
      $region67: #{tpu_custom_call.1} parent=5 // pred_region
        %s3811 = ssub.s32 %s20, 2
        // Predicated region
        $region69: #{tpu_custom_call.1} parent=67 // pred_check
          %p3812 = pneg %p159
        $region70: #{tpu_custom_call.1} parent=67 // pred_check_branch
          %3814 = sbr.rel (%p3812) target = $region72
        $region71: #{tpu_custom_call.1} parent=67 // pred_region
          %s3815 = sand.u32 %s144, 1
          %s3816 = scalar_lea.sflag [#allocation6], %s3815
          %s3817 = sand.u32 %s144, 1
          %s3818 = smul.addr %s3817, 64
          %s3819 = scalar_lea.vmem [#allocation14], %s3818
          %3820 = dma.done %s3816, 1024
        $region72: #{tpu_custom_call.1} parent=67 // pred_fallthru
          _
      $region68: #{tpu_custom_call.1} parent=5 // pred_fallthru
        _
    $region6: #{tpu_custom_call.1} parent=1 // loop_footer
      %s24 = sadd.s32 1, %s20
    $region7: #{tpu_custom_call.1} parent=1 // loop_footer_branch
      %19 = sbr.rel target = $region3
    $region8: #{tpu_custom_call.1} parent=1 // loop_exit
      _
    %3821 = vsyncpa [#allocation5], 1
    %s3822 = scalar_lea.sflag [#allocation5], 1
    %3823 = vsyncpa %s3822, 1
    %3824 = vsyncpa [#allocation6], 1
    %s3825 = scalar_lea.sflag [#allocation6], 1
    %3826 = vsyncpa %s3825, 1
    %3827 = vsyncpa [#allocation7], 1
    %s3828 = scalar_lea.sflag [#allocation7], 1
    %3829 = vsyncpa %s3828, 1
    %3830 = vsyncpa [#allocation8], 1
    %s3831 = scalar_lea.sflag [#allocation8], 1
    %3832 = vsyncpa %s3831, 1
    %3833 = vsyncpa [#allocation12], 1

</llo_original>
